<compile_context>
chip_gen: v7x
topology: tpu7x:2x2x1
jax: 0.10.0
libtpu: 0.0.40
codegen_flags: <defaults>
</compile_context>

<pallas_src>
import math

import jax
import jax.numpy as jnp
from jax.experimental import pallas as pl
from jax.experimental.pallas import tpu as pltpu


# ---------------------------------------------------------------------------
# Kernel
# ---------------------------------------------------------------------------
def _upsample_conv_kernel(x_ref, w_ref, b_ref, o_ref, xpad_ref):
    """Fused nearest-2x-upsample + 3x3 conv (padding=1) for one (image, Co tile).

    x_ref   : (1, H, W, C)       low-res NHWC input (compute dtype)
    w_ref   : (16, C, TCo)       per-phase combined taps, index = (a*2+b)*4 + tr*2 + tc
    b_ref   : (1, TCo)           bias (f32)
    o_ref   : (1, 4, H, W, TCo)  phase-major output: o[0, a*2+b, i, j] = out[2i+a, 2j+b]
    xpad_ref: (H+2, W+2, C)      VMEM scratch: zero-padded copy of the current image
    """
    _, H, W, C = x_ref.shape
    TCo = o_ref.shape[-1]

    # Refresh the padded image only when a new image arrives.  The Co axis is
    # the innermost grid axis and marked "arbitrary" (never split across
    # TensorCores), so co==0 is always the first Co step for every image on
    # every core; the scratch then persists across the remaining Co tiles.
    @pl.when(pl.program_id(1) == 0)
    def _():
        xpad_ref[...] = jnp.zeros_like(xpad_ref)          # zero border
        xpad_ref[1:H + 1, 1:W + 1, :] = x_ref[0]          # interior

    xp = xpad_ref[...]                                    # (H+2, W+2, C)

    # The 9 distinct shifted patches (row/col offsets in {0,1,2}) are
    # extracted & reshaped once and reused by all 4 phases (9 relayouts
    # instead of 16).
    patches = [
        [xp[dy:dy + H, dx:dx + W, :].reshape(H * W, C) for dx in range(3)]
        for dy in range(3)
    ]

    bias_row = b_ref[...]                                 # (1, TCo) f32, read once

    for a in range(2):
        for b in range(2):
            phase = a * 2 + b
            base = phase * 4
            # 4 MXU dots + bias chained into one f32 accumulator expression.
            acc = jnp.dot(patches[a][b], w_ref[base + 0],
                          preferred_element_type=jnp.float32)
            acc = acc + jnp.dot(patches[a][b + 1], w_ref[base + 1],
                                preferred_element_type=jnp.float32)
            acc = acc + jnp.dot(patches[a + 1][b], w_ref[base + 2],
                                preferred_element_type=jnp.float32)
            acc = acc + jnp.dot(patches[a + 1][b + 1], w_ref[base + 3],
                                preferred_element_type=jnp.float32)
            acc = acc + bias_row
            o_ref[0, phase] = acc.reshape(H, W, TCo).astype(o_ref.dtype)


# ---------------------------------------------------------------------------
# Parameter / glue helpers (plain JAX)
# ---------------------------------------------------------------------------
def _build_phase_weights(w_hwio):
    """Combine 3x3 HWIO weights into the 16 per-phase 2x2 taps -> (16, C, Co)."""
    groups = {0: ([0], [1, 2]), 1: ([0, 1], [2])}   # phase -> (dy's for tap 0, tap 1)
    taps = []
    for a in range(2):
        for b in range(2):
            for tr in range(2):
                for tc in range(2):
                    acc = jnp.zeros_like(w_hwio[0, 0])
                    for dy in groups[a][tr]:
                        for dx in groups[b][tc]:
                            acc = acc + w_hwio[dy, dx]
                    taps.append(acc)
    return jnp.stack(taps, axis=0)                   # (16, C, Co)


def _co_tile(Co):
    """Co tile size: bound the weight / output / accumulator VMEM blocks."""
    if Co > 128 and Co % 128 == 0:
        return 128
    return Co   # small or non-128-multiple Co: use the full dim (always legal)


def upsample_forward(x_nchw, weight_oihw=None, bias=None, *, use_conv=True,
                     compute_dtype=jnp.bfloat16):
    """Forward pass of Upsample(channels, use_conv, dims=2). Input/output NCHW."""
    N, C, H, W = x_nchw.shape

    if not use_conv:
        # Pure nearest 2x: one read + one write via broadcast.  A Pallas kernel
        # here would only add HBM passes (perf-review item), so it is plain JAX.
        return jnp.broadcast_to(
            x_nchw[:, :, :, None, :, None], (N, C, H, 2, W, 2)
        ).reshape(N, C, 2 * H, 2 * W)

    Co = weight_oihw.shape[0]
    assert weight_oihw.shape[1] == C, "weight in_channels must match input"

    # Build the 16 per-phase combined taps and cast params / activations to the
    # compute dtype (the cast fuses into the transpose, no extra HBM pass).
    w_hwio = jnp.transpose(weight_oihw, (2, 3, 1, 0))            # (3, 3, C, Co)
    w_phase = _build_phase_weights(w_hwio).astype(compute_dtype)  # (16, C, Co)
    b2 = bias.reshape(1, Co).astype(jnp.float32)
    x = jnp.transpose(x_nchw, (0, 2, 3, 1)).astype(compute_dtype)  # NHWC

    TCo = _co_tile(Co)
    grid = (N, Co // TCo)

    # Rough VMEM estimate; raise the scoped limit only if we actually need it.
    isz_c = jnp.dtype(compute_dtype).itemsize
    isz_o = jnp.dtype(x_nchw.dtype).itemsize
    vmem_est = (
        2 * H * W * C * isz_c                 # input block (double-buffered)
        + 2 * 16 * C * TCo * isz_c            # weight block
        + 2 * 4 * H * W * TCo * isz_o         # output block
        + (H + 2) * (W + 2) * C * isz_c       # padded-image scratch
        + 9 * H * W * C * isz_c               # resident shifted patches
        + 2 * H * W * TCo * 4                 # f32 accumulators in flight
    )
    cp_kwargs = dict(dimension_semantics=("parallel", "arbitrary"))
    if vmem_est > 32 * 1024 * 1024:
        cp_kwargs["vmem_limit_bytes"] = min(int(vmem_est * 5 // 4),
                                            100 * 1024 * 1024)

    out = pl.pallas_call(
        _upsample_conv_kernel,
        out_shape=jax.ShapeDtypeStruct((N, 4, H, W, Co), x_nchw.dtype),
        grid=grid,
        in_specs=[
            pl.BlockSpec((1, H, W, C), lambda n, c: (n, 0, 0, 0)),
            pl.BlockSpec((16, C, TCo), lambda n, c: (0, 0, c)),
            pl.BlockSpec((1, TCo), lambda n, c: (0, c)),
        ],
        out_specs=pl.BlockSpec((1, 4, H, W, TCo), lambda n, c: (n, 0, 0, 0, c)),
        scratch_shapes=[pltpu.VMEM((H + 2, W + 2, C), compute_dtype)],
        compiler_params=pltpu.CompilerParams(**cp_kwargs),
    )(x, w_phase, b2)

    # (N, 4, H, W, Co) -> (N, 2, 2, H, W, Co) -> (N, Co, H, 2, W, 2) -> NCHW.
    # Exactly ONE transpose pass: the phase interleave rides along for free
    # inside the unavoidable NHWC->NCHW conversion.
    out = out.reshape(N, 2, 2, H, W, Co)
    out = jnp.transpose(out, (0, 5, 3, 1, 4, 2)).reshape(N, Co, 2 * H, 2 * W)
    return out


# ---------------------------------------------------------------------------
# Demo / correctness check
# ---------------------------------------------------------------------------
if __name__ == "__main__":
    N, C, H, W = 2, 4, 16, 16
    Co = C                                            # out_channels = channels

    key = jax.random.PRNGKey(0)
    kx, kw, kb = jax.random.split(key, 3)
    x = jax.random.normal(kx, (N, C, H, W), jnp.float32)

    # Deterministic conv params (shapes match nn.Conv2d(C, Co, 3, padding=1)).
    fan_in = C * 3 * 3
    bound = 1.0 / math.sqrt(fan_in)
    weight = jax.random.uniform(kw, (Co, C, 3, 3), jnp.float32, -bound, bound)
    bias = jax.random.uniform(kb, (Co,), jnp.float32, -bound, bound)

    # Pure-JAX reference: nearest upsample + conv2d(padding=1), f32.
    xu = jnp.repeat(jnp.repeat(x, 2, axis=2), 2, axis=3)
    ref = jax.lax.conv_general_dilated(
        xu, weight, window_strides=(1, 1), padding=((1, 1), (1, 1)),
        dimension_numbers=("NCHW", "OIHW", "NCHW"),
        precision=jax.lax.Precision.HIGHEST,
    ) + bias[None, :, None, None]

    # use_conv=True, f32 compute path (bit-faithful to the PyTorch conv).
    out_f32 = jax.block_until_ready(
        upsample_forward(x, weight, bias, use_conv=True,
                         compute_dtype=jnp.float32))
    assert out_f32.shape == (N, Co, 2 * H, 2 * W)
    assert jnp.allclose(out_f32, ref, atol=1e-4, rtol=1e-4), "f32 conv path mismatch"

    # use_conv=True, default bf16 compute path (MXU-native).
    out_bf16 = jax.block_until_ready(
        upsample_forward(x, weight, bias, use_conv=True))
    assert out_bf16.shape == (N, Co, 2 * H, 2 * W)
    assert jnp.allclose(out_bf16, ref, atol=5e-2, rtol=5e-2), "bf16 conv path mismatch"

    # use_conv=False path (pure broadcast).
    out_up = jax.block_until_ready(upsample_forward(x, use_conv=False))
    assert out_up.shape == (N, C, 2 * H, 2 * W)
    assert jnp.allclose(out_up, xu), "upsample-only path mismatch"

    print("KERNEL_OK")
</pallas_src>

<mosaic_0001>
module attributes {stable_mosaic.version = 11 : i64} {
  func.func @_upsample_conv_kernel(%arg0: i32, %arg1: i32, %arg2: memref<1x16x16x4xf32, #tpu.memory_space<vmem>>, %arg3: memref<16x4x4xf32, #tpu.memory_space<vmem>>, %arg4: memref<1x4xf32, #tpu.memory_space<vmem>>, %arg5: memref<1x4x16x16x4xf32, #tpu.memory_space<vmem>>, %arg6: memref<18x18x4xf32, #tpu.memory_space<vmem>>) attributes {dimension_semantics = [#tpu.dimension_semantics<parallel>, #tpu.dimension_semantics<arbitrary>], iteration_bounds = array<i64: 2, 1>, scalar_prefetch = 0 : i64, scratch_operands = 1 : i64, tpu.core_type = #tpu.core_type<tc>, window_params = [{transform_indices = @transform_0, window_bounds = array<i64: 1, 16, 16, 4>}, {transform_indices = @transform_1, window_bounds = array<i64: 16, 4, 4>}, {transform_indices = @transform_2, window_bounds = array<i64: 1, 4>}, {transform_indices = @transform_3, window_bounds = array<i64: 1, 4, 16, 16, 4>}]} {
    %c0_i32 = arith.constant 0 : i32
    %0 = arith.cmpi eq, %arg1, %c0_i32 : i32
    %1 = arith.extui %0 : i1 to i32
    %c0_i32_0 = arith.constant 0 : i32
    %2 = arith.cmpi ne, %1, %c0_i32_0 : i32
    scf.if %2 {
      %cst_73 = arith.constant 0.000000e+00 : f32
      %107 = vector.broadcast %cst_73 : f32 to vector<18x18x4xf32>
      %c0_74 = arith.constant 0 : index
      %c0_75 = arith.constant 0 : index
      %c0_76 = arith.constant 0 : index
      %108 = vector.load %arg6[%c0_74, %c0_75, %c0_76] : memref<18x18x4xf32, #tpu.memory_space<vmem>>, vector<18x18x4xf32>
      tpu.vector_store %arg6[%c0_74, %c0_75, %c0_76], %107 {strides = array<i32>} : memref<18x18x4xf32, #tpu.memory_space<vmem>>, vector<18x18x4xf32>,
      %c0_77 = arith.constant 0 : index
      %c0_78 = arith.constant 0 : index
      %c0_79 = arith.constant 0 : index
      %c0_80 = arith.constant 0 : index
      %109 = vector.load %arg2[%c0_77, %c0_78, %c0_79, %c0_80] : memref<1x16x16x4xf32, #tpu.memory_space<vmem>>, vector<1x16x16x4xf32>
      %110 = vector.shape_cast %109 : vector<1x16x16x4xf32> to vector<16x16x4xf32>
      %c1_81 = arith.constant 1 : index
      %c1_82 = arith.constant 1 : index
      %c0_83 = arith.constant 0 : index
      %111 = vector.load %arg6[%c1_81, %c1_82, %c0_83] : memref<18x18x4xf32, #tpu.memory_space<vmem>>, vector<16x16x4xf32>
      tpu.vector_store %arg6[%c1_81, %c1_82, %c0_83], %110 {strides = array<i32>} : memref<18x18x4xf32, #tpu.memory_space<vmem>>, vector<16x16x4xf32>,
    } else {
    }
    %c0 = arith.constant 0 : index
    %c0_1 = arith.constant 0 : index
    %c0_2 = arith.constant 0 : index
    %3 = vector.load %arg6[%c0, %c0_1, %c0_2] : memref<18x18x4xf32, #tpu.memory_space<vmem>>, vector<18x18x4xf32>
    %4 = vector.extract_strided_slice %3 {offsets = [0, 0, 0], sizes = [16, 16, 4], strides = [1, 1, 1]} : vector<18x18x4xf32> to vector<16x16x4xf32>
    %5 = vector.shape_cast %4 : vector<16x16x4xf32> to vector<256x4xf32>
    %6 = vector.extract_strided_slice %3 {offsets = [0, 1, 0], sizes = [16, 16, 4], strides = [1, 1, 1]} : vector<18x18x4xf32> to vector<16x16x4xf32>
    %7 = vector.shape_cast %6 : vector<16x16x4xf32> to vector<256x4xf32>
    %8 = vector.extract_strided_slice %3 {offsets = [0, 2, 0], sizes = [16, 16, 4], strides = [1, 1, 1]} : vector<18x18x4xf32> to vector<16x16x4xf32>
    %9 = vector.shape_cast %8 : vector<16x16x4xf32> to vector<256x4xf32>
    %10 = vector.extract_strided_slice %3 {offsets = [1, 0, 0], sizes = [16, 16, 4], strides = [1, 1, 1]} : vector<18x18x4xf32> to vector<16x16x4xf32>
    %11 = vector.shape_cast %10 : vector<16x16x4xf32> to vector<256x4xf32>
    %12 = vector.extract_strided_slice %3 {offsets = [1, 1, 0], sizes = [16, 16, 4], strides = [1, 1, 1]} : vector<18x18x4xf32> to vector<16x16x4xf32>
    %13 = vector.shape_cast %12 : vector<16x16x4xf32> to vector<256x4xf32>
    %14 = vector.extract_strided_slice %3 {offsets = [1, 2, 0], sizes = [16, 16, 4], strides = [1, 1, 1]} : vector<18x18x4xf32> to vector<16x16x4xf32>
    %15 = vector.shape_cast %14 : vector<16x16x4xf32> to vector<256x4xf32>
    %16 = vector.extract_strided_slice %3 {offsets = [2, 0, 0], sizes = [16, 16, 4], strides = [1, 1, 1]} : vector<18x18x4xf32> to vector<16x16x4xf32>
    %17 = vector.shape_cast %16 : vector<16x16x4xf32> to vector<256x4xf32>
    %18 = vector.extract_strided_slice %3 {offsets = [2, 1, 0], sizes = [16, 16, 4], strides = [1, 1, 1]} : vector<18x18x4xf32> to vector<16x16x4xf32>
    %19 = vector.shape_cast %18 : vector<16x16x4xf32> to vector<256x4xf32>
    %20 = vector.extract_strided_slice %3 {offsets = [2, 2, 0], sizes = [16, 16, 4], strides = [1, 1, 1]} : vector<18x18x4xf32> to vector<16x16x4xf32>
    %21 = vector.shape_cast %20 : vector<16x16x4xf32> to vector<256x4xf32>
    %c0_3 = arith.constant 0 : index
    %c0_4 = arith.constant 0 : index
    %22 = vector.load %arg4[%c0_3, %c0_4] : memref<1x4xf32, #tpu.memory_space<vmem>>, vector<1x4xf32>
    %c0_5 = arith.constant 0 : index
    %c0_6 = arith.constant 0 : index
    %c0_7 = arith.constant 0 : index
    %23 = vector.load %arg3[%c0_5, %c0_6, %c0_7] : memref<16x4x4xf32, #tpu.memory_space<vmem>>, vector<1x4x4xf32>
    %24 = vector.shape_cast %23 : vector<1x4x4xf32> to vector<4x4xf32>
    %cst = arith.constant dense<0.000000e+00> : vector<256x4xf32>
    %25 = tpu.matmul %5, %24, %cst {dimension_numbers = #tpu.dot_dimension_numbers<[1], [0], [0], [1], [0, 0, 1, 1], [], []>} : vector<256x4xf32>, vector<4x4xf32>, vector<256x4xf32> -> vector<256x4xf32>
    %c1 = arith.constant 1 : index
    %c0_8 = arith.constant 0 : index
    %c0_9 = arith.constant 0 : index
    %26 = vector.load %arg3[%c1, %c0_8, %c0_9] : memref<16x4x4xf32, #tpu.memory_space<vmem>>, vector<1x4x4xf32>
    %27 = vector.shape_cast %26 : vector<1x4x4xf32> to vector<4x4xf32>
    %cst_10 = arith.constant dense<0.000000e+00> : vector<256x4xf32>
    %28 = tpu.matmul %7, %27, %cst_10 {dimension_numbers = #tpu.dot_dimension_numbers<[1], [0], [0], [1], [0, 0, 1, 1], [], []>} : vector<256x4xf32>, vector<4x4xf32>, vector<256x4xf32> -> vector<256x4xf32>
    %29 = arith.addf %25, %28 : vector<256x4xf32>
    %c2 = arith.constant 2 : index
    %c0_11 = arith.constant 0 : index
    %c0_12 = arith.constant 0 : index
    %30 = vector.load %arg3[%c2, %c0_11, %c0_12] : memref<16x4x4xf32, #tpu.memory_space<vmem>>, vector<1x4x4xf32>
    %31 = vector.shape_cast %30 : vector<1x4x4xf32> to vector<4x4xf32>
    %cst_13 = arith.constant dense<0.000000e+00> : vector<256x4xf32>
    %32 = tpu.matmul %11, %31, %cst_13 {dimension_numbers = #tpu.dot_dimension_numbers<[1], [0], [0], [1], [0, 0, 1, 1], [], []>} : vector<256x4xf32>, vector<4x4xf32>, vector<256x4xf32> -> vector<256x4xf32>
    %33 = arith.addf %29, %32 : vector<256x4xf32>
    %c3 = arith.constant 3 : index
    %c0_14 = arith.constant 0 : index
    %c0_15 = arith.constant 0 : index
    %34 = vector.load %arg3[%c3, %c0_14, %c0_15] : memref<16x4x4xf32, #tpu.memory_space<vmem>>, vector<1x4x4xf32>
    %35 = vector.shape_cast %34 : vector<1x4x4xf32> to vector<4x4xf32>
    %cst_16 = arith.constant dense<0.000000e+00> : vector<256x4xf32>
    %36 = tpu.matmul %13, %35, %cst_16 {dimension_numbers = #tpu.dot_dimension_numbers<[1], [0], [0], [1], [0, 0, 1, 1], [], []>} : vector<256x4xf32>, vector<4x4xf32>, vector<256x4xf32> -> vector<256x4xf32>
    %37 = arith.addf %33, %36 : vector<256x4xf32>
    %38 = vector.broadcast %22 : vector<1x4xf32> to vector<256x4xf32>
    %39 = arith.addf %37, %38 : vector<256x4xf32>
    %40 = vector.shape_cast %39 : vector<256x4xf32> to vector<16x16x4xf32>
    %c0_17 = arith.constant 0 : index
    %c0_18 = arith.constant 0 : index
    %c0_19 = arith.constant 0 : index
    %c0_20 = arith.constant 0 : index
    %c0_21 = arith.constant 0 : index
    %41 = vector.load %arg5[%c0_17, %c0_18, %c0_19, %c0_20, %c0_21] : memref<1x4x16x16x4xf32, #tpu.memory_space<vmem>>, vector<1x1x16x16x4xf32>
    %42 = vector.shape_cast %41 : vector<1x1x16x16x4xf32> to vector<16x16x4xf32>
    %43 = vector.shape_cast %40 : vector<16x16x4xf32> to vector<1x1x16x16x4xf32>
    tpu.vector_store %arg5[%c0_17, %c0_18, %c0_19, %c0_20, %c0_21], %43 {strides = array<i32>} : memref<1x4x16x16x4xf32, #tpu.memory_space<vmem>>, vector<1x1x16x16x4xf32>,
    %c4 = arith.constant 4 : index
    %c0_22 = arith.constant 0 : index
    %c0_23 = arith.constant 0 : index
    %44 = vector.load %arg3[%c4, %c0_22, %c0_23] : memref<16x4x4xf32, #tpu.memory_space<vmem>>, vector<1x4x4xf32>
    %45 = vector.shape_cast %44 : vector<1x4x4xf32> to vector<4x4xf32>
    %cst_24 = arith.constant dense<0.000000e+00> : vector<256x4xf32>
    %46 = tpu.matmul %7, %45, %cst_24 {dimension_numbers = #tpu.dot_dimension_numbers<[1], [0], [0], [1], [0, 0, 1, 1], [], []>} : vector<256x4xf32>, vector<4x4xf32>, vector<256x4xf32> -> vector<256x4xf32>
    %c5 = arith.constant 5 : index
    %c0_25 = arith.constant 0 : index
    %c0_26 = arith.constant 0 : index
    %47 = vector.load %arg3[%c5, %c0_25, %c0_26] : memref<16x4x4xf32, #tpu.memory_space<vmem>>, vector<1x4x4xf32>
    %48 = vector.shape_cast %47 : vector<1x4x4xf32> to vector<4x4xf32>
    %cst_27 = arith.constant dense<0.000000e+00> : vector<256x4xf32>
    %49 = tpu.matmul %9, %48, %cst_27 {dimension_numbers = #tpu.dot_dimension_numbers<[1], [0], [0], [1], [0, 0, 1, 1], [], []>} : vector<256x4xf32>, vector<4x4xf32>, vector<256x4xf32> -> vector<256x4xf32>
    %50 = arith.addf %46, %49 : vector<256x4xf32>
    %c6 = arith.constant 6 : index
    %c0_28 = arith.constant 0 : index
    %c0_29 = arith.constant 0 : index
    %51 = vector.load %arg3[%c6, %c0_28, %c0_29] : memref<16x4x4xf32, #tpu.memory_space<vmem>>, vector<1x4x4xf32>
    %52 = vector.shape_cast %51 : vector<1x4x4xf32> to vector<4x4xf32>
    %cst_30 = arith.constant dense<0.000000e+00> : vector<256x4xf32>
    %53 = tpu.matmul %13, %52, %cst_30 {dimension_numbers = #tpu.dot_dimension_numbers<[1], [0], [0], [1], [0, 0, 1, 1], [], []>} : vector<256x4xf32>, vector<4x4xf32>, vector<256x4xf32> -> vector<256x4xf32>
    %54 = arith.addf %50, %53 : vector<256x4xf32>
    %c7 = arith.constant 7 : index
    %c0_31 = arith.constant 0 : index
    %c0_32 = arith.constant 0 : index
    %55 = vector.load %arg3[%c7, %c0_31, %c0_32] : memref<16x4x4xf32, #tpu.memory_space<vmem>>, vector<1x4x4xf32>
    %56 = vector.shape_cast %55 : vector<1x4x4xf32> to vector<4x4xf32>
    %cst_33 = arith.constant dense<0.000000e+00> : vector<256x4xf32>
    %57 = tpu.matmul %15, %56, %cst_33 {dimension_numbers = #tpu.dot_dimension_numbers<[1], [0], [0], [1], [0, 0, 1, 1], [], []>} : vector<256x4xf32>, vector<4x4xf32>, vector<256x4xf32> -> vector<256x4xf32>
    %58 = arith.addf %54, %57 : vector<256x4xf32>
    %59 = vector.broadcast %22 : vector<1x4xf32> to vector<256x4xf32>
    %60 = arith.addf %58, %59 : vector<256x4xf32>
    %61 = vector.shape_cast %60 : vector<256x4xf32> to vector<16x16x4xf32>
    %c0_34 = arith.constant 0 : index
    %c1_35 = arith.constant 1 : index
    %c0_36 = arith.constant 0 : index
    %c0_37 = arith.constant 0 : index
    %c0_38 = arith.constant 0 : index
    %62 = vector.load %arg5[%c0_34, %c1_35, %c0_36, %c0_37, %c0_38] : memref<1x4x16x16x4xf32, #tpu.memory_space<vmem>>, vector<1x1x16x16x4xf32>
    %63 = vector.shape_cast %62 : vector<1x1x16x16x4xf32> to vector<16x16x4xf32>
    %64 = vector.shape_cast %61 : vector<16x16x4xf32> to vector<1x1x16x16x4xf32>
    tpu.vector_store %arg5[%c0_34, %c1_35, %c0_36, %c0_37, %c0_38], %64 {strides = array<i32>} : memref<1x4x16x16x4xf32, #tpu.memory_space<vmem>>, vector<1x1x16x16x4xf32>,
    %c8 = arith.constant 8 : index
    %c0_39 = arith.constant 0 : index
    %c0_40 = arith.constant 0 : index
    %65 = vector.load %arg3[%c8, %c0_39, %c0_40] : memref<16x4x4xf32, #tpu.memory_space<vmem>>, vector<1x4x4xf32>
    %66 = vector.shape_cast %65 : vector<1x4x4xf32> to vector<4x4xf32>
    %cst_41 = arith.constant dense<0.000000e+00> : vector<256x4xf32>
    %67 = tpu.matmul %11, %66, %cst_41 {dimension_numbers = #tpu.dot_dimension_numbers<[1], [0], [0], [1], [0, 0, 1, 1], [], []>} : vector<256x4xf32>, vector<4x4xf32>, vector<256x4xf32> -> vector<256x4xf32>
    %c9 = arith.constant 9 : index
    %c0_42 = arith.constant 0 : index
    %c0_43 = arith.constant 0 : index
    %68 = vector.load %arg3[%c9, %c0_42, %c0_43] : memref<16x4x4xf32, #tpu.memory_space<vmem>>, vector<1x4x4xf32>
    %69 = vector.shape_cast %68 : vector<1x4x4xf32> to vector<4x4xf32>
    %cst_44 = arith.constant dense<0.000000e+00> : vector<256x4xf32>
    %70 = tpu.matmul %13, %69, %cst_44 {dimension_numbers = #tpu.dot_dimension_numbers<[1], [0], [0], [1], [0, 0, 1, 1], [], []>} : vector<256x4xf32>, vector<4x4xf32>, vector<256x4xf32> -> vector<256x4xf32>
    %71 = arith.addf %67, %70 : vector<256x4xf32>
    %c10 = arith.constant 10 : index
    %c0_45 = arith.constant 0 : index
    %c0_46 = arith.constant 0 : index
    %72 = vector.load %arg3[%c10, %c0_45, %c0_46] : memref<16x4x4xf32, #tpu.memory_space<vmem>>, vector<1x4x4xf32>
    %73 = vector.shape_cast %72 : vector<1x4x4xf32> to vector<4x4xf32>
    %cst_47 = arith.constant dense<0.000000e+00> : vector<256x4xf32>
    %74 = tpu.matmul %17, %73, %cst_47 {dimension_numbers = #tpu.dot_dimension_numbers<[1], [0], [0], [1], [0, 0, 1, 1], [], []>} : vector<256x4xf32>, vector<4x4xf32>, vector<256x4xf32> -> vector<256x4xf32>
    %75 = arith.addf %71, %74 : vector<256x4xf32>
    %c11 = arith.constant 11 : index
    %c0_48 = arith.constant 0 : index
    %c0_49 = arith.constant 0 : index
    %76 = vector.load %arg3[%c11, %c0_48, %c0_49] : memref<16x4x4xf32, #tpu.memory_space<vmem>>, vector<1x4x4xf32>
    %77 = vector.shape_cast %76 : vector<1x4x4xf32> to vector<4x4xf32>
    %cst_50 = arith.constant dense<0.000000e+00> : vector<256x4xf32>
    %78 = tpu.matmul %19, %77, %cst_50 {dimension_numbers = #tpu.dot_dimension_numbers<[1], [0], [0], [1], [0, 0, 1, 1], [], []>} : vector<256x4xf32>, vector<4x4xf32>, vector<256x4xf32> -> vector<256x4xf32>
    %79 = arith.addf %75, %78 : vector<256x4xf32>
    %80 = vector.broadcast %22 : vector<1x4xf32> to vector<256x4xf32>
    %81 = arith.addf %79, %80 : vector<256x4xf32>
    %82 = vector.shape_cast %81 : vector<256x4xf32> to vector<16x16x4xf32>
    %c0_51 = arith.constant 0 : index
    %c2_52 = arith.constant 2 : index
    %c0_53 = arith.constant 0 : index
    %c0_54 = arith.constant 0 : index
    %c0_55 = arith.constant 0 : index
    %83 = vector.load %arg5[%c0_51, %c2_52, %c0_53, %c0_54, %c0_55] : memref<1x4x16x16x4xf32, #tpu.memory_space<vmem>>, vector<1x1x16x16x4xf32>
    %84 = vector.shape_cast %83 : vector<1x1x16x16x4xf32> to vector<16x16x4xf32>
    %85 = vector.shape_cast %82 : vector<16x16x4xf32> to vector<1x1x16x16x4xf32>
    tpu.vector_store %arg5[%c0_51, %c2_52, %c0_53, %c0_54, %c0_55], %85 {strides = array<i32>} : memref<1x4x16x16x4xf32, #tpu.memory_space<vmem>>, vector<1x1x16x16x4xf32>,
    %c12 = arith.constant 12 : index
    %c0_56 = arith.constant 0 : index
    %c0_57 = arith.constant 0 : index
    %86 = vector.load %arg3[%c12, %c0_56, %c0_57] : memref<16x4x4xf32, #tpu.memory_space<vmem>>, vector<1x4x4xf32>
    %87 = vector.shape_cast %86 : vector<1x4x4xf32> to vector<4x4xf32>
    %cst_58 = arith.constant dense<0.000000e+00> : vector<256x4xf32>
    %88 = tpu.matmul %13, %87, %cst_58 {dimension_numbers = #tpu.dot_dimension_numbers<[1], [0], [0], [1], [0, 0, 1, 1], [], []>} : vector<256x4xf32>, vector<4x4xf32>, vector<256x4xf32> -> vector<256x4xf32>
    %c13 = arith.constant 13 : index
    %c0_59 = arith.constant 0 : index
    %c0_60 = arith.constant 0 : index
    %89 = vector.load %arg3[%c13, %c0_59, %c0_60] : memref<16x4x4xf32, #tpu.memory_space<vmem>>, vector<1x4x4xf32>
    %90 = vector.shape_cast %89 : vector<1x4x4xf32> to vector<4x4xf32>
    %cst_61 = arith.constant dense<0.000000e+00> : vector<256x4xf32>
    %91 = tpu.matmul %15, %90, %cst_61 {dimension_numbers = #tpu.dot_dimension_numbers<[1], [0], [0], [1], [0, 0, 1, 1], [], []>} : vector<256x4xf32>, vector<4x4xf32>, vector<256x4xf32> -> vector<256x4xf32>
    %92 = arith.addf %88, %91 : vector<256x4xf32>
    %c14 = arith.constant 14 : index
    %c0_62 = arith.constant 0 : index
    %c0_63 = arith.constant 0 : index
    %93 = vector.load %arg3[%c14, %c0_62, %c0_63] : memref<16x4x4xf32, #tpu.memory_space<vmem>>, vector<1x4x4xf32>
    %94 = vector.shape_cast %93 : vector<1x4x4xf32> to vector<4x4xf32>
    %cst_64 = arith.constant dense<0.000000e+00> : vector<256x4xf32>
    %95 = tpu.matmul %19, %94, %cst_64 {dimension_numbers = #tpu.dot_dimension_numbers<[1], [0], [0], [1], [0, 0, 1, 1], [], []>} : vector<256x4xf32>, vector<4x4xf32>, vector<256x4xf32> -> vector<256x4xf32>
    %96 = arith.addf %92, %95 : vector<256x4xf32>
    %c15 = arith.constant 15 : index
    %c0_65 = arith.constant 0 : index
    %c0_66 = arith.constant 0 : index
    %97 = vector.load %arg3[%c15, %c0_65, %c0_66] : memref<16x4x4xf32, #tpu.memory_space<vmem>>, vector<1x4x4xf32>
    %98 = vector.shape_cast %97 : vector<1x4x4xf32> to vector<4x4xf32>
    %cst_67 = arith.constant dense<0.000000e+00> : vector<256x4xf32>
    %99 = tpu.matmul %21, %98, %cst_67 {dimension_numbers = #tpu.dot_dimension_numbers<[1], [0], [0], [1], [0, 0, 1, 1], [], []>} : vector<256x4xf32>, vector<4x4xf32>, vector<256x4xf32> -> vector<256x4xf32>
    %100 = arith.addf %96, %99 : vector<256x4xf32>
    %101 = vector.broadcast %22 : vector<1x4xf32> to vector<256x4xf32>
    %102 = arith.addf %100, %101 : vector<256x4xf32>
    %103 = vector.shape_cast %102 : vector<256x4xf32> to vector<16x16x4xf32>
    %c0_68 = arith.constant 0 : index
    %c3_69 = arith.constant 3 : index
    %c0_70 = arith.constant 0 : index
    %c0_71 = arith.constant 0 : index
    %c0_72 = arith.constant 0 : index
    %104 = vector.load %arg5[%c0_68, %c3_69, %c0_70, %c0_71, %c0_72] : memref<1x4x16x16x4xf32, #tpu.memory_space<vmem>>, vector<1x1x16x16x4xf32>
    %105 = vector.shape_cast %104 : vector<1x1x16x16x4xf32> to vector<16x16x4xf32>
    %106 = vector.shape_cast %103 : vector<16x16x4xf32> to vector<1x1x16x16x4xf32>
    tpu.vector_store %arg5[%c0_68, %c3_69, %c0_70, %c0_71, %c0_72], %106 {strides = array<i32>} : memref<1x4x16x16x4xf32, #tpu.memory_space<vmem>>, vector<1x1x16x16x4xf32>,
    return
  }
  func.func @transform_0(%arg0: i32, %arg1: i32) -> (i32, i32, i32, i32) {
    %c0_i32 = arith.constant 0 : i32
    %c0_i32_0 = arith.constant 0 : i32
    %c0_i32_1 = arith.constant 0 : i32
    %c0_i32_2 = arith.constant 0 : i32
    return %arg0, %c0_i32, %c0_i32_0, %c0_i32_1 : i32, i32, i32, i32
  }
  func.func @transform_1(%arg0: i32, %arg1: i32) -> (i32, i32, i32) {
    %c0_i32 = arith.constant 0 : i32
    %c0_i32_0 = arith.constant 0 : i32
    %c0_i32_1 = arith.constant 0 : i32
    return %c0_i32, %c0_i32_0, %arg1 : i32, i32, i32
  }
  func.func @transform_2(%arg0: i32, %arg1: i32) -> (i32, i32) {
    %c0_i32 = arith.constant 0 : i32
    %c0_i32_0 = arith.constant 0 : i32
    return %c0_i32, %arg1 : i32, i32
  }
  func.func @transform_3(%arg0: i32, %arg1: i32) -> (i32, i32, i32, i32, i32) {
    %c0_i32 = arith.constant 0 : i32
    %c0_i32_0 = arith.constant 0 : i32
    %c0_i32_1 = arith.constant 0 : i32
    %c0_i32_2 = arith.constant 0 : i32
    return %arg0, %c0_i32, %c0_i32_0, %c0_i32_1, %arg1 : i32, i32, i32, i32, i32
  }
}

</mosaic_0001>

<llo_original>
// kernel: tpu_custom_call.1
$region0: #{tpu_custom_call.1}
  #allocation0 [shape = 'u32[]', space=smem, size = 0x4, offset = 0x4, fixed_abs, tag = 'smem constant byte address 0x4 - core index']
  #allocation1 [shape = 'u32[144,128]{1,0:T(1,128)}', space=vmem, size = 0x12000, scoped, tag = 'internal scratch']
  #allocation2 [shape = 'f32[18,18,4]{2,1,0:T(8,128)}', space=vmem, size = 0x36000, scoped, tag = 'scratch operand']
  %s0 = inlined_call_operand.vmem [shape: f32[2,16,16,4], index: 0, kind: input, shape index: {}]
  %s1 = inlined_call_operand.vmem [shape: f32[16,4,4], index: 1, kind: input, shape index: {}]
  %s2 = inlined_call_operand.vmem [shape: f32[1,4], index: 2, kind: input, shape index: {}]
  %s3 = inlined_call_operand.vmem [shape: f32[2,4,16,16,4], index: 3, kind: output, shape index: {}]
  %s4 = sld [smem:[#allocation0]]
  $region49: #{tpu_custom_call.1} parent=0
    _
  %s6 = ssub.s32 1, %s4
  %s7 = scalar_select 0, %s6, %s4
  loop: start=0, step=1, limit=4
  $region2: #{tpu_custom_call.1} parent=0 // loop_pre_header
    _
  $region3: #{tpu_custom_call.1} parent=0 // loop_header
    %s9 = sphi 0, %s13
    %p10 = scmp.ge.s32.totalorder %s9, 4
    %s16 = sphi 0, %s28
    %s17 = sphi 0, %s24
    %s18 = sphi 0, %s16
    %s19 = sphi 0, %s17
    %s20 = sphi 0, %s18
    %s21 = sphi 0, %s19
    %s31 = sphi 0, %s33
    %s34 = sphi 0, %s31
    %s35 = sphi 0, %s34
    %s51 = sphi 0, %s35
    %s57 = sphi 0, %s59
    %s60 = sphi 0, %s57
    %s61 = sphi 0, %s60
    %s77 = sphi 0, %s61
    %s83 = sphi 0, %s85
    %s86 = sphi 0, %s83
    %s87 = sphi 0, %s86
    %s103 = sphi 0, %s87
    %s111 = sphi 0, %s113
    %s114 = sphi 0, %s111
    %s115 = sphi 0, %s114
    %s131 = sphi 0, %s115
  $region4: #{tpu_custom_call.1} parent=0 // loop_header_branch
    %12 = sbr.rel (%p10) target = $region8
  $region5: #{tpu_custom_call.1} parent=0 // loop_body
    %s14 = ssub.s32 %s9, 1
    %s15 = ssub.s32 %s9, 2
    %s22 = sadd.s32 1, %s17
    %p23 = scmp.ge.s32.totalorder %s22, 1
    %s24 = scalar_select %p23, 0, %s22
    %s25 = sadd.s32 1, %s16
    %s26 = scalar_select %p23, %s25, %s16
    %p27 = scmp.ge.s32.totalorder %s26, 2
    %s28 = scalar_select %p27, 0, %s26
    %s29 = ssub.s32 %s16, %s28
    %p30 = scmp.eq.s32.totalorder %s29, 0
    %s32 = sadd.s32 %s31, 1
    %s33 = scalar_select %p30, %s31, %s32
    %p36 = pneg %p30
    %p37 = scmp.eq.s32.totalorder %s9, 1
    %p38 = por %p36, %p37
    %p39 = scmp.ne.s32.totalorder %s31, %s34
    %p40 = scmp.eq.s32.totalorder %s9, 0
    %p41 = por %p39, %p40
    %p42 = scmp.ne.s32.totalorder %s31, %s34
    %p43 = scmp.eq.s32.totalorder %s14, 1
    %p44 = por %p42, %p43
    %p45 = scmp.ne.s32.totalorder %s34, %s35
    %p46 = scmp.eq.s32.totalorder %s14, 0
    %p47 = por %p45, %p46
    %p48 = scmp.ne.s32.totalorder %s34, %s35
    %p49 = scmp.eq.s32.totalorder %s15, 1
    %p50 = por %p48, %p49
    %p52 = scmp.ne.s32.totalorder %s35, %s51
    %p53 = scmp.eq.s32.totalorder %s15, 0
    %p54 = por %p52, %p53
    %s55 = ssub.s32 %s17, %s24
    %p56 = scmp.eq.s32.totalorder %s55, 0
    %s58 = sadd.s32 %s57, 1
    %s59 = scalar_select %p56, %s57, %s58
    %p62 = pneg %p56
    %p63 = scmp.eq.s32.totalorder %s9, 1
    %p64 = por %p62, %p63
    %p65 = scmp.ne.s32.totalorder %s57, %s60
    %p66 = scmp.eq.s32.totalorder %s9, 0
    %p67 = por %p65, %p66
    %p68 = scmp.ne.s32.totalorder %s57, %s60
    %p69 = scmp.eq.s32.totalorder %s14, 1
    %p70 = por %p68, %p69
    %p71 = scmp.ne.s32.totalorder %s60, %s61
    %p72 = scmp.eq.s32.totalorder %s14, 0
    %p73 = por %p71, %p72
    %p74 = scmp.ne.s32.totalorder %s60, %s61
    %p75 = scmp.eq.s32.totalorder %s15, 1
    %p76 = por %p74, %p75
    %p78 = scmp.ne.s32.totalorder %s61, %s77
    %p79 = scmp.eq.s32.totalorder %s15, 0
    %p80 = por %p78, %p79
    %s81 = ssub.s32 %s17, %s24
    %p82 = scmp.eq.s32.totalorder %s81, 0
    %s84 = sadd.s32 %s83, 1
    %s85 = scalar_select %p82, %s83, %s84
    %p88 = pneg %p82
    %p89 = scmp.eq.s32.totalorder %s9, 1
    %p90 = por %p88, %p89
    %p91 = scmp.ne.s32.totalorder %s83, %s86
    %p92 = scmp.eq.s32.totalorder %s9, 0
    %p93 = por %p91, %p92
    %p94 = scmp.ne.s32.totalorder %s83, %s86
    %p95 = scmp.eq.s32.totalorder %s14, 1
    %p96 = por %p94, %p95
    %p97 = scmp.ne.s32.totalorder %s86, %s87
    %p98 = scmp.eq.s32.totalorder %s14, 0
    %p99 = por %p97, %p98
    %p100 = scmp.ne.s32.totalorder %s86, %s87
    %p101 = scmp.eq.s32.totalorder %s15, 1
    %p102 = por %p100, %p101
    %p104 = scmp.ne.s32.totalorder %s87, %s103
    %p105 = scmp.eq.s32.totalorder %s15, 0
    %p106 = por %p104, %p105
    %s107 = ssub.s32 %s16, %s28
    %s108 = ssub.s32 %s17, %s24
    %s109 = sor.u32 %s107, %s108
    %p110 = scmp.eq.s32.totalorder %s109, 0
    %s112 = sadd.s32 %s111, 1
    %s113 = scalar_select %p110, %s111, %s112
    %p116 = pneg %p110
    %p117 = scmp.eq.s32.totalorder %s9, 1
    %p118 = por %p116, %p117
    %p119 = scmp.ne.s32.totalorder %s111, %s114
    %p120 = scmp.eq.s32.totalorder %s9, 0
    %p121 = por %p119, %p120
    %p122 = scmp.ne.s32.totalorder %s111, %s114
    %p123 = scmp.eq.s32.totalorder %s14, 1
    %p124 = por %p122, %p123
    %p125 = scmp.ne.s32.totalorder %s114, %s115
    %p126 = scmp.eq.s32.totalorder %s14, 0
    %p127 = por %p125, %p126
    %p128 = scmp.ne.s32.totalorder %s114, %s115
    %p129 = scmp.eq.s32.totalorder %s15, 1
    %p130 = por %p128, %p129
    %p132 = scmp.ne.s32.totalorder %s115, %s131
    %p133 = scmp.eq.s32.totalorder %s15, 0
    %p134 = por %p132, %p133
    %p135 = scmp.le.s32.totalorder 1, %s9
    %p136 = scmp.lt.s32.totalorder %s9, 3
    %p137 = pnand %p135, %p136
    %p138 = pneg %p137
    // Predicated region
    $region9: #{tpu_custom_call.1} parent=5 // pred_check
      _
    $region10: #{tpu_custom_call.1} parent=5 // pred_check_branch
      %140 = sbr.rel (%p137) target = $region12
    $region11: #{tpu_custom_call.1} parent=5 // pred_region
      %s141 = ssub.s32 %s9, 1
      // Predicated region
      $region13: #{tpu_custom_call.1} parent=11 // pred_check
        %p142 = pneg %p73
      $region14: #{tpu_custom_call.1} parent=11 // pred_check_branch
        %144 = sbr.rel (%p142) target = $region16
      $region15: #{tpu_custom_call.1} parent=11 // pred_region
        %p145 = scmp.lt.s32.totalorder %s19, 0
        %s146 = scalar_select %p145, %s19, 0
        %s147 = smul.addr %s146, 4
        %s148 = scalar_lea.vmem %s1, %s147
      $region16: #{tpu_custom_call.1} parent=11 // pred_fallthru
        _
      // Predicated region
      $region17: #{tpu_custom_call.1} parent=11 // pred_check
        %p149 = pneg %p99
      $region18: #{tpu_custom_call.1} parent=11 // pred_check_branch
        %151 = sbr.rel (%p149) target = $region20
      $region19: #{tpu_custom_call.1} parent=11 // pred_region
        %p152 = scmp.lt.s32.totalorder %s19, 0
        %s153 = scalar_select %p152, %s19, 0
        %s154 = scalar_lea.vmem %s2, %s153
      $region20: #{tpu_custom_call.1} parent=11 // pred_fallthru
        _
    $region12: #{tpu_custom_call.1} parent=5 // pred_fallthru
      _
    %p155 = scmp.lt.s32.totalorder %s9, 2
    // Predicated region
    $region21: #{tpu_custom_call.1} parent=5 // pred_check
      %p156 = pneg %p155
    $region22: #{tpu_custom_call.1} parent=5 // pred_check_branch
      %158 = sbr.rel (%p156) target = $region24
    $region23: #{tpu_custom_call.1} parent=5 // pred_region
      // Predicated region
      $region25: #{tpu_custom_call.1} parent=23 // pred_check
        %p159 = pneg %p41
      $region26: #{tpu_custom_call.1} parent=23 // pred_check_branch
        %161 = sbr.rel (%p159) target = $region28
      $region27: #{tpu_custom_call.1} parent=23 // pred_region
        %p162 = scmp.lt.s32.totalorder %s16, 1
        %s163 = scalar_select %p162, %s16, 1
        %s164 = smul.addr %s163, 32
        %s165 = smul.addr %s164, 8
        %s166 = scalar_lea.vmem %s0, %s165
      $region28: #{tpu_custom_call.1} parent=23 // pred_fallthru
        _
    $region24: #{tpu_custom_call.1} parent=5 // pred_fallthru
      _
    %p167 = scmp.le.s32.totalorder 1, %s9
    %p168 = scmp.lt.s32.totalorder %s9, 3
    %p169 = pnand %p167, %p168
    %p170 = pneg %p169
    // Predicated region
    $region29: #{tpu_custom_call.1} parent=5 // pred_check
      _
    $region30: #{tpu_custom_call.1} parent=5 // pred_check_branch
      %172 = sbr.rel (%p169) target = $region32
    $region31: #{tpu_custom_call.1} parent=5 // pred_region
      %s173 = ssub.s32 %s9, 1
      %p174 = scmp.lt.s32.totalorder %s18, 1
      %s175 = scalar_select %p174, %s18, 1
      %s176 = smul.addr %s175, 32
      %s177 = smul.addr %s176, 8
      %s178 = scalar_lea.vmem %s0, %s177
      %p179 = pneg %p47
      %p180 = pneg %p44
      %p181 = scmp.lt.s32.totalorder %s19, 0
      %s182 = scalar_select %p181, %s19, 0
      %s183 = smul.addr %s182, 4
      %s184 = scalar_lea.vmem %s1, %s183
      %p185 = pneg %p73
      %p186 = pneg %p70
      %p187 = scmp.lt.s32.totalorder %s19, 0
      %s188 = scalar_select %p187, %s19, 0
      %s189 = scalar_lea.vmem %s2, %s188
      %p190 = pneg %p99
      %p191 = pneg %p96
      %p192 = pneg %p127
      %p193 = pneg %p124
      %p194 = scmp.lt.s32.totalorder %s18, 1
      %s195 = scalar_select %p194, %s18, 1
      %p196 = scmp.lt.s32.totalorder %s19, 0
      %s197 = scalar_select %p196, %s19, 0
      %s198 = smul.addr %s195, 128
      %s199 = sadd.s32 %s197, %s198
      %s200 = smul.addr %s199, 8
      %s201 = scalar_lea.vmem %s3, %s200
      %p202 = scmp.lt.s32.totalorder %s18, 1
      %s203 = scalar_select %p202, %s18, 1
      %s204 = smul.addr %s203, 32
      %s205 = smul.addr %s204, 8
      %s206 = scalar_lea.vmem %s0, %s205
      %p207 = scmp.lt.s32.totalorder %s19, 0
      %s208 = scalar_select %p207, %s19, 0
      %s209 = smul.addr %s208, 4
      %s210 = scalar_lea.vmem %s1, %s209
      %p211 = scmp.lt.s32.totalorder %s19, 0
      %s212 = scalar_select %p211, %s19, 0
      %s213 = scalar_lea.vmem %s2, %s212
      %p214 = scmp.lt.s32.totalorder %s18, 1
      %s215 = scalar_select %p214, %s18, 1
      %p216 = scmp.lt.s32.totalorder %s19, 0
      %s217 = scalar_select %p216, %s19, 0
      %s218 = smul.addr %s215, 128
      %s219 = sadd.s32 %s217, %s218
      %s220 = smul.addr %s219, 8
      %s221 = scalar_lea.vmem %s3, %s220
      %p222 = scmp.eq.s32.totalorder %s19, 0
      // Predicated region
      $region33: #{tpu_custom_call.1} parent=31 // pred_check
        %p223 = pneg %p222
      $region34: #{tpu_custom_call.1} parent=31 // pred_check_branch
        %225 = sbr.rel (%p223) target = $region36
      $region35: #{tpu_custom_call.1} parent=31 // pred_region
        %vm226 = vcmask 31744
        %227 = vst.msk [vmem:[#allocation2] sm:$0xff] %vm226, 0.0
        %228 = vst.msk [vmem:[#allocation2 + $0x8] sm:$0xff] %vm226, 0.0
        %vm229 = vcmask 25600
        %230 = vst.msk [vmem:[#allocation2 + $0x10] sm:$0x3] %vm229, 0.0
        %231 = vst.msk [vmem:[#allocation2 + $0x18] sm:$0xff] %vm226, 0.0
        %232 = vst.msk [vmem:[#allocation2 + $0x20] sm:$0xff] %vm226, 0.0
        %233 = vst.msk [vmem:[#allocation2 + $0x28] sm:$0x3] %vm229, 0.0
        %234 = vst.msk [vmem:[#allocation2 + $0x30] sm:$0xff] %vm226, 0.0
        %235 = vst.msk [vmem:[#allocation2 + $0x38] sm:$0xff] %vm226, 0.0
        %236 = vst.msk [vmem:[#allocation2 + $0x40] sm:$0x3] %vm229, 0.0
        %237 = vst.msk [vmem:[#allocation2 + $0x48] sm:$0xff] %vm226, 0.0
        %238 = vst.msk [vmem:[#allocation2 + $0x50] sm:$0xff] %vm226, 0.0
        %239 = vst.msk [vmem:[#allocation2 + $0x58] sm:$0x3] %vm229, 0.0
        %240 = vst.msk [vmem:[#allocation2 + $0x60] sm:$0xff] %vm226, 0.0
        %241 = vst.msk [vmem:[#allocation2 + $0x68] sm:$0xff] %vm226, 0.0
        %242 = vst.msk [vmem:[#allocation2 + $0x70] sm:$0x3] %vm229, 0.0
        %243 = vst.msk [vmem:[#allocation2 + $0x78] sm:$0xff] %vm226, 0.0
        %244 = vst.msk [vmem:[#allocation2 + $0x80] sm:$0xff] %vm226, 0.0
        %245 = vst.msk [vmem:[#allocation2 + $0x88] sm:$0x3] %vm229, 0.0
        %246 = vst.msk [vmem:[#allocation2 + $0x90] sm:$0xff] %vm226, 0.0
        %247 = vst.msk [vmem:[#allocation2 + $0x98] sm:$0xff] %vm226, 0.0
        %248 = vst.msk [vmem:[#allocation2 + $0xa0] sm:$0x3] %vm229, 0.0
        %249 = vst.msk [vmem:[#allocation2 + $0xa8] sm:$0xff] %vm226, 0.0
        %250 = vst.msk [vmem:[#allocation2 + $0xb0] sm:$0xff] %vm226, 0.0
        %251 = vst.msk [vmem:[#allocation2 + $0xb8] sm:$0x3] %vm229, 0.0
        %252 = vst.msk [vmem:[#allocation2 + $0xc0] sm:$0xff] %vm226, 0.0
        %253 = vst.msk [vmem:[#allocation2 + $0xc8] sm:$0xff] %vm226, 0.0
        %254 = vst.msk [vmem:[#allocation2 + $0xd0] sm:$0x3] %vm229, 0.0
        %255 = vst.msk [vmem:[#allocation2 + $0xd8] sm:$0xff] %vm226, 0.0
        %256 = vst.msk [vmem:[#allocation2 + $0xe0] sm:$0xff] %vm226, 0.0
        %257 = vst.msk [vmem:[#allocation2 + $0xe8] sm:$0x3] %vm229, 0.0
        %258 = vst.msk [vmem:[#allocation2 + $0xf0] sm:$0xff] %vm226, 0.0
        %259 = vst.msk [vmem:[#allocation2 + $0xf8] sm:$0xff] %vm226, 0.0
        %260 = vst.msk [vmem:[#allocation2 + $0x100] sm:$0x3] %vm229, 0.0
        %261 = vst.msk [vmem:[#allocation2 + $0x108] sm:$0xff] %vm226, 0.0
        %262 = vst.msk [vmem:[#allocation2 + $0x110] sm:$0xff] %vm226, 0.0
        %263 = vst.msk [vmem:[#allocation2 + $0x118] sm:$0x3] %vm229, 0.0
        %264 = vst.msk [vmem:[#allocation2 + $0x120] sm:$0xff] %vm226, 0.0
        %265 = vst.msk [vmem:[#allocation2 + $0x128] sm:$0xff] %vm226, 0.0
        %266 = vst.msk [vmem:[#allocation2 + $0x130] sm:$0x3] %vm229, 0.0
        %267 = vst.msk [vmem:[#allocation2 + $0x138] sm:$0xff] %vm226, 0.0
        %268 = vst.msk [vmem:[#allocation2 + $0x140] sm:$0xff] %vm226, 0.0
        %269 = vst.msk [vmem:[#allocation2 + $0x148] sm:$0x3] %vm229, 0.0
        %270 = vst.msk [vmem:[#allocation2 + $0x150] sm:$0xff] %vm226, 0.0
        %271 = vst.msk [vmem:[#allocation2 + $0x158] sm:$0xff] %vm226, 0.0
        %272 = vst.msk [vmem:[#allocation2 + $0x160] sm:$0x3] %vm229, 0.0
        %273 = vst.msk [vmem:[#allocation2 + $0x168] sm:$0xff] %vm226, 0.0
        %274 = vst.msk [vmem:[#allocation2 + $0x170] sm:$0xff] %vm226, 0.0
        %275 = vst.msk [vmem:[#allocation2 + $0x178] sm:$0x3] %vm229, 0.0
        %276 = vst.msk [vmem:[#allocation2 + $0x180] sm:$0xff] %vm226, 0.0
        %277 = vst.msk [vmem:[#allocation2 + $0x188] sm:$0xff] %vm226, 0.0
        %278 = vst.msk [vmem:[#allocation2 + $0x190] sm:$0x3] %vm229, 0.0
        %279 = vst.msk [vmem:[#allocation2 + $0x198] sm:$0xff] %vm226, 0.0
        %280 = vst.msk [vmem:[#allocation2 + $0x1a0] sm:$0xff] %vm226, 0.0
        %281 = vst.msk [vmem:[#allocation2 + $0x1a8] sm:$0x3] %vm229, 0.0
        %v282 = vld [vmem:[%s206] sm:$0xff]
        %v283 = vld [vmem:[%s206 + $0x8] sm:$0xff]
        %v284 = vld [vmem:[%s206 + $0x10] sm:$0xff]
        %v285 = vld [vmem:[%s206 + $0x18] sm:$0xff]
        %v286 = vld [vmem:[%s206 + $0x20] sm:$0xff]
        %v287 = vld [vmem:[%s206 + $0x28] sm:$0xff]
        %v288 = vld [vmem:[%s206 + $0x30] sm:$0xff]
        %v289 = vld [vmem:[%s206 + $0x38] sm:$0xff]
        %v290 = vld [vmem:[%s206 + $0x40] sm:$0xff]
        %v291 = vld [vmem:[%s206 + $0x48] sm:$0xff]
        %v292 = vld [vmem:[%s206 + $0x50] sm:$0xff]
        %v293 = vld [vmem:[%s206 + $0x58] sm:$0xff]
        %v294 = vld [vmem:[%s206 + $0x60] sm:$0xff]
        %v295 = vld [vmem:[%s206 + $0x68] sm:$0xff]
        %v296 = vld [vmem:[%s206 + $0x70] sm:$0xff]
        %v297 = vld [vmem:[%s206 + $0x78] sm:$0xff]
        %v298 = vld [vmem:[%s206 + $0x80] sm:$0xff]
        %v299 = vld [vmem:[%s206 + $0x88] sm:$0xff]
        %v300 = vld [vmem:[%s206 + $0x90] sm:$0xff]
        %v301 = vld [vmem:[%s206 + $0x98] sm:$0xff]
        %v302 = vld [vmem:[%s206 + $0xa0] sm:$0xff]
        %v303 = vld [vmem:[%s206 + $0xa8] sm:$0xff]
        %v304 = vld [vmem:[%s206 + $0xb0] sm:$0xff]
        %v305 = vld [vmem:[%s206 + $0xb8] sm:$0xff]
        %v306 = vld [vmem:[%s206 + $0xc0] sm:$0xff]
        %v307 = vld [vmem:[%s206 + $0xc8] sm:$0xff]
        %v308 = vld [vmem:[%s206 + $0xd0] sm:$0xff]
        %v309 = vld [vmem:[%s206 + $0xd8] sm:$0xff]
        %v310 = vld [vmem:[%s206 + $0xe0] sm:$0xff]
        %v311 = vld [vmem:[%s206 + $0xe8] sm:$0xff]
        %v312 = vld [vmem:[%s206 + $0xf0] sm:$0xff]
        %v313 = vld [vmem:[%s206 + $0xf8] sm:$0xff]
        %s314 = scalar_lea.vmem [#allocation2], 24
        %315 = vst.msk [vmem:[%s314 + $0x1] sm:$0xff] %vm226, %v282
        %316 = vst.msk [vmem:[%s314 + $0x9] sm:$0xff] %vm226, %v283
        %317 = vst.msk [vmem:[%s314 + $0x19] sm:$0xff] %vm226, %v284
        %318 = vst.msk [vmem:[%s314 + $0x21] sm:$0xff] %vm226, %v285
        %319 = vst.msk [vmem:[%s314 + $0x31] sm:$0xff] %vm226, %v286
        %320 = vst.msk [vmem:[%s314 + $0x39] sm:$0xff] %vm226, %v287
        %321 = vst.msk [vmem:[%s314 + $0x49] sm:$0xff] %vm226, %v288
        %322 = vst.msk [vmem:[%s314 + $0x51] sm:$0xff] %vm226, %v289
        %323 = vst.msk [vmem:[%s314 + $0x61] sm:$0xff] %vm226, %v290
        %324 = vst.msk [vmem:[%s314 + $0x69] sm:$0xff] %vm226, %v291
        %325 = vst.msk [vmem:[%s314 + $0x79] sm:$0xff] %vm226, %v292
        %326 = vst.msk [vmem:[%s314 + $0x81] sm:$0xff] %vm226, %v293
        %327 = vst.msk [vmem:[%s314 + $0x91] sm:$0xff] %vm226, %v294
        %328 = vst.msk [vmem:[%s314 + $0x99] sm:$0xff] %vm226, %v295
        %329 = vst.msk [vmem:[%s314 + $0xa9] sm:$0xff] %vm226, %v296
        %330 = vst.msk [vmem:[%s314 + $0xb1] sm:$0xff] %vm226, %v297
        %331 = vst.msk [vmem:[%s314 + $0xc1] sm:$0xff] %vm226, %v298
        %332 = vst.msk [vmem:[%s314 + $0xc9] sm:$0xff] %vm226, %v299
        %333 = vst.msk [vmem:[%s314 + $0xd9] sm:$0xff] %vm226, %v300
        %334 = vst.msk [vmem:[%s314 + $0xe1] sm:$0xff] %vm226, %v301
        %335 = vst.msk [vmem:[%s314 + $0xf1] sm:$0xff] %vm226, %v302
        %336 = vst.msk [vmem:[%s314 + $0xf9] sm:$0xff] %vm226, %v303
        %337 = vst.msk [vmem:[%s314 + $0x109] sm:$0xff] %vm226, %v304
        %338 = vst.msk [vmem:[%s314 + $0x111] sm:$0xff] %vm226, %v305
        %339 = vst.msk [vmem:[%s314 + $0x121] sm:$0xff] %vm226, %v306
        %340 = vst.msk [vmem:[%s314 + $0x129] sm:$0xff] %vm226, %v307
        %341 = vst.msk [vmem:[%s314 + $0x139] sm:$0xff] %vm226, %v308
        %342 = vst.msk [vmem:[%s314 + $0x141] sm:$0xff] %vm226, %v309
        %343 = vst.msk [vmem:[%s314 + $0x151] sm:$0xff] %vm226, %v310
        %344 = vst.msk [vmem:[%s314 + $0x159] sm:$0xff] %vm226, %v311
        %345 = vst.msk [vmem:[%s314 + $0x169] sm:$0xff] %vm226, %v312
        %346 = vst.msk [vmem:[%s314 + $0x171] sm:$0xff] %vm226, %v313
      $region36: #{tpu_custom_call.1} parent=31 // pred_fallthru
        _
      %v347 = vld [vmem:[#allocation2] sm:$0xff]
      %v348 = vld [vmem:[#allocation2 + $0x8] sm:$0xff]
      %v349 = vld [vmem:[#allocation2 + $0x10] sm:$0x3]
      %v350 = vld [vmem:[#allocation2 + $0x18] sm:$0xff]
      %v351 = vld [vmem:[#allocation2 + $0x20] sm:$0xff]
      %v352 = vld [vmem:[#allocation2 + $0x28] sm:$0x3]
      %v353 = vld [vmem:[#allocation2 + $0x30] sm:$0xff]
      %v354 = vld [vmem:[#allocation2 + $0x38] sm:$0xff]
      %v355 = vld [vmem:[#allocation2 + $0x40] sm:$0x3]
      %v356 = vld [vmem:[#allocation2 + $0x48] sm:$0xff]
      %v357 = vld [vmem:[#allocation2 + $0x50] sm:$0xff]
      %v358 = vld [vmem:[#allocation2 + $0x58] sm:$0x3]
      %v359 = vld [vmem:[#allocation2 + $0x60] sm:$0xff]
      %v360 = vld [vmem:[#allocation2 + $0x68] sm:$0xff]
      %v361 = vld [vmem:[#allocation2 + $0x70] sm:$0x3]
      %v362 = vld [vmem:[#allocation2 + $0x78] sm:$0xff]
      %v363 = vld [vmem:[#allocation2 + $0x80] sm:$0xff]
      %v364 = vld [vmem:[#allocation2 + $0x88] sm:$0x3]
      %v365 = vld [vmem:[#allocation2 + $0x90] sm:$0xff]
      %v366 = vld [vmem:[#allocation2 + $0x98] sm:$0xff]
      %v367 = vld [vmem:[#allocation2 + $0xa0] sm:$0x3]
      %v368 = vld [vmem:[#allocation2 + $0xa8] sm:$0xff]
      %v369 = vld [vmem:[#allocation2 + $0xb0] sm:$0xff]
      %v370 = vld [vmem:[#allocation2 + $0xb8] sm:$0x3]
      %v371 = vld [vmem:[#allocation2 + $0xc0] sm:$0xff]
      %v372 = vld [vmem:[#allocation2 + $0xc8] sm:$0xff]
      %v373 = vld [vmem:[#allocation2 + $0xd0] sm:$0x3]
      %v374 = vld [vmem:[#allocation2 + $0xd8] sm:$0xff]
      %v375 = vld [vmem:[#allocation2 + $0xe0] sm:$0xff]
      %v376 = vld [vmem:[#allocation2 + $0xe8] sm:$0x3]
      %v377 = vld [vmem:[#allocation2 + $0xf0] sm:$0xff]
      %v378 = vld [vmem:[#allocation2 + $0xf8] sm:$0xff]
      %v379 = vld [vmem:[#allocation2 + $0x100] sm:$0x3]
      %v380 = vld [vmem:[#allocation2 + $0x108] sm:$0xff]
      %v381 = vld [vmem:[#allocation2 + $0x110] sm:$0xff]
      %v382 = vld [vmem:[#allocation2 + $0x118] sm:$0x3]
      %v383 = vld [vmem:[#allocation2 + $0x120] sm:$0xff]
      %v384 = vld [vmem:[#allocation2 + $0x128] sm:$0xff]
      %v385 = vld [vmem:[#allocation2 + $0x130] sm:$0x3]
      %v386 = vld [vmem:[#allocation2 + $0x138] sm:$0xff]
      %v387 = vld [vmem:[#allocation2 + $0x140] sm:$0xff]
      %v388 = vld [vmem:[#allocation2 + $0x148] sm:$0x3]
      %v389 = vld [vmem:[#allocation2 + $0x150] sm:$0xff]
      %v390 = vld [vmem:[#allocation2 + $0x158] sm:$0xff]
      %v391 = vld [vmem:[#allocation2 + $0x160] sm:$0x3]
      %v392 = vld [vmem:[#allocation2 + $0x168] sm:$0xff]
      %v393 = vld [vmem:[#allocation2 + $0x170] sm:$0xff]
      %v394 = vld [vmem:[#allocation2 + $0x178] sm:$0x3]
      %v395 = vld [vmem:[#allocation2 + $0x180] sm:$0xff]
      %v396 = vld [vmem:[#allocation2 + $0x188] sm:$0xff]
      %v397 = vld [vmem:[#allocation2 + $0x190] sm:$0x3]
      %v398 = vld [vmem:[#allocation2 + $0x198] sm:$0xff]
      %v399 = vld [vmem:[#allocation2 + $0x1a0] sm:$0xff]
      %v400 = vld [vmem:[#allocation2 + $0x1a8] sm:$0x3]
      %vm449 = vcmask 1046528
      %v450 = vrot.slane %v347, 1
      %v451 = vrot.slane %v348, 1
      %v452 = vsel %vm449, %v450, %v451
      %v453 = vrot.slane %v349, 1
      %v454 = vsel %vm449, %v451, %v453
      %v455 = vrot.slane %v350, 1
      %v456 = vrot.slane %v351, 1
      %v457 = vsel %vm449, %v455, %v456
      %v458 = vrot.slane %v352, 1
      %v459 = vsel %vm449, %v456, %v458
      %v460 = vrot.slane %v353, 1
      %v461 = vrot.slane %v354, 1
      %v462 = vsel %vm449, %v460, %v461
      %v463 = vrot.slane %v355, 1
      %v464 = vsel %vm449, %v461, %v463
      %v465 = vrot.slane %v356, 1
      %v466 = vrot.slane %v357, 1
      %v467 = vsel %vm449, %v465, %v466
      %v468 = vrot.slane %v358, 1
      %v469 = vsel %vm449, %v466, %v468
      %v470 = vrot.slane %v359, 1
      %v471 = vrot.slane %v360, 1
      %v472 = vsel %vm449, %v470, %v471
      %v473 = vrot.slane %v361, 1
      %v474 = vsel %vm449, %v471, %v473
      %v475 = vrot.slane %v362, 1
      %v476 = vrot.slane %v363, 1
      %v477 = vsel %vm449, %v475, %v476
      %v478 = vrot.slane %v364, 1
      %v479 = vsel %vm449, %v476, %v478
      %v480 = vrot.slane %v365, 1
      %v481 = vrot.slane %v366, 1
      %v482 = vsel %vm449, %v480, %v481
      %v483 = vrot.slane %v367, 1
      %v484 = vsel %vm449, %v481, %v483
      %v485 = vrot.slane %v368, 1
      %v486 = vrot.slane %v369, 1
      %v487 = vsel %vm449, %v485, %v486
      %v488 = vrot.slane %v370, 1
      %v489 = vsel %vm449, %v486, %v488
      %v490 = vrot.slane %v371, 1
      %v491 = vrot.slane %v372, 1
      %v492 = vsel %vm449, %v490, %v491
      %v493 = vrot.slane %v373, 1
      %v494 = vsel %vm449, %v491, %v493
      %v495 = vrot.slane %v374, 1
      %v496 = vrot.slane %v375, 1
      %v497 = vsel %vm449, %v495, %v496
      %v498 = vrot.slane %v376, 1
      %v499 = vsel %vm449, %v496, %v498
      %v500 = vrot.slane %v377, 1
      %v501 = vrot.slane %v378, 1
      %v502 = vsel %vm449, %v500, %v501
      %v503 = vrot.slane %v379, 1
      %v504 = vsel %vm449, %v501, %v503
      %v505 = vrot.slane %v380, 1
      %v506 = vrot.slane %v381, 1
      %v507 = vsel %vm449, %v505, %v506
      %v508 = vrot.slane %v382, 1
      %v509 = vsel %vm449, %v506, %v508
      %v510 = vrot.slane %v383, 1
      %v511 = vrot.slane %v384, 1
      %v512 = vsel %vm449, %v510, %v511
      %v513 = vrot.slane %v385, 1
      %v514 = vsel %vm449, %v511, %v513
      %v515 = vrot.slane %v386, 1
      %v516 = vrot.slane %v387, 1
      %v517 = vsel %vm449, %v515, %v516
      %v518 = vrot.slane %v388, 1
      %v519 = vsel %vm449, %v516, %v518
      %v520 = vrot.slane %v389, 1
      %v521 = vrot.slane %v390, 1
      %v522 = vsel %vm449, %v520, %v521
      %v523 = vrot.slane %v391, 1
      %v524 = vsel %vm449, %v521, %v523
      %v525 = vrot.slane %v392, 1
      %v526 = vrot.slane %v393, 1
      %v527 = vsel %vm449, %v525, %v526
      %v528 = vrot.slane %v394, 1
      %v529 = vsel %vm449, %v526, %v528
      %vm530 = vcmask 1045504
      %v531 = vrot.slane %v347, 2
      %v532 = vrot.slane %v348, 2
      %v533 = vsel %vm530, %v531, %v532
      %v534 = vrot.slane %v349, 2
      %v535 = vsel %vm530, %v532, %v534
      %v536 = vrot.slane %v350, 2
      %v537 = vrot.slane %v351, 2
      %v538 = vsel %vm530, %v536, %v537
      %v539 = vrot.slane %v352, 2
      %v540 = vsel %vm530, %v537, %v539
      %v541 = vrot.slane %v353, 2
      %v542 = vrot.slane %v354, 2
      %v543 = vsel %vm530, %v541, %v542
      %v544 = vrot.slane %v355, 2
      %v545 = vsel %vm530, %v542, %v544
      %v546 = vrot.slane %v356, 2
      %v547 = vrot.slane %v357, 2
      %v548 = vsel %vm530, %v546, %v547
      %v549 = vrot.slane %v358, 2
      %v550 = vsel %vm530, %v547, %v549
      %v551 = vrot.slane %v359, 2
      %v552 = vrot.slane %v360, 2
      %v553 = vsel %vm530, %v551, %v552
      %v554 = vrot.slane %v361, 2
      %v555 = vsel %vm530, %v552, %v554
      %v556 = vrot.slane %v362, 2
      %v557 = vrot.slane %v363, 2
      %v558 = vsel %vm530, %v556, %v557
      %v559 = vrot.slane %v364, 2
      %v560 = vsel %vm530, %v557, %v559
      %v561 = vrot.slane %v365, 2
      %v562 = vrot.slane %v366, 2
      %v563 = vsel %vm530, %v561, %v562
      %v564 = vrot.slane %v367, 2
      %v565 = vsel %vm530, %v562, %v564
      %v566 = vrot.slane %v368, 2
      %v567 = vrot.slane %v369, 2
      %v568 = vsel %vm530, %v566, %v567
      %v569 = vrot.slane %v370, 2
      %v570 = vsel %vm530, %v567, %v569
      %v571 = vrot.slane %v371, 2
      %v572 = vrot.slane %v372, 2
      %v573 = vsel %vm530, %v571, %v572
      %v574 = vrot.slane %v373, 2
      %v575 = vsel %vm530, %v572, %v574
      %v576 = vrot.slane %v374, 2
      %v577 = vrot.slane %v375, 2
      %v578 = vsel %vm530, %v576, %v577
      %v579 = vrot.slane %v376, 2
      %v580 = vsel %vm530, %v577, %v579
      %v581 = vrot.slane %v377, 2
      %v582 = vrot.slane %v378, 2
      %v583 = vsel %vm530, %v581, %v582
      %v584 = vrot.slane %v379, 2
      %v585 = vsel %vm530, %v582, %v584
      %v586 = vrot.slane %v380, 2
      %v587 = vrot.slane %v381, 2
      %v588 = vsel %vm530, %v586, %v587
      %v589 = vrot.slane %v382, 2
      %v590 = vsel %vm530, %v587, %v589
      %v591 = vrot.slane %v383, 2
      %v592 = vrot.slane %v384, 2
      %v593 = vsel %vm530, %v591, %v592
      %v594 = vrot.slane %v385, 2
      %v595 = vsel %vm530, %v592, %v594
      %v596 = vrot.slane %v386, 2
      %v597 = vrot.slane %v387, 2
      %v598 = vsel %vm530, %v596, %v597
      %v599 = vrot.slane %v388, 2
      %v600 = vsel %vm530, %v597, %v599
      %v601 = vrot.slane %v389, 2
      %v602 = vrot.slane %v390, 2
      %v603 = vsel %vm530, %v601, %v602
      %v604 = vrot.slane %v391, 2
      %v605 = vsel %vm530, %v602, %v604
      %v606 = vrot.slane %v392, 2
      %v607 = vrot.slane %v393, 2
      %v608 = vsel %vm530, %v606, %v607
      %v609 = vrot.slane %v394, 2
      %v610 = vsel %vm530, %v607, %v609
      %v614 = vrot.slane %v395, 1
      %v615 = vrot.slane %v396, 1
      %v616 = vsel %vm449, %v614, %v615
      %v617 = vrot.slane %v397, 1
      %v618 = vsel %vm449, %v615, %v617
      %v619 = vrot.slane %v395, 2
      %v620 = vrot.slane %v396, 2
      %v621 = vsel %vm530, %v619, %v620
      %v622 = vrot.slane %v397, 2
      %v623 = vsel %vm530, %v620, %v622
      %v627 = vrot.slane %v398, 1
      %v628 = vrot.slane %v399, 1
      %v629 = vsel %vm449, %v627, %v628
      %v630 = vrot.slane %v400, 1
      %v631 = vsel %vm449, %v628, %v630
      %v632 = vrot.slane %v398, 2
      %v633 = vrot.slane %v399, 2
      %v634 = vsel %vm530, %v632, %v633
      %v635 = vrot.slane %v400, 2
      %v636 = vsel %vm530, %v633, %v635
      %v637 = vld [vmem:[%s213] sm:$0x1]
      %v638 = vld [vmem:[%s210] sm:$0xf]
      %s639 = scalar_lea.vmem %s210, 4
      %v640 = vld [vmem:[%s639] sm:$0xf]
      %vm641 = vcmask 31744
      %v642 = vsel %vm641, %v452, 0
      %v644 = vsel %vm641, %v454, 0
      %v646 = vsel %vm641, %v457, 0
      %v648 = vsel %vm641, %v459, 0
      %v650 = vsel %vm641, %v462, 0
      %v652 = vsel %vm641, %v464, 0
      %v654 = vsel %vm641, %v467, 0
      %v656 = vsel %vm641, %v469, 0
      %v658 = vsel %vm641, %v472, 0
      %v660 = vsel %vm641, %v474, 0
      %v662 = vsel %vm641, %v477, 0
      %v664 = vsel %vm641, %v479, 0
      %v666 = vsel %vm641, %v482, 0
      %v668 = vsel %vm641, %v484, 0
      %v670 = vsel %vm641, %v487, 0
      %v672 = vsel %vm641, %v489, 0
      %v674 = vsel %vm641, %v492, 0
      %v676 = vsel %vm641, %v494, 0
      %v678 = vsel %vm641, %v497, 0
      %v680 = vsel %vm641, %v499, 0
      %v682 = vsel %vm641, %v502, 0
      %v684 = vsel %vm641, %v504, 0
      %v686 = vsel %vm641, %v507, 0
      %v688 = vsel %vm641, %v509, 0
      %v690 = vsel %vm641, %v512, 0
      %v692 = vsel %vm641, %v514, 0
      %v694 = vsel %vm641, %v517, 0
      %v696 = vsel %vm641, %v519, 0
      %v698 = vsel %vm641, %v522, 0
      %v700 = vsel %vm641, %v524, 0
      %v702 = vsel %vm641, %v527, 0
      %v704 = vsel %vm641, %v529, 0
      %vm706 = vcmask 1043456
      %v708 = vsel %vm706, %v640, 0
      %710 = vmatprep.subr.mxu0 0.0
      %711 = vmatpush1.msra.mxu0 %v708
      %712 = vmatprep.subr.mxu0 0.0
      %713 = vmatpush1.msra.mxu0 0.0
      %714 = vmatprep.subr.mxu0 0.0
      %715 = vmatpush1.msra.mxu0 0.0
      %716 = vmatprep.subr.mxu0 0.0
      %717 = vmatpush1.msra.mxu0 0.0
      %718 = vmatprep.subr.mxu0 0.0
      %719 = vmatpush1.msra.mxu0 0.0
      %720 = vmatprep.subr.mxu0 0.0
      %721 = vmatpush1.msra.mxu0 0.0
      %722 = vmatprep.subr.mxu0 0.0
      %723 = vmatpush1.msra.mxu0 0.0
      %724 = vmatprep.subr.mxu0 0.0
      %725 = vmatpush1.msra.mxu0 0.0
      %726 = vmatprep.subr.mxu0 0.0
      %727 = vmatpush1.msra.mxu0 0.0
      %728 = vmatprep.subr.mxu0 0.0
      %729 = vmatpush1.msra.mxu0 0.0
      %730 = vmatprep.subr.mxu0 0.0
      %731 = vmatpush1.msra.mxu0 0.0
      %732 = vmatprep.subr.mxu0 0.0
      %733 = vmatpush1.msra.mxu0 0.0
      %734 = vmatprep.subr.mxu0 0.0
      %735 = vmatpush1.msra.mxu0 0.0
      %736 = vmatprep.subr.mxu0 0.0
      %737 = vmatpush1.msra.mxu0 0.0
      %738 = vmatprep.subr.mxu0 0.0
      %739 = vmatpush1.msra.mxu0 0.0
      %740 = vmatprep.subr.mxu0 0.0
      %741 = vmatpush1.msra.mxu0 0.0
      %742 = vmatprep.subr.mxu0 0.0
      %743 = vmatpush1.msra.mxu0 0.0
      %744 = vmatprep.subr.mxu0 0.0
      %745 = vmatpush1.msra.mxu0 0.0
      %746 = vmatprep.subr.mxu0 0.0
      %747 = vmatpush1.msra.mxu0 0.0
      %748 = vmatprep.subr.mxu0 0.0
      %749 = vmatpush1.msra.mxu0 0.0
      %750 = vmatprep.subr.mxu0 0.0
      %751 = vmatpush1.msra.mxu0 0.0
      %752 = vmatprep.subr.mxu0 0.0
      %753 = vmatpush1.msra.mxu0 0.0
      %754 = vmatprep.subr.mxu0 0.0
      %755 = vmatpush1.msra.mxu0 0.0
      %756 = vmatprep.subr.mxu0 0.0
      %757 = vmatpush1.msra.mxu0 0.0
      %758 = vmatprep.subr.mxu0 0.0
      %759 = vmatpush1.msra.mxu0 0.0
      %760 = vmatprep.subr.mxu0 0.0
      %761 = vmatpush1.msra.mxu0 0.0
      %762 = vmatprep.subr.mxu0 0.0
      %763 = vmatpush1.msra.mxu0 0.0
      %764 = vmatprep.subr.mxu0 0.0
      %765 = vmatpush1.msra.mxu0 0.0
      %766 = vmatprep.subr.mxu0 0.0
      %767 = vmatpush1.msra.mxu0 0.0
      %768 = vmatprep.subr.mxu0 0.0
      %769 = vmatpush1.msra.mxu0 0.0
      %770 = vmatprep.subr.mxu0 0.0
      %771 = vmatpush1.msra.mxu0 0.0
      %772 = vmatprep.subr.mxu0 0.0
      %773 = vmatpush1.msra.mxu0 0.0
      %774 = vmatprep.mubr.f32.mxu0 0.0
      %775 = vmatmul.mubr.f32.gmra.mrb[0].mxu0 %v642
      %v776 = vpop.f32.mrb[0].mxu0
      %v777 = vadd.f32 0.0, %v776
      %v778 = vpop.f32.mrb[0].mxu0
      %779 = vmatprep.mubr.f32.mxu0 0.0
      %780 = vmatmul.mubr.f32.gmra.mrb[0].mxu0 %v644
      %v781 = vpop.f32.mrb[0].mxu0
      %v782 = vadd.f32 0.0, %v781
      %v783 = vpop.f32.mrb[0].mxu0
      %784 = vmatprep.mubr.f32.mxu0 0.0
      %785 = vmatmul.mubr.f32.gmra.mrb[0].mxu0 %v646
      %v786 = vpop.f32.mrb[0].mxu0
      %v787 = vadd.f32 0.0, %v786
      %v788 = vpop.f32.mrb[0].mxu0
      %789 = vmatprep.mubr.f32.mxu0 0.0
      %790 = vmatmul.mubr.f32.gmra.mrb[0].mxu0 %v648
      %v791 = vpop.f32.mrb[0].mxu0
      %v792 = vadd.f32 0.0, %v791
      %v793 = vpop.f32.mrb[0].mxu0
      %794 = vmatprep.mubr.f32.mxu0 0.0
      %795 = vmatmul.mubr.f32.gmra.mrb[0].mxu0 %v650
      %v796 = vpop.f32.mrb[0].mxu0
      %v797 = vadd.f32 0.0, %v796
      %v798 = vpop.f32.mrb[0].mxu0
      %799 = vmatprep.mubr.f32.mxu0 0.0
      %800 = vmatmul.mubr.f32.gmra.mrb[0].mxu0 %v652
      %v801 = vpop.f32.mrb[0].mxu0
      %v802 = vadd.f32 0.0, %v801
      %v803 = vpop.f32.mrb[0].mxu0
      %804 = vmatprep.mubr.f32.mxu0 0.0
      %805 = vmatmul.mubr.f32.gmra.mrb[0].mxu0 %v654
      %v806 = vpop.f32.mrb[0].mxu0
      %v807 = vadd.f32 0.0, %v806
      %v808 = vpop.f32.mrb[0].mxu0
      %809 = vmatprep.mubr.f32.mxu0 0.0
      %810 = vmatmul.mubr.f32.gmra.mrb[0].mxu0 %v656
      %v811 = vpop.f32.mrb[0].mxu0
      %v812 = vadd.f32 0.0, %v811
      %v813 = vpop.f32.mrb[0].mxu0
      %814 = vmatprep.mubr.f32.mxu0 0.0
      %815 = vmatmul.mubr.f32.gmra.mrb[0].mxu0 %v658
      %v816 = vpop.f32.mrb[0].mxu0
      %v817 = vadd.f32 0.0, %v816
      %v818 = vpop.f32.mrb[0].mxu0
      %819 = vmatprep.mubr.f32.mxu0 0.0
      %820 = vmatmul.mubr.f32.gmra.mrb[0].mxu0 %v660
      %v821 = vpop.f32.mrb[0].mxu0
      %v822 = vadd.f32 0.0, %v821
      %v823 = vpop.f32.mrb[0].mxu0
      %824 = vmatprep.mubr.f32.mxu0 0.0
      %825 = vmatmul.mubr.f32.gmra.mrb[0].mxu0 %v662
      %v826 = vpop.f32.mrb[0].mxu0
      %v827 = vadd.f32 0.0, %v826
      %v828 = vpop.f32.mrb[0].mxu0
      %829 = vmatprep.mubr.f32.mxu0 0.0
      %830 = vmatmul.mubr.f32.gmra.mrb[0].mxu0 %v664
      %v831 = vpop.f32.mrb[0].mxu0
      %v832 = vadd.f32 0.0, %v831
      %v833 = vpop.f32.mrb[0].mxu0
      %834 = vmatprep.mubr.f32.mxu0 0.0
      %835 = vmatmul.mubr.f32.gmra.mrb[0].mxu0 %v666
      %v836 = vpop.f32.mrb[0].mxu0
      %v837 = vadd.f32 0.0, %v836
      %v838 = vpop.f32.mrb[0].mxu0
      %839 = vmatprep.mubr.f32.mxu0 0.0
      %840 = vmatmul.mubr.f32.gmra.mrb[0].mxu0 %v668
      %v841 = vpop.f32.mrb[0].mxu0
      %v842 = vadd.f32 0.0, %v841
      %v843 = vpop.f32.mrb[0].mxu0
      %844 = vmatprep.mubr.f32.mxu0 0.0
      %845 = vmatmul.mubr.f32.gmra.mrb[0].mxu0 %v670
      %v846 = vpop.f32.mrb[0].mxu0
      %v847 = vadd.f32 0.0, %v846
      %v848 = vpop.f32.mrb[0].mxu0
      %849 = vmatprep.mubr.f32.mxu0 0.0
      %850 = vmatmul.mubr.f32.gmra.mrb[0].mxu0 %v672
      %v851 = vpop.f32.mrb[0].mxu0
      %v852 = vadd.f32 0.0, %v851
      %v853 = vpop.f32.mrb[0].mxu0
      %854 = vmatprep.mubr.f32.mxu0 0.0
      %855 = vmatmul.mubr.f32.gmra.mrb[0].mxu0 %v674
      %v856 = vpop.f32.mrb[0].mxu0
      %v857 = vadd.f32 0.0, %v856
      %v858 = vpop.f32.mrb[0].mxu0
      %859 = vmatprep.mubr.f32.mxu0 0.0
      %860 = vmatmul.mubr.f32.gmra.mrb[0].mxu0 %v676
      %v861 = vpop.f32.mrb[0].mxu0
      %v862 = vadd.f32 0.0, %v861
      %v863 = vpop.f32.mrb[0].mxu0
      %864 = vmatprep.mubr.f32.mxu0 0.0
      %865 = vmatmul.mubr.f32.gmra.mrb[0].mxu0 %v678
      %v866 = vpop.f32.mrb[0].mxu0
      %v867 = vadd.f32 0.0, %v866
      %v868 = vpop.f32.mrb[0].mxu0
      %869 = vmatprep.mubr.f32.mxu0 0.0
      %870 = vmatmul.mubr.f32.gmra.mrb[0].mxu0 %v680
      %v871 = vpop.f32.mrb[0].mxu0
      %v872 = vadd.f32 0.0, %v871
      %v873 = vpop.f32.mrb[0].mxu0
      %874 = vmatprep.mubr.f32.mxu0 0.0
      %875 = vmatmul.mubr.f32.gmra.mrb[0].mxu0 %v682
      %v876 = vpop.f32.mrb[0].mxu0
      %v877 = vadd.f32 0.0, %v876
      %v878 = vpop.f32.mrb[0].mxu0
      %879 = vmatprep.mubr.f32.mxu0 0.0
      %880 = vmatmul.mubr.f32.gmra.mrb[0].mxu0 %v684
      %v881 = vpop.f32.mrb[0].mxu0
      %v882 = vadd.f32 0.0, %v881
      %v883 = vpop.f32.mrb[0].mxu0
      %884 = vmatprep.mubr.f32.mxu0 0.0
      %885 = vmatmul.mubr.f32.gmra.mrb[0].mxu0 %v686
      %v886 = vpop.f32.mrb[0].mxu0
      %v887 = vadd.f32 0.0, %v886
      %v888 = vpop.f32.mrb[0].mxu0
      %889 = vmatprep.mubr.f32.mxu0 0.0
      %890 = vmatmul.mubr.f32.gmra.mrb[0].mxu0 %v688
      %v891 = vpop.f32.mrb[0].mxu0
      %v892 = vadd.f32 0.0, %v891
      %v893 = vpop.f32.mrb[0].mxu0
      %894 = vmatprep.mubr.f32.mxu0 0.0
      %895 = vmatmul.mubr.f32.gmra.mrb[0].mxu0 %v690
      %v896 = vpop.f32.mrb[0].mxu0
      %v897 = vadd.f32 0.0, %v896
      %v898 = vpop.f32.mrb[0].mxu0
      %899 = vmatprep.mubr.f32.mxu0 0.0
      %900 = vmatmul.mubr.f32.gmra.mrb[0].mxu0 %v692
      %v901 = vpop.f32.mrb[0].mxu0
      %v902 = vadd.f32 0.0, %v901
      %v903 = vpop.f32.mrb[0].mxu0
      %904 = vmatprep.mubr.f32.mxu0 0.0
      %905 = vmatmul.mubr.f32.gmra.mrb[0].mxu0 %v694
      %v906 = vpop.f32.mrb[0].mxu0
      %v907 = vadd.f32 0.0, %v906
      %v908 = vpop.f32.mrb[0].mxu0
      %909 = vmatprep.mubr.f32.mxu0 0.0
      %910 = vmatmul.mubr.f32.gmra.mrb[0].mxu0 %v696
      %v911 = vpop.f32.mrb[0].mxu0
      %v912 = vadd.f32 0.0, %v911
      %v913 = vpop.f32.mrb[0].mxu0
      %914 = vmatprep.mubr.f32.mxu0 0.0
      %915 = vmatmul.mubr.f32.gmra.mrb[0].mxu0 %v698
      %v916 = vpop.f32.mrb[0].mxu0
      %v917 = vadd.f32 0.0, %v916
      %v918 = vpop.f32.mrb[0].mxu0
      %919 = vmatprep.mubr.f32.mxu0 0.0
      %920 = vmatmul.mubr.f32.gmra.mrb[0].mxu0 %v700
      %v921 = vpop.f32.mrb[0].mxu0
      %v922 = vadd.f32 0.0, %v921
      %v923 = vpop.f32.mrb[0].mxu0
      %924 = vmatprep.mubr.f32.mxu0 0.0
      %925 = vmatmul.mubr.f32.gmra.mrb[0].mxu0 %v702
      %v926 = vpop.f32.mrb[0].mxu0
      %v927 = vadd.f32 0.0, %v926
      %v928 = vpop.f32.mrb[0].mxu0
      %929 = vmatprep.mubr.f32.mxu0 0.0
      %930 = vmatmul.mubr.f32.gmra.mrb[0].mxu0 %v704
      %v931 = vpop.f32.mrb[0].mxu0
      %v932 = vadd.f32 0.0, %v931
      %v933 = vpop.f32.mrb[0].mxu0
      %934 = vdwg.mxu0
      %v935 = vsel %vm641, %v347, 0
      %v937 = vsel %vm641, %v348, 0
      %v939 = vsel %vm641, %v350, 0
      %v941 = vsel %vm641, %v351, 0
      %v943 = vsel %vm641, %v353, 0
      %v945 = vsel %vm641, %v354, 0
      %v947 = vsel %vm641, %v356, 0
      %v949 = vsel %vm641, %v357, 0
      %v951 = vsel %vm641, %v359, 0
      %v953 = vsel %vm641, %v360, 0
      %v955 = vsel %vm641, %v362, 0
      %v957 = vsel %vm641, %v363, 0
      %v959 = vsel %vm641, %v365, 0
      %v961 = vsel %vm641, %v366, 0
      %v963 = vsel %vm641, %v368, 0
      %v965 = vsel %vm641, %v369, 0
      %v967 = vsel %vm641, %v371, 0
      %v969 = vsel %vm641, %v372, 0
      %v971 = vsel %vm641, %v374, 0
      %v973 = vsel %vm641, %v375, 0
      %v975 = vsel %vm641, %v377, 0
      %v977 = vsel %vm641, %v378, 0
      %v979 = vsel %vm641, %v380, 0
      %v981 = vsel %vm641, %v381, 0
      %v983 = vsel %vm641, %v383, 0
      %v985 = vsel %vm641, %v384, 0
      %v987 = vsel %vm641, %v386, 0
      %v989 = vsel %vm641, %v387, 0
      %v991 = vsel %vm641, %v389, 0
      %v993 = vsel %vm641, %v390, 0
      %v995 = vsel %vm641, %v392, 0
      %v997 = vsel %vm641, %v393, 0
      %v1000 = vsel %vm706, %v638, 0
      %1002 = vmatprep.subr.mxu0 0.0
      %1003 = vmatpush1.msra.mxu0 %v1000
      %1004 = vmatprep.subr.mxu0 0.0
      %1005 = vmatpush1.msra.mxu0 0.0
      %1006 = vmatprep.subr.mxu0 0.0
      %1007 = vmatpush1.msra.mxu0 0.0
      %1008 = vmatprep.subr.mxu0 0.0
      %1009 = vmatpush1.msra.mxu0 0.0
      %1010 = vmatprep.subr.mxu0 0.0
      %1011 = vmatpush1.msra.mxu0 0.0
      %1012 = vmatprep.subr.mxu0 0.0
      %1013 = vmatpush1.msra.mxu0 0.0
      %1014 = vmatprep.subr.mxu0 0.0
      %1015 = vmatpush1.msra.mxu0 0.0
      %1016 = vmatprep.subr.mxu0 0.0
      %1017 = vmatpush1.msra.mxu0 0.0
      %1018 = vmatprep.subr.mxu0 0.0
      %1019 = vmatpush1.msra.mxu0 0.0
      %1020 = vmatprep.subr.mxu0 0.0
      %1021 = vmatpush1.msra.mxu0 0.0
      %1022 = vmatprep.subr.mxu0 0.0
      %1023 = vmatpush1.msra.mxu0 0.0
      %1024 = vmatprep.subr.mxu0 0.0
      %1025 = vmatpush1.msra.mxu0 0.0
      %1026 = vmatprep.subr.mxu0 0.0
      %1027 = vmatpush1.msra.mxu0 0.0
      %1028 = vmatprep.subr.mxu0 0.0
      %1029 = vmatpush1.msra.mxu0 0.0
      %1030 = vmatprep.subr.mxu0 0.0
      %1031 = vmatpush1.msra.mxu0 0.0
      %1032 = vmatprep.subr.mxu0 0.0
      %1033 = vmatpush1.msra.mxu0 0.0
      %1034 = vmatprep.subr.mxu0 0.0
      %1035 = vmatpush1.msra.mxu0 0.0
      %1036 = vmatprep.subr.mxu0 0.0
      %1037 = vmatpush1.msra.mxu0 0.0
      %1038 = vmatprep.subr.mxu0 0.0
      %1039 = vmatpush1.msra.mxu0 0.0
      %1040 = vmatprep.subr.mxu0 0.0
      %1041 = vmatpush1.msra.mxu0 0.0
      %1042 = vmatprep.subr.mxu0 0.0
      %1043 = vmatpush1.msra.mxu0 0.0
      %1044 = vmatprep.subr.mxu0 0.0
      %1045 = vmatpush1.msra.mxu0 0.0
      %1046 = vmatprep.subr.mxu0 0.0
      %1047 = vmatpush1.msra.mxu0 0.0
      %1048 = vmatprep.subr.mxu0 0.0
      %1049 = vmatpush1.msra.mxu0 0.0
      %1050 = vmatprep.subr.mxu0 0.0
      %1051 = vmatpush1.msra.mxu0 0.0
      %1052 = vmatprep.subr.mxu0 0.0
      %1053 = vmatpush1.msra.mxu0 0.0
      %1054 = vmatprep.subr.mxu0 0.0
      %1055 = vmatpush1.msra.mxu0 0.0
      %1056 = vmatprep.subr.mxu0 0.0
      %1057 = vmatpush1.msra.mxu0 0.0
      %1058 = vmatprep.subr.mxu0 0.0
      %1059 = vmatpush1.msra.mxu0 0.0
      %1060 = vmatprep.subr.mxu0 0.0
      %1061 = vmatpush1.msra.mxu0 0.0
      %1062 = vmatprep.subr.mxu0 0.0
      %1063 = vmatpush1.msra.mxu0 0.0
      %1064 = vmatprep.subr.mxu0 0.0
      %1065 = vmatpush1.msra.mxu0 0.0
      %1066 = vmatprep.mubr.f32.mxu0 0.0
      %1067 = vmatmul.mubr.f32.gmra.mrb[0].mxu0 %v935
      %v1068 = vpop.f32.mrb[0].mxu0
      %v1069 = vadd.f32 %v777, %v1068
      %v1070 = vpop.f32.mrb[0].mxu0
      %1071 = vmatprep.mubr.f32.mxu0 0.0
      %1072 = vmatmul.mubr.f32.gmra.mrb[0].mxu0 %v937
      %v1073 = vpop.f32.mrb[0].mxu0
      %v1074 = vadd.f32 %v782, %v1073
      %v1075 = vpop.f32.mrb[0].mxu0
      %1076 = vmatprep.mubr.f32.mxu0 0.0
      %1077 = vmatmul.mubr.f32.gmra.mrb[0].mxu0 %v939
      %v1078 = vpop.f32.mrb[0].mxu0
      %v1079 = vadd.f32 %v787, %v1078
      %v1080 = vpop.f32.mrb[0].mxu0
      %1081 = vmatprep.mubr.f32.mxu0 0.0
      %1082 = vmatmul.mubr.f32.gmra.mrb[0].mxu0 %v941
      %v1083 = vpop.f32.mrb[0].mxu0
      %v1084 = vadd.f32 %v792, %v1083
      %v1085 = vpop.f32.mrb[0].mxu0
      %1086 = vmatprep.mubr.f32.mxu0 0.0
      %1087 = vmatmul.mubr.f32.gmra.mrb[0].mxu0 %v943
      %v1088 = vpop.f32.mrb[0].mxu0
      %v1089 = vadd.f32 %v797, %v1088
      %v1090 = vpop.f32.mrb[0].mxu0
      %1091 = vmatprep.mubr.f32.mxu0 0.0
      %1092 = vmatmul.mubr.f32.gmra.mrb[0].mxu0 %v945
      %v1093 = vpop.f32.mrb[0].mxu0
      %v1094 = vadd.f32 %v802, %v1093
      %v1095 = vpop.f32.mrb[0].mxu0
      %1096 = vmatprep.mubr.f32.mxu0 0.0
      %1097 = vmatmul.mubr.f32.gmra.mrb[0].mxu0 %v947
      %v1098 = vpop.f32.mrb[0].mxu0
      %v1099 = vadd.f32 %v807, %v1098
      %v1100 = vpop.f32.mrb[0].mxu0
      %1101 = vmatprep.mubr.f32.mxu0 0.0
      %1102 = vmatmul.mubr.f32.gmra.mrb[0].mxu0 %v949
      %v1103 = vpop.f32.mrb[0].mxu0
      %v1104 = vadd.f32 %v812, %v1103
      %v1105 = vpop.f32.mrb[0].mxu0
      %1106 = vmatprep.mubr.f32.mxu0 0.0
      %1107 = vmatmul.mubr.f32.gmra.mrb[0].mxu0 %v951
      %v1108 = vpop.f32.mrb[0].mxu0
      %v1109 = vadd.f32 %v817, %v1108
      %v1110 = vpop.f32.mrb[0].mxu0
      %1111 = vmatprep.mubr.f32.mxu0 0.0
      %1112 = vmatmul.mubr.f32.gmra.mrb[0].mxu0 %v953
      %v1113 = vpop.f32.mrb[0].mxu0
      %v1114 = vadd.f32 %v822, %v1113
      %v1115 = vpop.f32.mrb[0].mxu0
      %1116 = vmatprep.mubr.f32.mxu0 0.0
      %1117 = vmatmul.mubr.f32.gmra.mrb[0].mxu0 %v955
      %v1118 = vpop.f32.mrb[0].mxu0
      %v1119 = vadd.f32 %v827, %v1118
      %v1120 = vpop.f32.mrb[0].mxu0
      %1121 = vmatprep.mubr.f32.mxu0 0.0
      %1122 = vmatmul.mubr.f32.gmra.mrb[0].mxu0 %v957
      %v1123 = vpop.f32.mrb[0].mxu0
      %v1124 = vadd.f32 %v832, %v1123
      %v1125 = vpop.f32.mrb[0].mxu0
      %1126 = vmatprep.mubr.f32.mxu0 0.0
      %1127 = vmatmul.mubr.f32.gmra.mrb[0].mxu0 %v959
      %v1128 = vpop.f32.mrb[0].mxu0
      %v1129 = vadd.f32 %v837, %v1128
      %v1130 = vpop.f32.mrb[0].mxu0
      %1131 = vmatprep.mubr.f32.mxu0 0.0
      %1132 = vmatmul.mubr.f32.gmra.mrb[0].mxu0 %v961
      %v1133 = vpop.f32.mrb[0].mxu0
      %v1134 = vadd.f32 %v842, %v1133
      %v1135 = vpop.f32.mrb[0].mxu0
      %1136 = vmatprep.mubr.f32.mxu0 0.0
      %1137 = vmatmul.mubr.f32.gmra.mrb[0].mxu0 %v963
      %v1138 = vpop.f32.mrb[0].mxu0
      %v1139 = vadd.f32 %v847, %v1138
      %v1140 = vpop.f32.mrb[0].mxu0
      %1141 = vmatprep.mubr.f32.mxu0 0.0
      %1142 = vmatmul.mubr.f32.gmra.mrb[0].mxu0 %v965
      %v1143 = vpop.f32.mrb[0].mxu0
      %v1144 = vadd.f32 %v852, %v1143
      %v1145 = vpop.f32.mrb[0].mxu0
      %1146 = vmatprep.mubr.f32.mxu0 0.0
      %1147 = vmatmul.mubr.f32.gmra.mrb[0].mxu0 %v967
      %v1148 = vpop.f32.mrb[0].mxu0
      %v1149 = vadd.f32 %v857, %v1148
      %v1150 = vpop.f32.mrb[0].mxu0
      %1151 = vmatprep.mubr.f32.mxu0 0.0
      %1152 = vmatmul.mubr.f32.gmra.mrb[0].mxu0 %v969
      %v1153 = vpop.f32.mrb[0].mxu0
      %v1154 = vadd.f32 %v862, %v1153
      %v1155 = vpop.f32.mrb[0].mxu0
      %1156 = vmatprep.mubr.f32.mxu0 0.0
      %1157 = vmatmul.mubr.f32.gmra.mrb[0].mxu0 %v971
      %v1158 = vpop.f32.mrb[0].mxu0
      %v1159 = vadd.f32 %v867, %v1158
      %v1160 = vpop.f32.mrb[0].mxu0
      %1161 = vmatprep.mubr.f32.mxu0 0.0
      %1162 = vmatmul.mubr.f32.gmra.mrb[0].mxu0 %v973
      %v1163 = vpop.f32.mrb[0].mxu0
      %v1164 = vadd.f32 %v872, %v1163
      %v1165 = vpop.f32.mrb[0].mxu0
      %1166 = vmatprep.mubr.f32.mxu0 0.0
      %1167 = vmatmul.mubr.f32.gmra.mrb[0].mxu0 %v975
      %v1168 = vpop.f32.mrb[0].mxu0
      %v1169 = vadd.f32 %v877, %v1168
      %v1170 = vpop.f32.mrb[0].mxu0
      %1171 = vmatprep.mubr.f32.mxu0 0.0
      %1172 = vmatmul.mubr.f32.gmra.mrb[0].mxu0 %v977
      %v1173 = vpop.f32.mrb[0].mxu0
      %v1174 = vadd.f32 %v882, %v1173
      %v1175 = vpop.f32.mrb[0].mxu0
      %1176 = vmatprep.mubr.f32.mxu0 0.0
      %1177 = vmatmul.mubr.f32.gmra.mrb[0].mxu0 %v979
      %v1178 = vpop.f32.mrb[0].mxu0
      %v1179 = vadd.f32 %v887, %v1178
      %v1180 = vpop.f32.mrb[0].mxu0
      %1181 = vmatprep.mubr.f32.mxu0 0.0
      %1182 = vmatmul.mubr.f32.gmra.mrb[0].mxu0 %v981
      %v1183 = vpop.f32.mrb[0].mxu0
      %v1184 = vadd.f32 %v892, %v1183
      %v1185 = vpop.f32.mrb[0].mxu0
      %1186 = vmatprep.mubr.f32.mxu0 0.0
      %1187 = vmatmul.mubr.f32.gmra.mrb[0].mxu0 %v983
      %v1188 = vpop.f32.mrb[0].mxu0
      %v1189 = vadd.f32 %v897, %v1188
      %v1190 = vpop.f32.mrb[0].mxu0
      %1191 = vmatprep.mubr.f32.mxu0 0.0
      %1192 = vmatmul.mubr.f32.gmra.mrb[0].mxu0 %v985
      %v1193 = vpop.f32.mrb[0].mxu0
      %v1194 = vadd.f32 %v902, %v1193
      %v1195 = vpop.f32.mrb[0].mxu0
      %1196 = vmatprep.mubr.f32.mxu0 0.0
      %1197 = vmatmul.mubr.f32.gmra.mrb[0].mxu0 %v987
      %v1198 = vpop.f32.mrb[0].mxu0
      %v1199 = vadd.f32 %v907, %v1198
      %v1200 = vpop.f32.mrb[0].mxu0
      %1201 = vmatprep.mubr.f32.mxu0 0.0
      %1202 = vmatmul.mubr.f32.gmra.mrb[0].mxu0 %v989
      %v1203 = vpop.f32.mrb[0].mxu0
      %v1204 = vadd.f32 %v912, %v1203
      %v1205 = vpop.f32.mrb[0].mxu0
      %1206 = vmatprep.mubr.f32.mxu0 0.0
      %1207 = vmatmul.mubr.f32.gmra.mrb[0].mxu0 %v991
      %v1208 = vpop.f32.mrb[0].mxu0
      %v1209 = vadd.f32 %v917, %v1208
      %v1210 = vpop.f32.mrb[0].mxu0
      %1211 = vmatprep.mubr.f32.mxu0 0.0
      %1212 = vmatmul.mubr.f32.gmra.mrb[0].mxu0 %v993
      %v1213 = vpop.f32.mrb[0].mxu0
      %v1214 = vadd.f32 %v922, %v1213
      %v1215 = vpop.f32.mrb[0].mxu0
      %1216 = vmatprep.mubr.f32.mxu0 0.0
      %1217 = vmatmul.mubr.f32.gmra.mrb[0].mxu0 %v995
      %v1218 = vpop.f32.mrb[0].mxu0
      %v1219 = vadd.f32 %v927, %v1218
      %v1220 = vpop.f32.mrb[0].mxu0
      %1221 = vmatprep.mubr.f32.mxu0 0.0
      %1222 = vmatmul.mubr.f32.gmra.mrb[0].mxu0 %v997
      %v1223 = vpop.f32.mrb[0].mxu0
      %v1224 = vadd.f32 %v932, %v1223
      %v1225 = vpop.f32.mrb[0].mxu0
      %1226 = vdwg.mxu0
      %s1227 = scalar_lea.vmem %s210, 8
      %v1228 = vld [vmem:[%s1227] sm:$0xf]
      %v1229 = vsel %vm641, %v395, 0
      %v1231 = vsel %vm641, %v396, 0
      %v1234 = vsel %vm706, %v1228, 0
      %1236 = vmatprep.subr.mxu0 0.0
      %1237 = vmatpush1.msra.mxu0 %v1234
      %1238 = vmatprep.subr.mxu0 0.0
      %1239 = vmatpush1.msra.mxu0 0.0
      %1240 = vmatprep.subr.mxu0 0.0
      %1241 = vmatpush1.msra.mxu0 0.0
      %1242 = vmatprep.subr.mxu0 0.0
      %1243 = vmatpush1.msra.mxu0 0.0
      %1244 = vmatprep.subr.mxu0 0.0
      %1245 = vmatpush1.msra.mxu0 0.0
      %1246 = vmatprep.subr.mxu0 0.0
      %1247 = vmatpush1.msra.mxu0 0.0
      %1248 = vmatprep.subr.mxu0 0.0
      %1249 = vmatpush1.msra.mxu0 0.0
      %1250 = vmatprep.subr.mxu0 0.0
      %1251 = vmatpush1.msra.mxu0 0.0
      %1252 = vmatprep.subr.mxu0 0.0
      %1253 = vmatpush1.msra.mxu0 0.0
      %1254 = vmatprep.subr.mxu0 0.0
      %1255 = vmatpush1.msra.mxu0 0.0
      %1256 = vmatprep.subr.mxu0 0.0
      %1257 = vmatpush1.msra.mxu0 0.0
      %1258 = vmatprep.subr.mxu0 0.0
      %1259 = vmatpush1.msra.mxu0 0.0
      %1260 = vmatprep.subr.mxu0 0.0
      %1261 = vmatpush1.msra.mxu0 0.0
      %1262 = vmatprep.subr.mxu0 0.0
      %1263 = vmatpush1.msra.mxu0 0.0
      %1264 = vmatprep.subr.mxu0 0.0
      %1265 = vmatpush1.msra.mxu0 0.0
      %1266 = vmatprep.subr.mxu0 0.0
      %1267 = vmatpush1.msra.mxu0 0.0
      %1268 = vmatprep.subr.mxu0 0.0
      %1269 = vmatpush1.msra.mxu0 0.0
      %1270 = vmatprep.subr.mxu0 0.0
      %1271 = vmatpush1.msra.mxu0 0.0
      %1272 = vmatprep.subr.mxu0 0.0
      %1273 = vmatpush1.msra.mxu0 0.0
      %1274 = vmatprep.subr.mxu0 0.0
      %1275 = vmatpush1.msra.mxu0 0.0
      %1276 = vmatprep.subr.mxu0 0.0
      %1277 = vmatpush1.msra.mxu0 0.0
      %1278 = vmatprep.subr.mxu0 0.0
      %1279 = vmatpush1.msra.mxu0 0.0
      %1280 = vmatprep.subr.mxu0 0.0
      %1281 = vmatpush1.msra.mxu0 0.0
      %1282 = vmatprep.subr.mxu0 0.0
      %1283 = vmatpush1.msra.mxu0 0.0
      %1284 = vmatprep.subr.mxu0 0.0
      %1285 = vmatpush1.msra.mxu0 0.0
      %1286 = vmatprep.subr.mxu0 0.0
      %1287 = vmatpush1.msra.mxu0 0.0
      %1288 = vmatprep.subr.mxu0 0.0
      %1289 = vmatpush1.msra.mxu0 0.0
      %1290 = vmatprep.subr.mxu0 0.0
      %1291 = vmatpush1.msra.mxu0 0.0
      %1292 = vmatprep.subr.mxu0 0.0
      %1293 = vmatpush1.msra.mxu0 0.0
      %1294 = vmatprep.subr.mxu0 0.0
      %1295 = vmatpush1.msra.mxu0 0.0
      %1296 = vmatprep.subr.mxu0 0.0
      %1297 = vmatpush1.msra.mxu0 0.0
      %1298 = vmatprep.subr.mxu0 0.0
      %1299 = vmatpush1.msra.mxu0 0.0
      %1300 = vmatprep.mubr.f32.mxu0 0.0
      %1301 = vmatmul.mubr.f32.gmra.mrb[0].mxu0 %v939
      %v1302 = vpop.f32.mrb[0].mxu0
      %v1303 = vadd.f32 0.0, %v1302
      %v1304 = vpop.f32.mrb[0].mxu0
      %1305 = vmatprep.mubr.f32.mxu0 0.0
      %1306 = vmatmul.mubr.f32.gmra.mrb[0].mxu0 %v941
      %v1307 = vpop.f32.mrb[0].mxu0
      %v1308 = vadd.f32 0.0, %v1307
      %v1309 = vpop.f32.mrb[0].mxu0
      %1310 = vmatprep.mubr.f32.mxu0 0.0
      %1311 = vmatmul.mubr.f32.gmra.mrb[0].mxu0 %v943
      %v1312 = vpop.f32.mrb[0].mxu0
      %v1313 = vadd.f32 0.0, %v1312
      %v1314 = vpop.f32.mrb[0].mxu0
      %1315 = vmatprep.mubr.f32.mxu0 0.0
      %1316 = vmatmul.mubr.f32.gmra.mrb[0].mxu0 %v945
      %v1317 = vpop.f32.mrb[0].mxu0
      %v1318 = vadd.f32 0.0, %v1317
      %v1319 = vpop.f32.mrb[0].mxu0
      %1320 = vmatprep.mubr.f32.mxu0 0.0
      %1321 = vmatmul.mubr.f32.gmra.mrb[0].mxu0 %v947
      %v1322 = vpop.f32.mrb[0].mxu0
      %v1323 = vadd.f32 0.0, %v1322
      %v1324 = vpop.f32.mrb[0].mxu0
      %1325 = vmatprep.mubr.f32.mxu0 0.0
      %1326 = vmatmul.mubr.f32.gmra.mrb[0].mxu0 %v949
      %v1327 = vpop.f32.mrb[0].mxu0
      %v1328 = vadd.f32 0.0, %v1327
      %v1329 = vpop.f32.mrb[0].mxu0
      %1330 = vmatprep.mubr.f32.mxu0 0.0
      %1331 = vmatmul.mubr.f32.gmra.mrb[0].mxu0 %v951
      %v1332 = vpop.f32.mrb[0].mxu0
      %v1333 = vadd.f32 0.0, %v1332
      %v1334 = vpop.f32.mrb[0].mxu0
      %1335 = vmatprep.mubr.f32.mxu0 0.0
      %1336 = vmatmul.mubr.f32.gmra.mrb[0].mxu0 %v953
      %v1337 = vpop.f32.mrb[0].mxu0
      %v1338 = vadd.f32 0.0, %v1337
      %v1339 = vpop.f32.mrb[0].mxu0
      %1340 = vmatprep.mubr.f32.mxu0 0.0
      %1341 = vmatmul.mubr.f32.gmra.mrb[0].mxu0 %v955
      %v1342 = vpop.f32.mrb[0].mxu0
      %v1343 = vadd.f32 0.0, %v1342
      %v1344 = vpop.f32.mrb[0].mxu0
      %1345 = vmatprep.mubr.f32.mxu0 0.0
      %1346 = vmatmul.mubr.f32.gmra.mrb[0].mxu0 %v957
      %v1347 = vpop.f32.mrb[0].mxu0
      %v1348 = vadd.f32 0.0, %v1347
      %v1349 = vpop.f32.mrb[0].mxu0
      %1350 = vmatprep.mubr.f32.mxu0 0.0
      %1351 = vmatmul.mubr.f32.gmra.mrb[0].mxu0 %v959
      %v1352 = vpop.f32.mrb[0].mxu0
      %v1353 = vadd.f32 0.0, %v1352
      %v1354 = vpop.f32.mrb[0].mxu0
      %1355 = vmatprep.mubr.f32.mxu0 0.0
      %1356 = vmatmul.mubr.f32.gmra.mrb[0].mxu0 %v961
      %v1357 = vpop.f32.mrb[0].mxu0
      %v1358 = vadd.f32 0.0, %v1357
      %v1359 = vpop.f32.mrb[0].mxu0
      %1360 = vmatprep.mubr.f32.mxu0 0.0
      %1361 = vmatmul.mubr.f32.gmra.mrb[0].mxu0 %v963
      %v1362 = vpop.f32.mrb[0].mxu0
      %v1363 = vadd.f32 0.0, %v1362
      %v1364 = vpop.f32.mrb[0].mxu0
      %1365 = vmatprep.mubr.f32.mxu0 0.0
      %1366 = vmatmul.mubr.f32.gmra.mrb[0].mxu0 %v965
      %v1367 = vpop.f32.mrb[0].mxu0
      %v1368 = vadd.f32 0.0, %v1367
      %v1369 = vpop.f32.mrb[0].mxu0
      %1370 = vmatprep.mubr.f32.mxu0 0.0
      %1371 = vmatmul.mubr.f32.gmra.mrb[0].mxu0 %v967
      %v1372 = vpop.f32.mrb[0].mxu0
      %v1373 = vadd.f32 0.0, %v1372
      %v1374 = vpop.f32.mrb[0].mxu0
      %1375 = vmatprep.mubr.f32.mxu0 0.0
      %1376 = vmatmul.mubr.f32.gmra.mrb[0].mxu0 %v969
      %v1377 = vpop.f32.mrb[0].mxu0
      %v1378 = vadd.f32 0.0, %v1377
      %v1379 = vpop.f32.mrb[0].mxu0
      %1380 = vmatprep.mubr.f32.mxu0 0.0
      %1381 = vmatmul.mubr.f32.gmra.mrb[0].mxu0 %v971
      %v1382 = vpop.f32.mrb[0].mxu0
      %v1383 = vadd.f32 0.0, %v1382
      %v1384 = vpop.f32.mrb[0].mxu0
      %1385 = vmatprep.mubr.f32.mxu0 0.0
      %1386 = vmatmul.mubr.f32.gmra.mrb[0].mxu0 %v973
      %v1387 = vpop.f32.mrb[0].mxu0
      %v1388 = vadd.f32 0.0, %v1387
      %v1389 = vpop.f32.mrb[0].mxu0
      %1390 = vmatprep.mubr.f32.mxu0 0.0
      %1391 = vmatmul.mubr.f32.gmra.mrb[0].mxu0 %v975
      %v1392 = vpop.f32.mrb[0].mxu0
      %v1393 = vadd.f32 0.0, %v1392
      %v1394 = vpop.f32.mrb[0].mxu0
      %1395 = vmatprep.mubr.f32.mxu0 0.0
      %1396 = vmatmul.mubr.f32.gmra.mrb[0].mxu0 %v977
      %v1397 = vpop.f32.mrb[0].mxu0
      %v1398 = vadd.f32 0.0, %v1397
      %v1399 = vpop.f32.mrb[0].mxu0
      %1400 = vmatprep.mubr.f32.mxu0 0.0
      %1401 = vmatmul.mubr.f32.gmra.mrb[0].mxu0 %v979
      %v1402 = vpop.f32.mrb[0].mxu0
      %v1403 = vadd.f32 0.0, %v1402
      %v1404 = vpop.f32.mrb[0].mxu0
      %1405 = vmatprep.mubr.f32.mxu0 0.0
      %1406 = vmatmul.mubr.f32.gmra.mrb[0].mxu0 %v981
      %v1407 = vpop.f32.mrb[0].mxu0
      %v1408 = vadd.f32 0.0, %v1407
      %v1409 = vpop.f32.mrb[0].mxu0
      %1410 = vmatprep.mubr.f32.mxu0 0.0
      %1411 = vmatmul.mubr.f32.gmra.mrb[0].mxu0 %v983
      %v1412 = vpop.f32.mrb[0].mxu0
      %v1413 = vadd.f32 0.0, %v1412
      %v1414 = vpop.f32.mrb[0].mxu0
      %1415 = vmatprep.mubr.f32.mxu0 0.0
      %1416 = vmatmul.mubr.f32.gmra.mrb[0].mxu0 %v985
      %v1417 = vpop.f32.mrb[0].mxu0
      %v1418 = vadd.f32 0.0, %v1417
      %v1419 = vpop.f32.mrb[0].mxu0
      %1420 = vmatprep.mubr.f32.mxu0 0.0
      %1421 = vmatmul.mubr.f32.gmra.mrb[0].mxu0 %v987
      %v1422 = vpop.f32.mrb[0].mxu0
      %v1423 = vadd.f32 0.0, %v1422
      %v1424 = vpop.f32.mrb[0].mxu0
      %1425 = vmatprep.mubr.f32.mxu0 0.0
      %1426 = vmatmul.mubr.f32.gmra.mrb[0].mxu0 %v989
      %v1427 = vpop.f32.mrb[0].mxu0
      %v1428 = vadd.f32 0.0, %v1427
      %v1429 = vpop.f32.mrb[0].mxu0
      %1430 = vmatprep.mubr.f32.mxu0 0.0
      %1431 = vmatmul.mubr.f32.gmra.mrb[0].mxu0 %v991
      %v1432 = vpop.f32.mrb[0].mxu0
      %v1433 = vadd.f32 0.0, %v1432
      %v1434 = vpop.f32.mrb[0].mxu0
      %1435 = vmatprep.mubr.f32.mxu0 0.0
      %1436 = vmatmul.mubr.f32.gmra.mrb[0].mxu0 %v993
      %v1437 = vpop.f32.mrb[0].mxu0
      %v1438 = vadd.f32 0.0, %v1437
      %v1439 = vpop.f32.mrb[0].mxu0
      %1440 = vmatprep.mubr.f32.mxu0 0.0
      %1441 = vmatmul.mubr.f32.gmra.mrb[0].mxu0 %v995
      %v1442 = vpop.f32.mrb[0].mxu0
      %v1443 = vadd.f32 0.0, %v1442
      %v1444 = vpop.f32.mrb[0].mxu0
      %1445 = vmatprep.mubr.f32.mxu0 0.0
      %1446 = vmatmul.mubr.f32.gmra.mrb[0].mxu0 %v997
      %v1447 = vpop.f32.mrb[0].mxu0
      %v1448 = vadd.f32 0.0, %v1447
      %v1449 = vpop.f32.mrb[0].mxu0
      %1450 = vmatprep.mubr.f32.mxu0 0.0
      %1451 = vmatmul.mubr.f32.gmra.mrb[0].mxu0 %v1229
      %v1452 = vpop.f32.mrb[0].mxu0
      %v1453 = vadd.f32 0.0, %v1452
      %v1454 = vpop.f32.mrb[0].mxu0
      %1455 = vmatprep.mubr.f32.mxu0 0.0
      %1456 = vmatmul.mubr.f32.gmra.mrb[0].mxu0 %v1231
      %v1457 = vpop.f32.mrb[0].mxu0
      %v1458 = vadd.f32 0.0, %v1457
      %v1459 = vpop.f32.mrb[0].mxu0
      %1460 = vdwg.mxu0
      %v1461 = vadd.f32 %v1069, %v1303
      %v1462 = vadd.f32 %v1074, %v1308
      %v1463 = vadd.f32 %v1079, %v1313
      %v1464 = vadd.f32 %v1084, %v1318
      %v1465 = vadd.f32 %v1089, %v1323
      %v1466 = vadd.f32 %v1094, %v1328
      %v1467 = vadd.f32 %v1099, %v1333
      %v1468 = vadd.f32 %v1104, %v1338
      %v1469 = vadd.f32 %v1109, %v1343
      %v1470 = vadd.f32 %v1114, %v1348
      %v1471 = vadd.f32 %v1119, %v1353
      %v1472 = vadd.f32 %v1124, %v1358
      %v1473 = vadd.f32 %v1129, %v1363
      %v1474 = vadd.f32 %v1134, %v1368
      %v1475 = vadd.f32 %v1139, %v1373
      %v1476 = vadd.f32 %v1144, %v1378
      %v1477 = vadd.f32 %v1149, %v1383
      %v1478 = vadd.f32 %v1154, %v1388
      %v1479 = vadd.f32 %v1159, %v1393
      %v1480 = vadd.f32 %v1164, %v1398
      %v1481 = vadd.f32 %v1169, %v1403
      %v1482 = vadd.f32 %v1174, %v1408
      %v1483 = vadd.f32 %v1179, %v1413
      %v1484 = vadd.f32 %v1184, %v1418
      %v1485 = vadd.f32 %v1189, %v1423
      %v1486 = vadd.f32 %v1194, %v1428
      %v1487 = vadd.f32 %v1199, %v1433
      %v1488 = vadd.f32 %v1204, %v1438
      %v1489 = vadd.f32 %v1209, %v1443
      %v1490 = vadd.f32 %v1214, %v1448
      %v1491 = vadd.f32 %v1219, %v1453
      %v1492 = vadd.f32 %v1224, %v1458
      %s1493 = scalar_lea.vmem %s210, 12
      %v1494 = vld [vmem:[%s1493] sm:$0xf]
      %v1495 = vsel %vm641, %v616, 0
      %v1497 = vsel %vm641, %v618, 0
      %v1500 = vsel %vm706, %v1494, 0
      %1502 = vmatprep.subr.mxu0 0.0
      %1503 = vmatpush1.msra.mxu0 %v1500
      %1504 = vmatprep.subr.mxu0 0.0
      %1505 = vmatpush1.msra.mxu0 0.0
      %1506 = vmatprep.subr.mxu0 0.0
      %1507 = vmatpush1.msra.mxu0 0.0
      %1508 = vmatprep.subr.mxu0 0.0
      %1509 = vmatpush1.msra.mxu0 0.0
      %1510 = vmatprep.subr.mxu0 0.0
      %1511 = vmatpush1.msra.mxu0 0.0
      %1512 = vmatprep.subr.mxu0 0.0
      %1513 = vmatpush1.msra.mxu0 0.0
      %1514 = vmatprep.subr.mxu0 0.0
      %1515 = vmatpush1.msra.mxu0 0.0
      %1516 = vmatprep.subr.mxu0 0.0
      %1517 = vmatpush1.msra.mxu0 0.0
      %1518 = vmatprep.subr.mxu0 0.0
      %1519 = vmatpush1.msra.mxu0 0.0
      %1520 = vmatprep.subr.mxu0 0.0
      %1521 = vmatpush1.msra.mxu0 0.0
      %1522 = vmatprep.subr.mxu0 0.0
      %1523 = vmatpush1.msra.mxu0 0.0
      %1524 = vmatprep.subr.mxu0 0.0
      %1525 = vmatpush1.msra.mxu0 0.0
      %1526 = vmatprep.subr.mxu0 0.0
      %1527 = vmatpush1.msra.mxu0 0.0
      %1528 = vmatprep.subr.mxu0 0.0
      %1529 = vmatpush1.msra.mxu0 0.0
      %1530 = vmatprep.subr.mxu0 0.0
      %1531 = vmatpush1.msra.mxu0 0.0
      %1532 = vmatprep.subr.mxu0 0.0
      %1533 = vmatpush1.msra.mxu0 0.0
      %1534 = vmatprep.subr.mxu0 0.0
      %1535 = vmatpush1.msra.mxu0 0.0
      %1536 = vmatprep.subr.mxu0 0.0
      %1537 = vmatpush1.msra.mxu0 0.0
      %1538 = vmatprep.subr.mxu0 0.0
      %1539 = vmatpush1.msra.mxu0 0.0
      %1540 = vmatprep.subr.mxu0 0.0
      %1541 = vmatpush1.msra.mxu0 0.0
      %1542 = vmatprep.subr.mxu0 0.0
      %1543 = vmatpush1.msra.mxu0 0.0
      %1544 = vmatprep.subr.mxu0 0.0
      %1545 = vmatpush1.msra.mxu0 0.0
      %1546 = vmatprep.subr.mxu0 0.0
      %1547 = vmatpush1.msra.mxu0 0.0
      %1548 = vmatprep.subr.mxu0 0.0
      %1549 = vmatpush1.msra.mxu0 0.0
      %1550 = vmatprep.subr.mxu0 0.0
      %1551 = vmatpush1.msra.mxu0 0.0
      %1552 = vmatprep.subr.mxu0 0.0
      %1553 = vmatpush1.msra.mxu0 0.0
      %1554 = vmatprep.subr.mxu0 0.0
      %1555 = vmatpush1.msra.mxu0 0.0
      %1556 = vmatprep.subr.mxu0 0.0
      %1557 = vmatpush1.msra.mxu0 0.0
      %1558 = vmatprep.subr.mxu0 0.0
      %1559 = vmatpush1.msra.mxu0 0.0
      %1560 = vmatprep.subr.mxu0 0.0
      %1561 = vmatpush1.msra.mxu0 0.0
      %1562 = vmatprep.subr.mxu0 0.0
      %1563 = vmatpush1.msra.mxu0 0.0
      %1564 = vmatprep.subr.mxu0 0.0
      %1565 = vmatpush1.msra.mxu0 0.0
      %1566 = vmatprep.mubr.f32.mxu0 0.0
      %1567 = vmatmul.mubr.f32.gmra.mrb[0].mxu0 %v646
      %v1568 = vpop.f32.mrb[0].mxu0
      %v1569 = vadd.f32 0.0, %v1568
      %v1570 = vpop.f32.mrb[0].mxu0
      %1571 = vmatprep.mubr.f32.mxu0 0.0
      %1572 = vmatmul.mubr.f32.gmra.mrb[0].mxu0 %v648
      %v1573 = vpop.f32.mrb[0].mxu0
      %v1574 = vadd.f32 0.0, %v1573
      %v1575 = vpop.f32.mrb[0].mxu0
      %1576 = vmatprep.mubr.f32.mxu0 0.0
      %1577 = vmatmul.mubr.f32.gmra.mrb[0].mxu0 %v650
      %v1578 = vpop.f32.mrb[0].mxu0
      %v1579 = vadd.f32 0.0, %v1578
      %v1580 = vpop.f32.mrb[0].mxu0
      %1581 = vmatprep.mubr.f32.mxu0 0.0
      %1582 = vmatmul.mubr.f32.gmra.mrb[0].mxu0 %v652
      %v1583 = vpop.f32.mrb[0].mxu0
      %v1584 = vadd.f32 0.0, %v1583
      %v1585 = vpop.f32.mrb[0].mxu0
      %1586 = vmatprep.mubr.f32.mxu0 0.0
      %1587 = vmatmul.mubr.f32.gmra.mrb[0].mxu0 %v654
      %v1588 = vpop.f32.mrb[0].mxu0
      %v1589 = vadd.f32 0.0, %v1588
      %v1590 = vpop.f32.mrb[0].mxu0
      %1591 = vmatprep.mubr.f32.mxu0 0.0
      %1592 = vmatmul.mubr.f32.gmra.mrb[0].mxu0 %v656
      %v1593 = vpop.f32.mrb[0].mxu0
      %v1594 = vadd.f32 0.0, %v1593
      %v1595 = vpop.f32.mrb[0].mxu0
      %1596 = vmatprep.mubr.f32.mxu0 0.0
      %1597 = vmatmul.mubr.f32.gmra.mrb[0].mxu0 %v658
      %v1598 = vpop.f32.mrb[0].mxu0
      %v1599 = vadd.f32 0.0, %v1598
      %v1600 = vpop.f32.mrb[0].mxu0
      %1601 = vmatprep.mubr.f32.mxu0 0.0
      %1602 = vmatmul.mubr.f32.gmra.mrb[0].mxu0 %v660
      %v1603 = vpop.f32.mrb[0].mxu0
      %v1604 = vadd.f32 0.0, %v1603
      %v1605 = vpop.f32.mrb[0].mxu0
      %1606 = vmatprep.mubr.f32.mxu0 0.0
      %1607 = vmatmul.mubr.f32.gmra.mrb[0].mxu0 %v662
      %v1608 = vpop.f32.mrb[0].mxu0
      %v1609 = vadd.f32 0.0, %v1608
      %v1610 = vpop.f32.mrb[0].mxu0
      %1611 = vmatprep.mubr.f32.mxu0 0.0
      %1612 = vmatmul.mubr.f32.gmra.mrb[0].mxu0 %v664
      %v1613 = vpop.f32.mrb[0].mxu0
      %v1614 = vadd.f32 0.0, %v1613
      %v1615 = vpop.f32.mrb[0].mxu0
      %1616 = vmatprep.mubr.f32.mxu0 0.0
      %1617 = vmatmul.mubr.f32.gmra.mrb[0].mxu0 %v666
      %v1618 = vpop.f32.mrb[0].mxu0
      %v1619 = vadd.f32 0.0, %v1618
      %v1620 = vpop.f32.mrb[0].mxu0
      %1621 = vmatprep.mubr.f32.mxu0 0.0
      %1622 = vmatmul.mubr.f32.gmra.mrb[0].mxu0 %v668
      %v1623 = vpop.f32.mrb[0].mxu0
      %v1624 = vadd.f32 0.0, %v1623
      %v1625 = vpop.f32.mrb[0].mxu0
      %1626 = vmatprep.mubr.f32.mxu0 0.0
      %1627 = vmatmul.mubr.f32.gmra.mrb[0].mxu0 %v670
      %v1628 = vpop.f32.mrb[0].mxu0
      %v1629 = vadd.f32 0.0, %v1628
      %v1630 = vpop.f32.mrb[0].mxu0
      %1631 = vmatprep.mubr.f32.mxu0 0.0
      %1632 = vmatmul.mubr.f32.gmra.mrb[0].mxu0 %v672
      %v1633 = vpop.f32.mrb[0].mxu0
      %v1634 = vadd.f32 0.0, %v1633
      %v1635 = vpop.f32.mrb[0].mxu0
      %1636 = vmatprep.mubr.f32.mxu0 0.0
      %1637 = vmatmul.mubr.f32.gmra.mrb[0].mxu0 %v674
      %v1638 = vpop.f32.mrb[0].mxu0
      %v1639 = vadd.f32 0.0, %v1638
      %v1640 = vpop.f32.mrb[0].mxu0
      %1641 = vmatprep.mubr.f32.mxu0 0.0
      %1642 = vmatmul.mubr.f32.gmra.mrb[0].mxu0 %v676
      %v1643 = vpop.f32.mrb[0].mxu0
      %v1644 = vadd.f32 0.0, %v1643
      %v1645 = vpop.f32.mrb[0].mxu0
      %1646 = vmatprep.mubr.f32.mxu0 0.0
      %1647 = vmatmul.mubr.f32.gmra.mrb[0].mxu0 %v678
      %v1648 = vpop.f32.mrb[0].mxu0
      %v1649 = vadd.f32 0.0, %v1648
      %v1650 = vpop.f32.mrb[0].mxu0
      %1651 = vmatprep.mubr.f32.mxu0 0.0
      %1652 = vmatmul.mubr.f32.gmra.mrb[0].mxu0 %v680
      %v1653 = vpop.f32.mrb[0].mxu0
      %v1654 = vadd.f32 0.0, %v1653
      %v1655 = vpop.f32.mrb[0].mxu0
      %1656 = vmatprep.mubr.f32.mxu0 0.0
      %1657 = vmatmul.mubr.f32.gmra.mrb[0].mxu0 %v682
      %v1658 = vpop.f32.mrb[0].mxu0
      %v1659 = vadd.f32 0.0, %v1658
      %v1660 = vpop.f32.mrb[0].mxu0
      %1661 = vmatprep.mubr.f32.mxu0 0.0
      %1662 = vmatmul.mubr.f32.gmra.mrb[0].mxu0 %v684
      %v1663 = vpop.f32.mrb[0].mxu0
      %v1664 = vadd.f32 0.0, %v1663
      %v1665 = vpop.f32.mrb[0].mxu0
      %1666 = vmatprep.mubr.f32.mxu0 0.0
      %1667 = vmatmul.mubr.f32.gmra.mrb[0].mxu0 %v686
      %v1668 = vpop.f32.mrb[0].mxu0
      %v1669 = vadd.f32 0.0, %v1668
      %v1670 = vpop.f32.mrb[0].mxu0
      %1671 = vmatprep.mubr.f32.mxu0 0.0
      %1672 = vmatmul.mubr.f32.gmra.mrb[0].mxu0 %v688
      %v1673 = vpop.f32.mrb[0].mxu0
      %v1674 = vadd.f32 0.0, %v1673
      %v1675 = vpop.f32.mrb[0].mxu0
      %1676 = vmatprep.mubr.f32.mxu0 0.0
      %1677 = vmatmul.mubr.f32.gmra.mrb[0].mxu0 %v690
      %v1678 = vpop.f32.mrb[0].mxu0
      %v1679 = vadd.f32 0.0, %v1678
      %v1680 = vpop.f32.mrb[0].mxu0
      %1681 = vmatprep.mubr.f32.mxu0 0.0
      %1682 = vmatmul.mubr.f32.gmra.mrb[0].mxu0 %v692
      %v1683 = vpop.f32.mrb[0].mxu0
      %v1684 = vadd.f32 0.0, %v1683
      %v1685 = vpop.f32.mrb[0].mxu0
      %1686 = vmatprep.mubr.f32.mxu0 0.0
      %1687 = vmatmul.mubr.f32.gmra.mrb[0].mxu0 %v694
      %v1688 = vpop.f32.mrb[0].mxu0
      %v1689 = vadd.f32 0.0, %v1688
      %v1690 = vpop.f32.mrb[0].mxu0
      %1691 = vmatprep.mubr.f32.mxu0 0.0
      %1692 = vmatmul.mubr.f32.gmra.mrb[0].mxu0 %v696
      %v1693 = vpop.f32.mrb[0].mxu0
      %v1694 = vadd.f32 0.0, %v1693
      %v1695 = vpop.f32.mrb[0].mxu0
      %1696 = vmatprep.mubr.f32.mxu0 0.0
      %1697 = vmatmul.mubr.f32.gmra.mrb[0].mxu0 %v698
      %v1698 = vpop.f32.mrb[0].mxu0
      %v1699 = vadd.f32 0.0, %v1698
      %v1700 = vpop.f32.mrb[0].mxu0
      %1701 = vmatprep.mubr.f32.mxu0 0.0
      %1702 = vmatmul.mubr.f32.gmra.mrb[0].mxu0 %v700
      %v1703 = vpop.f32.mrb[0].mxu0
      %v1704 = vadd.f32 0.0, %v1703
      %v1705 = vpop.f32.mrb[0].mxu0
      %1706 = vmatprep.mubr.f32.mxu0 0.0
      %1707 = vmatmul.mubr.f32.gmra.mrb[0].mxu0 %v702
      %v1708 = vpop.f32.mrb[0].mxu0
      %v1709 = vadd.f32 0.0, %v1708
      %v1710 = vpop.f32.mrb[0].mxu0
      %1711 = vmatprep.mubr.f32.mxu0 0.0
      %1712 = vmatmul.mubr.f32.gmra.mrb[0].mxu0 %v704
      %v1713 = vpop.f32.mrb[0].mxu0
      %v1714 = vadd.f32 0.0, %v1713
      %v1715 = vpop.f32.mrb[0].mxu0
      %1716 = vmatprep.mubr.f32.mxu0 0.0
      %1717 = vmatmul.mubr.f32.gmra.mrb[0].mxu0 %v1495
      %v1718 = vpop.f32.mrb[0].mxu0
      %v1719 = vadd.f32 0.0, %v1718
      %v1720 = vpop.f32.mrb[0].mxu0
      %1721 = vmatprep.mubr.f32.mxu0 0.0
      %1722 = vmatmul.mubr.f32.gmra.mrb[0].mxu0 %v1497
      %v1723 = vpop.f32.mrb[0].mxu0
      %v1724 = vadd.f32 0.0, %v1723
      %v1725 = vpop.f32.mrb[0].mxu0
      %1726 = vdwg.mxu0
      %v1727 = vadd.f32 %v1461, %v1569
      %v1728 = vadd.f32 %v1462, %v1574
      %v1729 = vadd.f32 %v1463, %v1579
      %v1730 = vadd.f32 %v1464, %v1584
      %v1731 = vadd.f32 %v1465, %v1589
      %v1732 = vadd.f32 %v1466, %v1594
      %v1733 = vadd.f32 %v1467, %v1599
      %v1734 = vadd.f32 %v1468, %v1604
      %v1735 = vadd.f32 %v1469, %v1609
      %v1736 = vadd.f32 %v1470, %v1614
      %v1737 = vadd.f32 %v1471, %v1619
      %v1738 = vadd.f32 %v1472, %v1624
      %v1739 = vadd.f32 %v1473, %v1629
      %v1740 = vadd.f32 %v1474, %v1634
      %v1741 = vadd.f32 %v1475, %v1639
      %v1742 = vadd.f32 %v1476, %v1644
      %v1743 = vadd.f32 %v1477, %v1649
      %v1744 = vadd.f32 %v1478, %v1654
      %v1745 = vadd.f32 %v1479, %v1659
      %v1746 = vadd.f32 %v1480, %v1664
      %v1747 = vadd.f32 %v1481, %v1669
      %v1748 = vadd.f32 %v1482, %v1674
      %v1749 = vadd.f32 %v1483, %v1679
      %v1750 = vadd.f32 %v1484, %v1684
      %v1751 = vadd.f32 %v1485, %v1689
      %v1752 = vadd.f32 %v1486, %v1694
      %v1753 = vadd.f32 %v1487, %v1699
      %v1754 = vadd.f32 %v1488, %v1704
      %v1755 = vadd.f32 %v1489, %v1709
      %v1756 = vadd.f32 %v1490, %v1714
      %v1757 = vadd.f32 %v1491, %v1719
      %v1758 = vadd.f32 %v1492, %v1724
      %v1760 = vlaneseq
      %v1761 = vshrl.u32 %v1760, 7
      %v1762 = vsub.s32 0, %v1761
      %v1763 = vrot.slane %v637, %v1762
      %v1765 = vadd.f32 %v1727, %v1763
      %v1766 = vadd.f32 %v1728, %v1763
      %v1767 = vadd.f32 %v1729, %v1763
      %v1768 = vadd.f32 %v1730, %v1763
      %v1769 = vadd.f32 %v1731, %v1763
      %v1770 = vadd.f32 %v1732, %v1763
      %v1771 = vadd.f32 %v1733, %v1763
      %v1772 = vadd.f32 %v1734, %v1763
      %v1773 = vadd.f32 %v1735, %v1763
      %v1774 = vadd.f32 %v1736, %v1763
      %v1775 = vadd.f32 %v1737, %v1763
      %v1776 = vadd.f32 %v1738, %v1763
      %v1777 = vadd.f32 %v1739, %v1763
      %v1778 = vadd.f32 %v1740, %v1763
      %v1779 = vadd.f32 %v1741, %v1763
      %v1780 = vadd.f32 %v1742, %v1763
      %v1781 = vadd.f32 %v1743, %v1763
      %v1782 = vadd.f32 %v1744, %v1763
      %v1783 = vadd.f32 %v1745, %v1763
      %v1784 = vadd.f32 %v1746, %v1763
      %v1785 = vadd.f32 %v1747, %v1763
      %v1786 = vadd.f32 %v1748, %v1763
      %v1787 = vadd.f32 %v1749, %v1763
      %v1788 = vadd.f32 %v1750, %v1763
      %v1789 = vadd.f32 %v1751, %v1763
      %v1790 = vadd.f32 %v1752, %v1763
      %v1791 = vadd.f32 %v1753, %v1763
      %v1792 = vadd.f32 %v1754, %v1763
      %v1793 = vadd.f32 %v1755, %v1763
      %v1794 = vadd.f32 %v1756, %v1763
      %v1795 = vadd.f32 %v1757, %v1763
      %v1796 = vadd.f32 %v1758, %v1763
      %1797 = vst.msk [vmem:[%s221] sm:$0xff] %vm641, %v1765
      %1798 = vst.msk [vmem:[%s221 + $0x8] sm:$0xff] %vm641, %v1766
      %1799 = vst.msk [vmem:[%s221 + $0x10] sm:$0xff] %vm641, %v1767
      %1800 = vst.msk [vmem:[%s221 + $0x18] sm:$0xff] %vm641, %v1768
      %1801 = vst.msk [vmem:[%s221 + $0x20] sm:$0xff] %vm641, %v1769
      %1802 = vst.msk [vmem:[%s221 + $0x28] sm:$0xff] %vm641, %v1770
      %1803 = vst.msk [vmem:[%s221 + $0x30] sm:$0xff] %vm641, %v1771
      %1804 = vst.msk [vmem:[%s221 + $0x38] sm:$0xff] %vm641, %v1772
      %1805 = vst.msk [vmem:[%s221 + $0x40] sm:$0xff] %vm641, %v1773
      %1806 = vst.msk [vmem:[%s221 + $0x48] sm:$0xff] %vm641, %v1774
      %1807 = vst.msk [vmem:[%s221 + $0x50] sm:$0xff] %vm641, %v1775
      %1808 = vst.msk [vmem:[%s221 + $0x58] sm:$0xff] %vm641, %v1776
      %1809 = vst.msk [vmem:[%s221 + $0x60] sm:$0xff] %vm641, %v1777
      %1810 = vst.msk [vmem:[%s221 + $0x68] sm:$0xff] %vm641, %v1778
      %1811 = vst.msk [vmem:[%s221 + $0x70] sm:$0xff] %vm641, %v1779
      %1812 = vst.msk [vmem:[%s221 + $0x78] sm:$0xff] %vm641, %v1780
      %1813 = vst.msk [vmem:[%s221 + $0x80] sm:$0xff] %vm641, %v1781
      %1814 = vst.msk [vmem:[%s221 + $0x88] sm:$0xff] %vm641, %v1782
      %1815 = vst.msk [vmem:[%s221 + $0x90] sm:$0xff] %vm641, %v1783
      %1816 = vst.msk [vmem:[%s221 + $0x98] sm:$0xff] %vm641, %v1784
      %1817 = vst.msk [vmem:[%s221 + $0xa0] sm:$0xff] %vm641, %v1785
      %1818 = vst.msk [vmem:[%s221 + $0xa8] sm:$0xff] %vm641, %v1786
      %1819 = vst.msk [vmem:[%s221 + $0xb0] sm:$0xff] %vm641, %v1787
      %1820 = vst.msk [vmem:[%s221 + $0xb8] sm:$0xff] %vm641, %v1788
      %1821 = vst.msk [vmem:[%s221 + $0xc0] sm:$0xff] %vm641, %v1789
      %1822 = vst.msk [vmem:[%s221 + $0xc8] sm:$0xff] %vm641, %v1790
      %1823 = vst.msk [vmem:[%s221 + $0xd0] sm:$0xff] %vm641, %v1791
      %1824 = vst.msk [vmem:[%s221 + $0xd8] sm:$0xff] %vm641, %v1792
      %1825 = vst.msk [vmem:[%s221 + $0xe0] sm:$0xff] %vm641, %v1793
      %1826 = vst.msk [vmem:[%s221 + $0xe8] sm:$0xff] %vm641, %v1794
      %1827 = vst.msk [vmem:[%s221 + $0xf0] sm:$0xff] %vm641, %v1795
      %1828 = vst.msk [vmem:[%s221 + $0xf8] sm:$0xff] %vm641, %v1796
      %s1829 = scalar_lea.vmem %s210, 16
      %v1830 = vld [vmem:[%s1829] sm:$0xf]
      %s1831 = scalar_lea.vmem %s210, 20
      %v1832 = vld [vmem:[%s1831] sm:$0xf]
      %v1833 = vsel %vm641, %v533, 0
      %v1835 = vsel %vm641, %v535, 0
      %v1837 = vsel %vm641, %v538, 0
      %v1839 = vsel %vm641, %v540, 0
      %v1841 = vsel %vm641, %v543, 0
      %v1843 = vsel %vm641, %v545, 0
      %v1845 = vsel %vm641, %v548, 0
      %v1847 = vsel %vm641, %v550, 0
      %v1849 = vsel %vm641, %v553, 0
      %v1851 = vsel %vm641, %v555, 0
      %v1853 = vsel %vm641, %v558, 0
      %v1855 = vsel %vm641, %v560, 0
      %v1857 = vsel %vm641, %v563, 0
      %v1859 = vsel %vm641, %v565, 0
      %v1861 = vsel %vm641, %v568, 0
      %v1863 = vsel %vm641, %v570, 0
      %v1865 = vsel %vm641, %v573, 0
      %v1867 = vsel %vm641, %v575, 0
      %v1869 = vsel %vm641, %v578, 0
      %v1871 = vsel %vm641, %v580, 0
      %v1873 = vsel %vm641, %v583, 0
      %v1875 = vsel %vm641, %v585, 0
      %v1877 = vsel %vm641, %v588, 0
      %v1879 = vsel %vm641, %v590, 0
      %v1881 = vsel %vm641, %v593, 0
      %v1883 = vsel %vm641, %v595, 0
      %v1885 = vsel %vm641, %v598, 0
      %v1887 = vsel %vm641, %v600, 0
      %v1889 = vsel %vm641, %v603, 0
      %v1891 = vsel %vm641, %v605, 0
      %v1893 = vsel %vm641, %v608, 0
      %v1895 = vsel %vm641, %v610, 0
      %v1898 = vsel %vm706, %v1832, 0
      %1900 = vmatprep.subr.mxu0 0.0
      %1901 = vmatpush1.msra.mxu0 %v1898
      %1902 = vmatprep.subr.mxu0 0.0
      %1903 = vmatpush1.msra.mxu0 0.0
      %1904 = vmatprep.subr.mxu0 0.0
      %1905 = vmatpush1.msra.mxu0 0.0
      %1906 = vmatprep.subr.mxu0 0.0
      %1907 = vmatpush1.msra.mxu0 0.0
      %1908 = vmatprep.subr.mxu0 0.0
      %1909 = vmatpush1.msra.mxu0 0.0
      %1910 = vmatprep.subr.mxu0 0.0
      %1911 = vmatpush1.msra.mxu0 0.0
      %1912 = vmatprep.subr.mxu0 0.0
      %1913 = vmatpush1.msra.mxu0 0.0
      %1914 = vmatprep.subr.mxu0 0.0
      %1915 = vmatpush1.msra.mxu0 0.0
      %1916 = vmatprep.subr.mxu0 0.0
      %1917 = vmatpush1.msra.mxu0 0.0
      %1918 = vmatprep.subr.mxu0 0.0
      %1919 = vmatpush1.msra.mxu0 0.0
      %1920 = vmatprep.subr.mxu0 0.0
      %1921 = vmatpush1.msra.mxu0 0.0
      %1922 = vmatprep.subr.mxu0 0.0
      %1923 = vmatpush1.msra.mxu0 0.0
      %1924 = vmatprep.subr.mxu0 0.0
      %1925 = vmatpush1.msra.mxu0 0.0
      %1926 = vmatprep.subr.mxu0 0.0
      %1927 = vmatpush1.msra.mxu0 0.0
      %1928 = vmatprep.subr.mxu0 0.0
      %1929 = vmatpush1.msra.mxu0 0.0
      %1930 = vmatprep.subr.mxu0 0.0
      %1931 = vmatpush1.msra.mxu0 0.0
      %1932 = vmatprep.subr.mxu0 0.0
      %1933 = vmatpush1.msra.mxu0 0.0
      %1934 = vmatprep.subr.mxu0 0.0
      %1935 = vmatpush1.msra.mxu0 0.0
      %1936 = vmatprep.subr.mxu0 0.0
      %1937 = vmatpush1.msra.mxu0 0.0
      %1938 = vmatprep.subr.mxu0 0.0
      %1939 = vmatpush1.msra.mxu0 0.0
      %1940 = vmatprep.subr.mxu0 0.0
      %1941 = vmatpush1.msra.mxu0 0.0
      %1942 = vmatprep.subr.mxu0 0.0
      %1943 = vmatpush1.msra.mxu0 0.0
      %1944 = vmatprep.subr.mxu0 0.0
      %1945 = vmatpush1.msra.mxu0 0.0
      %1946 = vmatprep.subr.mxu0 0.0
      %1947 = vmatpush1.msra.mxu0 0.0
      %1948 = vmatprep.subr.mxu0 0.0
      %1949 = vmatpush1.msra.mxu0 0.0
      %1950 = vmatprep.subr.mxu0 0.0
      %1951 = vmatpush1.msra.mxu0 0.0
      %1952 = vmatprep.subr.mxu0 0.0
      %1953 = vmatpush1.msra.mxu0 0.0
      %1954 = vmatprep.subr.mxu0 0.0
      %1955 = vmatpush1.msra.mxu0 0.0
      %1956 = vmatprep.subr.mxu0 0.0
      %1957 = vmatpush1.msra.mxu0 0.0
      %1958 = vmatprep.subr.mxu0 0.0
      %1959 = vmatpush1.msra.mxu0 0.0
      %1960 = vmatprep.subr.mxu0 0.0
      %1961 = vmatpush1.msra.mxu0 0.0
      %1962 = vmatprep.subr.mxu0 0.0
      %1963 = vmatpush1.msra.mxu0 0.0
      %1964 = vmatprep.mubr.f32.mxu0 0.0
      %1965 = vmatmul.mubr.f32.gmra.mrb[0].mxu0 %v1833
      %v1966 = vpop.f32.mrb[0].mxu0
      %v1967 = vadd.f32 0.0, %v1966
      %v1968 = vpop.f32.mrb[0].mxu0
      %1969 = vmatprep.mubr.f32.mxu0 0.0
      %1970 = vmatmul.mubr.f32.gmra.mrb[0].mxu0 %v1835
      %v1971 = vpop.f32.mrb[0].mxu0
      %v1972 = vadd.f32 0.0, %v1971
      %v1973 = vpop.f32.mrb[0].mxu0
      %1974 = vmatprep.mubr.f32.mxu0 0.0
      %1975 = vmatmul.mubr.f32.gmra.mrb[0].mxu0 %v1837
      %v1976 = vpop.f32.mrb[0].mxu0
      %v1977 = vadd.f32 0.0, %v1976
      %v1978 = vpop.f32.mrb[0].mxu0
      %1979 = vmatprep.mubr.f32.mxu0 0.0
      %1980 = vmatmul.mubr.f32.gmra.mrb[0].mxu0 %v1839
      %v1981 = vpop.f32.mrb[0].mxu0
      %v1982 = vadd.f32 0.0, %v1981
      %v1983 = vpop.f32.mrb[0].mxu0
      %1984 = vmatprep.mubr.f32.mxu0 0.0
      %1985 = vmatmul.mubr.f32.gmra.mrb[0].mxu0 %v1841
      %v1986 = vpop.f32.mrb[0].mxu0
      %v1987 = vadd.f32 0.0, %v1986
      %v1988 = vpop.f32.mrb[0].mxu0
      %1989 = vmatprep.mubr.f32.mxu0 0.0
      %1990 = vmatmul.mubr.f32.gmra.mrb[0].mxu0 %v1843
      %v1991 = vpop.f32.mrb[0].mxu0
      %v1992 = vadd.f32 0.0, %v1991
      %v1993 = vpop.f32.mrb[0].mxu0
      %1994 = vmatprep.mubr.f32.mxu0 0.0
      %1995 = vmatmul.mubr.f32.gmra.mrb[0].mxu0 %v1845
      %v1996 = vpop.f32.mrb[0].mxu0
      %v1997 = vadd.f32 0.0, %v1996
      %v1998 = vpop.f32.mrb[0].mxu0
      %1999 = vmatprep.mubr.f32.mxu0 0.0
      %2000 = vmatmul.mubr.f32.gmra.mrb[0].mxu0 %v1847
      %v2001 = vpop.f32.mrb[0].mxu0
      %v2002 = vadd.f32 0.0, %v2001
      %v2003 = vpop.f32.mrb[0].mxu0
      %2004 = vmatprep.mubr.f32.mxu0 0.0
      %2005 = vmatmul.mubr.f32.gmra.mrb[0].mxu0 %v1849
      %v2006 = vpop.f32.mrb[0].mxu0
      %v2007 = vadd.f32 0.0, %v2006
      %v2008 = vpop.f32.mrb[0].mxu0
      %2009 = vmatprep.mubr.f32.mxu0 0.0
      %2010 = vmatmul.mubr.f32.gmra.mrb[0].mxu0 %v1851
      %v2011 = vpop.f32.mrb[0].mxu0
      %v2012 = vadd.f32 0.0, %v2011
      %v2013 = vpop.f32.mrb[0].mxu0
      %2014 = vmatprep.mubr.f32.mxu0 0.0
      %2015 = vmatmul.mubr.f32.gmra.mrb[0].mxu0 %v1853
      %v2016 = vpop.f32.mrb[0].mxu0
      %v2017 = vadd.f32 0.0, %v2016
      %v2018 = vpop.f32.mrb[0].mxu0
      %2019 = vmatprep.mubr.f32.mxu0 0.0
      %2020 = vmatmul.mubr.f32.gmra.mrb[0].mxu0 %v1855
      %v2021 = vpop.f32.mrb[0].mxu0
      %v2022 = vadd.f32 0.0, %v2021
      %v2023 = vpop.f32.mrb[0].mxu0
      %2024 = vmatprep.mubr.f32.mxu0 0.0
      %2025 = vmatmul.mubr.f32.gmra.mrb[0].mxu0 %v1857
      %v2026 = vpop.f32.mrb[0].mxu0
      %v2027 = vadd.f32 0.0, %v2026
      %v2028 = vpop.f32.mrb[0].mxu0
      %2029 = vmatprep.mubr.f32.mxu0 0.0
      %2030 = vmatmul.mubr.f32.gmra.mrb[0].mxu0 %v1859
      %v2031 = vpop.f32.mrb[0].mxu0
      %v2032 = vadd.f32 0.0, %v2031
      %v2033 = vpop.f32.mrb[0].mxu0
      %2034 = vmatprep.mubr.f32.mxu0 0.0
      %2035 = vmatmul.mubr.f32.gmra.mrb[0].mxu0 %v1861
      %v2036 = vpop.f32.mrb[0].mxu0
      %v2037 = vadd.f32 0.0, %v2036
      %v2038 = vpop.f32.mrb[0].mxu0
      %2039 = vmatprep.mubr.f32.mxu0 0.0
      %2040 = vmatmul.mubr.f32.gmra.mrb[0].mxu0 %v1863
      %v2041 = vpop.f32.mrb[0].mxu0
      %v2042 = vadd.f32 0.0, %v2041
      %v2043 = vpop.f32.mrb[0].mxu0
      %2044 = vmatprep.mubr.f32.mxu0 0.0
      %2045 = vmatmul.mubr.f32.gmra.mrb[0].mxu0 %v1865
      %v2046 = vpop.f32.mrb[0].mxu0
      %v2047 = vadd.f32 0.0, %v2046
      %v2048 = vpop.f32.mrb[0].mxu0
      %2049 = vmatprep.mubr.f32.mxu0 0.0
      %2050 = vmatmul.mubr.f32.gmra.mrb[0].mxu0 %v1867
      %v2051 = vpop.f32.mrb[0].mxu0
      %v2052 = vadd.f32 0.0, %v2051
      %v2053 = vpop.f32.mrb[0].mxu0
      %2054 = vmatprep.mubr.f32.mxu0 0.0
      %2055 = vmatmul.mubr.f32.gmra.mrb[0].mxu0 %v1869
      %v2056 = vpop.f32.mrb[0].mxu0
      %v2057 = vadd.f32 0.0, %v2056
      %v2058 = vpop.f32.mrb[0].mxu0
      %2059 = vmatprep.mubr.f32.mxu0 0.0
      %2060 = vmatmul.mubr.f32.gmra.mrb[0].mxu0 %v1871
      %v2061 = vpop.f32.mrb[0].mxu0
      %v2062 = vadd.f32 0.0, %v2061
      %v2063 = vpop.f32.mrb[0].mxu0
      %2064 = vmatprep.mubr.f32.mxu0 0.0
      %2065 = vmatmul.mubr.f32.gmra.mrb[0].mxu0 %v1873
      %v2066 = vpop.f32.mrb[0].mxu0
      %v2067 = vadd.f32 0.0, %v2066
      %v2068 = vpop.f32.mrb[0].mxu0
      %2069 = vmatprep.mubr.f32.mxu0 0.0
      %2070 = vmatmul.mubr.f32.gmra.mrb[0].mxu0 %v1875
      %v2071 = vpop.f32.mrb[0].mxu0
      %v2072 = vadd.f32 0.0, %v2071
      %v2073 = vpop.f32.mrb[0].mxu0
      %2074 = vmatprep.mubr.f32.mxu0 0.0
      %2075 = vmatmul.mubr.f32.gmra.mrb[0].mxu0 %v1877
      %v2076 = vpop.f32.mrb[0].mxu0
      %v2077 = vadd.f32 0.0, %v2076
      %v2078 = vpop.f32.mrb[0].mxu0
      %2079 = vmatprep.mubr.f32.mxu0 0.0
      %2080 = vmatmul.mubr.f32.gmra.mrb[0].mxu0 %v1879
      %v2081 = vpop.f32.mrb[0].mxu0
      %v2082 = vadd.f32 0.0, %v2081
      %v2083 = vpop.f32.mrb[0].mxu0
      %2084 = vmatprep.mubr.f32.mxu0 0.0
      %2085 = vmatmul.mubr.f32.gmra.mrb[0].mxu0 %v1881
      %v2086 = vpop.f32.mrb[0].mxu0
      %v2087 = vadd.f32 0.0, %v2086
      %v2088 = vpop.f32.mrb[0].mxu0
      %2089 = vmatprep.mubr.f32.mxu0 0.0
      %2090 = vmatmul.mubr.f32.gmra.mrb[0].mxu0 %v1883
      %v2091 = vpop.f32.mrb[0].mxu0
      %v2092 = vadd.f32 0.0, %v2091
      %v2093 = vpop.f32.mrb[0].mxu0
      %2094 = vmatprep.mubr.f32.mxu0 0.0
      %2095 = vmatmul.mubr.f32.gmra.mrb[0].mxu0 %v1885
      %v2096 = vpop.f32.mrb[0].mxu0
      %v2097 = vadd.f32 0.0, %v2096
      %v2098 = vpop.f32.mrb[0].mxu0
      %2099 = vmatprep.mubr.f32.mxu0 0.0
      %2100 = vmatmul.mubr.f32.gmra.mrb[0].mxu0 %v1887
      %v2101 = vpop.f32.mrb[0].mxu0
      %v2102 = vadd.f32 0.0, %v2101
      %v2103 = vpop.f32.mrb[0].mxu0
      %2104 = vmatprep.mubr.f32.mxu0 0.0
      %2105 = vmatmul.mubr.f32.gmra.mrb[0].mxu0 %v1889
      %v2106 = vpop.f32.mrb[0].mxu0
      %v2107 = vadd.f32 0.0, %v2106
      %v2108 = vpop.f32.mrb[0].mxu0
      %2109 = vmatprep.mubr.f32.mxu0 0.0
      %2110 = vmatmul.mubr.f32.gmra.mrb[0].mxu0 %v1891
      %v2111 = vpop.f32.mrb[0].mxu0
      %v2112 = vadd.f32 0.0, %v2111
      %v2113 = vpop.f32.mrb[0].mxu0
      %2114 = vmatprep.mubr.f32.mxu0 0.0
      %2115 = vmatmul.mubr.f32.gmra.mrb[0].mxu0 %v1893
      %v2116 = vpop.f32.mrb[0].mxu0
      %v2117 = vadd.f32 0.0, %v2116
      %v2118 = vpop.f32.mrb[0].mxu0
      %2119 = vmatprep.mubr.f32.mxu0 0.0
      %2120 = vmatmul.mubr.f32.gmra.mrb[0].mxu0 %v1895
      %v2121 = vpop.f32.mrb[0].mxu0
      %v2122 = vadd.f32 0.0, %v2121
      %v2123 = vpop.f32.mrb[0].mxu0
      %2124 = vdwg.mxu0
      %v2126 = vsel %vm706, %v1830, 0
      %2128 = vmatprep.subr.mxu0 0.0
      %2129 = vmatpush1.msra.mxu0 %v2126
      %2130 = vmatprep.subr.mxu0 0.0
      %2131 = vmatpush1.msra.mxu0 0.0
      %2132 = vmatprep.subr.mxu0 0.0
      %2133 = vmatpush1.msra.mxu0 0.0
      %2134 = vmatprep.subr.mxu0 0.0
      %2135 = vmatpush1.msra.mxu0 0.0
      %2136 = vmatprep.subr.mxu0 0.0
      %2137 = vmatpush1.msra.mxu0 0.0
      %2138 = vmatprep.subr.mxu0 0.0
      %2139 = vmatpush1.msra.mxu0 0.0
      %2140 = vmatprep.subr.mxu0 0.0
      %2141 = vmatpush1.msra.mxu0 0.0
      %2142 = vmatprep.subr.mxu0 0.0
      %2143 = vmatpush1.msra.mxu0 0.0
      %2144 = vmatprep.subr.mxu0 0.0
      %2145 = vmatpush1.msra.mxu0 0.0
      %2146 = vmatprep.subr.mxu0 0.0
      %2147 = vmatpush1.msra.mxu0 0.0
      %2148 = vmatprep.subr.mxu0 0.0
      %2149 = vmatpush1.msra.mxu0 0.0
      %2150 = vmatprep.subr.mxu0 0.0
      %2151 = vmatpush1.msra.mxu0 0.0
      %2152 = vmatprep.subr.mxu0 0.0
      %2153 = vmatpush1.msra.mxu0 0.0
      %2154 = vmatprep.subr.mxu0 0.0
      %2155 = vmatpush1.msra.mxu0 0.0
      %2156 = vmatprep.subr.mxu0 0.0
      %2157 = vmatpush1.msra.mxu0 0.0
      %2158 = vmatprep.subr.mxu0 0.0
      %2159 = vmatpush1.msra.mxu0 0.0
      %2160 = vmatprep.subr.mxu0 0.0
      %2161 = vmatpush1.msra.mxu0 0.0
      %2162 = vmatprep.subr.mxu0 0.0
      %2163 = vmatpush1.msra.mxu0 0.0
      %2164 = vmatprep.subr.mxu0 0.0
      %2165 = vmatpush1.msra.mxu0 0.0
      %2166 = vmatprep.subr.mxu0 0.0
      %2167 = vmatpush1.msra.mxu0 0.0
      %2168 = vmatprep.subr.mxu0 0.0
      %2169 = vmatpush1.msra.mxu0 0.0
      %2170 = vmatprep.subr.mxu0 0.0
      %2171 = vmatpush1.msra.mxu0 0.0
      %2172 = vmatprep.subr.mxu0 0.0
      %2173 = vmatpush1.msra.mxu0 0.0
      %2174 = vmatprep.subr.mxu0 0.0
      %2175 = vmatpush1.msra.mxu0 0.0
      %2176 = vmatprep.subr.mxu0 0.0
      %2177 = vmatpush1.msra.mxu0 0.0
      %2178 = vmatprep.subr.mxu0 0.0
      %2179 = vmatpush1.msra.mxu0 0.0
      %2180 = vmatprep.subr.mxu0 0.0
      %2181 = vmatpush1.msra.mxu0 0.0
      %2182 = vmatprep.subr.mxu0 0.0
      %2183 = vmatpush1.msra.mxu0 0.0
      %2184 = vmatprep.subr.mxu0 0.0
      %2185 = vmatpush1.msra.mxu0 0.0
      %2186 = vmatprep.subr.mxu0 0.0
      %2187 = vmatpush1.msra.mxu0 0.0
      %2188 = vmatprep.subr.mxu0 0.0
      %2189 = vmatpush1.msra.mxu0 0.0
      %2190 = vmatprep.subr.mxu0 0.0
      %2191 = vmatpush1.msra.mxu0 0.0
      %2192 = vmatprep.mubr.f32.mxu0 0.0
      %2193 = vmatmul.mubr.f32.gmra.mrb[0].mxu0 %v642
      %v2194 = vpop.f32.mrb[0].mxu0
      %v2195 = vadd.f32 %v1967, %v2194
      %v2196 = vpop.f32.mrb[0].mxu0
      %2197 = vmatprep.mubr.f32.mxu0 0.0
      %2198 = vmatmul.mubr.f32.gmra.mrb[0].mxu0 %v644
      %v2199 = vpop.f32.mrb[0].mxu0
      %v2200 = vadd.f32 %v1972, %v2199
      %v2201 = vpop.f32.mrb[0].mxu0
      %2202 = vmatprep.mubr.f32.mxu0 0.0
      %2203 = vmatmul.mubr.f32.gmra.mrb[0].mxu0 %v646
      %v2204 = vpop.f32.mrb[0].mxu0
      %v2205 = vadd.f32 %v1977, %v2204
      %v2206 = vpop.f32.mrb[0].mxu0
      %2207 = vmatprep.mubr.f32.mxu0 0.0
      %2208 = vmatmul.mubr.f32.gmra.mrb[0].mxu0 %v648
      %v2209 = vpop.f32.mrb[0].mxu0
      %v2210 = vadd.f32 %v1982, %v2209
      %v2211 = vpop.f32.mrb[0].mxu0
      %2212 = vmatprep.mubr.f32.mxu0 0.0
      %2213 = vmatmul.mubr.f32.gmra.mrb[0].mxu0 %v650
      %v2214 = vpop.f32.mrb[0].mxu0
      %v2215 = vadd.f32 %v1987, %v2214
      %v2216 = vpop.f32.mrb[0].mxu0
      %2217 = vmatprep.mubr.f32.mxu0 0.0
      %2218 = vmatmul.mubr.f32.gmra.mrb[0].mxu0 %v652
      %v2219 = vpop.f32.mrb[0].mxu0
      %v2220 = vadd.f32 %v1992, %v2219
      %v2221 = vpop.f32.mrb[0].mxu0
      %2222 = vmatprep.mubr.f32.mxu0 0.0
      %2223 = vmatmul.mubr.f32.gmra.mrb[0].mxu0 %v654
      %v2224 = vpop.f32.mrb[0].mxu0
      %v2225 = vadd.f32 %v1997, %v2224
      %v2226 = vpop.f32.mrb[0].mxu0
      %2227 = vmatprep.mubr.f32.mxu0 0.0
      %2228 = vmatmul.mubr.f32.gmra.mrb[0].mxu0 %v656
      %v2229 = vpop.f32.mrb[0].mxu0
      %v2230 = vadd.f32 %v2002, %v2229
      %v2231 = vpop.f32.mrb[0].mxu0
      %2232 = vmatprep.mubr.f32.mxu0 0.0
      %2233 = vmatmul.mubr.f32.gmra.mrb[0].mxu0 %v658
      %v2234 = vpop.f32.mrb[0].mxu0
      %v2235 = vadd.f32 %v2007, %v2234
      %v2236 = vpop.f32.mrb[0].mxu0
      %2237 = vmatprep.mubr.f32.mxu0 0.0
      %2238 = vmatmul.mubr.f32.gmra.mrb[0].mxu0 %v660
      %v2239 = vpop.f32.mrb[0].mxu0
      %v2240 = vadd.f32 %v2012, %v2239
      %v2241 = vpop.f32.mrb[0].mxu0
      %2242 = vmatprep.mubr.f32.mxu0 0.0
      %2243 = vmatmul.mubr.f32.gmra.mrb[0].mxu0 %v662
      %v2244 = vpop.f32.mrb[0].mxu0
      %v2245 = vadd.f32 %v2017, %v2244
      %v2246 = vpop.f32.mrb[0].mxu0
      %2247 = vmatprep.mubr.f32.mxu0 0.0
      %2248 = vmatmul.mubr.f32.gmra.mrb[0].mxu0 %v664
      %v2249 = vpop.f32.mrb[0].mxu0
      %v2250 = vadd.f32 %v2022, %v2249
      %v2251 = vpop.f32.mrb[0].mxu0
      %2252 = vmatprep.mubr.f32.mxu0 0.0
      %2253 = vmatmul.mubr.f32.gmra.mrb[0].mxu0 %v666
      %v2254 = vpop.f32.mrb[0].mxu0
      %v2255 = vadd.f32 %v2027, %v2254
      %v2256 = vpop.f32.mrb[0].mxu0
      %2257 = vmatprep.mubr.f32.mxu0 0.0
      %2258 = vmatmul.mubr.f32.gmra.mrb[0].mxu0 %v668
      %v2259 = vpop.f32.mrb[0].mxu0
      %v2260 = vadd.f32 %v2032, %v2259
      %v2261 = vpop.f32.mrb[0].mxu0
      %2262 = vmatprep.mubr.f32.mxu0 0.0
      %2263 = vmatmul.mubr.f32.gmra.mrb[0].mxu0 %v670
      %v2264 = vpop.f32.mrb[0].mxu0
      %v2265 = vadd.f32 %v2037, %v2264
      %v2266 = vpop.f32.mrb[0].mxu0
      %2267 = vmatprep.mubr.f32.mxu0 0.0
      %2268 = vmatmul.mubr.f32.gmra.mrb[0].mxu0 %v672
      %v2269 = vpop.f32.mrb[0].mxu0
      %v2270 = vadd.f32 %v2042, %v2269
      %v2271 = vpop.f32.mrb[0].mxu0
      %2272 = vmatprep.mubr.f32.mxu0 0.0
      %2273 = vmatmul.mubr.f32.gmra.mrb[0].mxu0 %v674
      %v2274 = vpop.f32.mrb[0].mxu0
      %v2275 = vadd.f32 %v2047, %v2274
      %v2276 = vpop.f32.mrb[0].mxu0
      %2277 = vmatprep.mubr.f32.mxu0 0.0
      %2278 = vmatmul.mubr.f32.gmra.mrb[0].mxu0 %v676
      %v2279 = vpop.f32.mrb[0].mxu0
      %v2280 = vadd.f32 %v2052, %v2279
      %v2281 = vpop.f32.mrb[0].mxu0
      %2282 = vmatprep.mubr.f32.mxu0 0.0
      %2283 = vmatmul.mubr.f32.gmra.mrb[0].mxu0 %v678
      %v2284 = vpop.f32.mrb[0].mxu0
      %v2285 = vadd.f32 %v2057, %v2284
      %v2286 = vpop.f32.mrb[0].mxu0
      %2287 = vmatprep.mubr.f32.mxu0 0.0
      %2288 = vmatmul.mubr.f32.gmra.mrb[0].mxu0 %v680
      %v2289 = vpop.f32.mrb[0].mxu0
      %v2290 = vadd.f32 %v2062, %v2289
      %v2291 = vpop.f32.mrb[0].mxu0
      %2292 = vmatprep.mubr.f32.mxu0 0.0
      %2293 = vmatmul.mubr.f32.gmra.mrb[0].mxu0 %v682
      %v2294 = vpop.f32.mrb[0].mxu0
      %v2295 = vadd.f32 %v2067, %v2294
      %v2296 = vpop.f32.mrb[0].mxu0
      %2297 = vmatprep.mubr.f32.mxu0 0.0
      %2298 = vmatmul.mubr.f32.gmra.mrb[0].mxu0 %v684
      %v2299 = vpop.f32.mrb[0].mxu0
      %v2300 = vadd.f32 %v2072, %v2299
      %v2301 = vpop.f32.mrb[0].mxu0
      %2302 = vmatprep.mubr.f32.mxu0 0.0
      %2303 = vmatmul.mubr.f32.gmra.mrb[0].mxu0 %v686
      %v2304 = vpop.f32.mrb[0].mxu0
      %v2305 = vadd.f32 %v2077, %v2304
      %v2306 = vpop.f32.mrb[0].mxu0
      %2307 = vmatprep.mubr.f32.mxu0 0.0
      %2308 = vmatmul.mubr.f32.gmra.mrb[0].mxu0 %v688
      %v2309 = vpop.f32.mrb[0].mxu0
      %v2310 = vadd.f32 %v2082, %v2309
      %v2311 = vpop.f32.mrb[0].mxu0
      %2312 = vmatprep.mubr.f32.mxu0 0.0
      %2313 = vmatmul.mubr.f32.gmra.mrb[0].mxu0 %v690
      %v2314 = vpop.f32.mrb[0].mxu0
      %v2315 = vadd.f32 %v2087, %v2314
      %v2316 = vpop.f32.mrb[0].mxu0
      %2317 = vmatprep.mubr.f32.mxu0 0.0
      %2318 = vmatmul.mubr.f32.gmra.mrb[0].mxu0 %v692
      %v2319 = vpop.f32.mrb[0].mxu0
      %v2320 = vadd.f32 %v2092, %v2319
      %v2321 = vpop.f32.mrb[0].mxu0
      %2322 = vmatprep.mubr.f32.mxu0 0.0
      %2323 = vmatmul.mubr.f32.gmra.mrb[0].mxu0 %v694
      %v2324 = vpop.f32.mrb[0].mxu0
      %v2325 = vadd.f32 %v2097, %v2324
      %v2326 = vpop.f32.mrb[0].mxu0
      %2327 = vmatprep.mubr.f32.mxu0 0.0
      %2328 = vmatmul.mubr.f32.gmra.mrb[0].mxu0 %v696
      %v2329 = vpop.f32.mrb[0].mxu0
      %v2330 = vadd.f32 %v2102, %v2329
      %v2331 = vpop.f32.mrb[0].mxu0
      %2332 = vmatprep.mubr.f32.mxu0 0.0
      %2333 = vmatmul.mubr.f32.gmra.mrb[0].mxu0 %v698
      %v2334 = vpop.f32.mrb[0].mxu0
      %v2335 = vadd.f32 %v2107, %v2334
      %v2336 = vpop.f32.mrb[0].mxu0
      %2337 = vmatprep.mubr.f32.mxu0 0.0
      %2338 = vmatmul.mubr.f32.gmra.mrb[0].mxu0 %v700
      %v2339 = vpop.f32.mrb[0].mxu0
      %v2340 = vadd.f32 %v2112, %v2339
      %v2341 = vpop.f32.mrb[0].mxu0
      %2342 = vmatprep.mubr.f32.mxu0 0.0
      %2343 = vmatmul.mubr.f32.gmra.mrb[0].mxu0 %v702
      %v2344 = vpop.f32.mrb[0].mxu0
      %v2345 = vadd.f32 %v2117, %v2344
      %v2346 = vpop.f32.mrb[0].mxu0
      %2347 = vmatprep.mubr.f32.mxu0 0.0
      %2348 = vmatmul.mubr.f32.gmra.mrb[0].mxu0 %v704
      %v2349 = vpop.f32.mrb[0].mxu0
      %v2350 = vadd.f32 %v2122, %v2349
      %v2351 = vpop.f32.mrb[0].mxu0
      %2352 = vdwg.mxu0
      %s2353 = scalar_lea.vmem %s210, 24
      %v2354 = vld [vmem:[%s2353] sm:$0xf]
      %v2356 = vsel %vm706, %v2354, 0
      %2358 = vmatprep.subr.mxu0 0.0
      %2359 = vmatpush1.msra.mxu0 %v2356
      %2360 = vmatprep.subr.mxu0 0.0
      %2361 = vmatpush1.msra.mxu0 0.0
      %2362 = vmatprep.subr.mxu0 0.0
      %2363 = vmatpush1.msra.mxu0 0.0
      %2364 = vmatprep.subr.mxu0 0.0
      %2365 = vmatpush1.msra.mxu0 0.0
      %2366 = vmatprep.subr.mxu0 0.0
      %2367 = vmatpush1.msra.mxu0 0.0
      %2368 = vmatprep.subr.mxu0 0.0
      %2369 = vmatpush1.msra.mxu0 0.0
      %2370 = vmatprep.subr.mxu0 0.0
      %2371 = vmatpush1.msra.mxu0 0.0
      %2372 = vmatprep.subr.mxu0 0.0
      %2373 = vmatpush1.msra.mxu0 0.0
      %2374 = vmatprep.subr.mxu0 0.0
      %2375 = vmatpush1.msra.mxu0 0.0
      %2376 = vmatprep.subr.mxu0 0.0
      %2377 = vmatpush1.msra.mxu0 0.0
      %2378 = vmatprep.subr.mxu0 0.0
      %2379 = vmatpush1.msra.mxu0 0.0
      %2380 = vmatprep.subr.mxu0 0.0
      %2381 = vmatpush1.msra.mxu0 0.0
      %2382 = vmatprep.subr.mxu0 0.0
      %2383 = vmatpush1.msra.mxu0 0.0
      %2384 = vmatprep.subr.mxu0 0.0
      %2385 = vmatpush1.msra.mxu0 0.0
      %2386 = vmatprep.subr.mxu0 0.0
      %2387 = vmatpush1.msra.mxu0 0.0
      %2388 = vmatprep.subr.mxu0 0.0
      %2389 = vmatpush1.msra.mxu0 0.0
      %2390 = vmatprep.subr.mxu0 0.0
      %2391 = vmatpush1.msra.mxu0 0.0
      %2392 = vmatprep.subr.mxu0 0.0
      %2393 = vmatpush1.msra.mxu0 0.0
      %2394 = vmatprep.subr.mxu0 0.0
      %2395 = vmatpush1.msra.mxu0 0.0
      %2396 = vmatprep.subr.mxu0 0.0
      %2397 = vmatpush1.msra.mxu0 0.0
      %2398 = vmatprep.subr.mxu0 0.0
      %2399 = vmatpush1.msra.mxu0 0.0
      %2400 = vmatprep.subr.mxu0 0.0
      %2401 = vmatpush1.msra.mxu0 0.0
      %2402 = vmatprep.subr.mxu0 0.0
      %2403 = vmatpush1.msra.mxu0 0.0
      %2404 = vmatprep.subr.mxu0 0.0
      %2405 = vmatpush1.msra.mxu0 0.0
      %2406 = vmatprep.subr.mxu0 0.0
      %2407 = vmatpush1.msra.mxu0 0.0
      %2408 = vmatprep.subr.mxu0 0.0
      %2409 = vmatpush1.msra.mxu0 0.0
      %2410 = vmatprep.subr.mxu0 0.0
      %2411 = vmatpush1.msra.mxu0 0.0
      %2412 = vmatprep.subr.mxu0 0.0
      %2413 = vmatpush1.msra.mxu0 0.0
      %2414 = vmatprep.subr.mxu0 0.0
      %2415 = vmatpush1.msra.mxu0 0.0
      %2416 = vmatprep.subr.mxu0 0.0
      %2417 = vmatpush1.msra.mxu0 0.0
      %2418 = vmatprep.subr.mxu0 0.0
      %2419 = vmatpush1.msra.mxu0 0.0
      %2420 = vmatprep.subr.mxu0 0.0
      %2421 = vmatpush1.msra.mxu0 0.0
      %2422 = vmatprep.mubr.f32.mxu0 0.0
      %2423 = vmatmul.mubr.f32.gmra.mrb[0].mxu0 %v646
      %v2424 = vpop.f32.mrb[0].mxu0
      %v2425 = vadd.f32 0.0, %v2424
      %v2426 = vpop.f32.mrb[0].mxu0
      %2427 = vmatprep.mubr.f32.mxu0 0.0
      %2428 = vmatmul.mubr.f32.gmra.mrb[0].mxu0 %v648
      %v2429 = vpop.f32.mrb[0].mxu0
      %v2430 = vadd.f32 0.0, %v2429
      %v2431 = vpop.f32.mrb[0].mxu0
      %2432 = vmatprep.mubr.f32.mxu0 0.0
      %2433 = vmatmul.mubr.f32.gmra.mrb[0].mxu0 %v650
      %v2434 = vpop.f32.mrb[0].mxu0
      %v2435 = vadd.f32 0.0, %v2434
      %v2436 = vpop.f32.mrb[0].mxu0
      %2437 = vmatprep.mubr.f32.mxu0 0.0
      %2438 = vmatmul.mubr.f32.gmra.mrb[0].mxu0 %v652
      %v2439 = vpop.f32.mrb[0].mxu0
      %v2440 = vadd.f32 0.0, %v2439
      %v2441 = vpop.f32.mrb[0].mxu0
      %2442 = vmatprep.mubr.f32.mxu0 0.0
      %2443 = vmatmul.mubr.f32.gmra.mrb[0].mxu0 %v654
      %v2444 = vpop.f32.mrb[0].mxu0
      %v2445 = vadd.f32 0.0, %v2444
      %v2446 = vpop.f32.mrb[0].mxu0
      %2447 = vmatprep.mubr.f32.mxu0 0.0
      %2448 = vmatmul.mubr.f32.gmra.mrb[0].mxu0 %v656
      %v2449 = vpop.f32.mrb[0].mxu0
      %v2450 = vadd.f32 0.0, %v2449
      %v2451 = vpop.f32.mrb[0].mxu0
      %2452 = vmatprep.mubr.f32.mxu0 0.0
      %2453 = vmatmul.mubr.f32.gmra.mrb[0].mxu0 %v658
      %v2454 = vpop.f32.mrb[0].mxu0
      %v2455 = vadd.f32 0.0, %v2454
      %v2456 = vpop.f32.mrb[0].mxu0
      %2457 = vmatprep.mubr.f32.mxu0 0.0
      %2458 = vmatmul.mubr.f32.gmra.mrb[0].mxu0 %v660
      %v2459 = vpop.f32.mrb[0].mxu0
      %v2460 = vadd.f32 0.0, %v2459
      %v2461 = vpop.f32.mrb[0].mxu0
      %2462 = vmatprep.mubr.f32.mxu0 0.0
      %2463 = vmatmul.mubr.f32.gmra.mrb[0].mxu0 %v662
      %v2464 = vpop.f32.mrb[0].mxu0
      %v2465 = vadd.f32 0.0, %v2464
      %v2466 = vpop.f32.mrb[0].mxu0
      %2467 = vmatprep.mubr.f32.mxu0 0.0
      %2468 = vmatmul.mubr.f32.gmra.mrb[0].mxu0 %v664
      %v2469 = vpop.f32.mrb[0].mxu0
      %v2470 = vadd.f32 0.0, %v2469
      %v2471 = vpop.f32.mrb[0].mxu0
      %2472 = vmatprep.mubr.f32.mxu0 0.0
      %2473 = vmatmul.mubr.f32.gmra.mrb[0].mxu0 %v666
      %v2474 = vpop.f32.mrb[0].mxu0
      %v2475 = vadd.f32 0.0, %v2474
      %v2476 = vpop.f32.mrb[0].mxu0
      %2477 = vmatprep.mubr.f32.mxu0 0.0
      %2478 = vmatmul.mubr.f32.gmra.mrb[0].mxu0 %v668
      %v2479 = vpop.f32.mrb[0].mxu0
      %v2480 = vadd.f32 0.0, %v2479
      %v2481 = vpop.f32.mrb[0].mxu0
      %2482 = vmatprep.mubr.f32.mxu0 0.0
      %2483 = vmatmul.mubr.f32.gmra.mrb[0].mxu0 %v670
      %v2484 = vpop.f32.mrb[0].mxu0
      %v2485 = vadd.f32 0.0, %v2484
      %v2486 = vpop.f32.mrb[0].mxu0
      %2487 = vmatprep.mubr.f32.mxu0 0.0
      %2488 = vmatmul.mubr.f32.gmra.mrb[0].mxu0 %v672
      %v2489 = vpop.f32.mrb[0].mxu0
      %v2490 = vadd.f32 0.0, %v2489
      %v2491 = vpop.f32.mrb[0].mxu0
      %2492 = vmatprep.mubr.f32.mxu0 0.0
      %2493 = vmatmul.mubr.f32.gmra.mrb[0].mxu0 %v674
      %v2494 = vpop.f32.mrb[0].mxu0
      %v2495 = vadd.f32 0.0, %v2494
      %v2496 = vpop.f32.mrb[0].mxu0
      %2497 = vmatprep.mubr.f32.mxu0 0.0
      %2498 = vmatmul.mubr.f32.gmra.mrb[0].mxu0 %v676
      %v2499 = vpop.f32.mrb[0].mxu0
      %v2500 = vadd.f32 0.0, %v2499
      %v2501 = vpop.f32.mrb[0].mxu0
      %2502 = vmatprep.mubr.f32.mxu0 0.0
      %2503 = vmatmul.mubr.f32.gmra.mrb[0].mxu0 %v678
      %v2504 = vpop.f32.mrb[0].mxu0
      %v2505 = vadd.f32 0.0, %v2504
      %v2506 = vpop.f32.mrb[0].mxu0
      %2507 = vmatprep.mubr.f32.mxu0 0.0
      %2508 = vmatmul.mubr.f32.gmra.mrb[0].mxu0 %v680
      %v2509 = vpop.f32.mrb[0].mxu0
      %v2510 = vadd.f32 0.0, %v2509
      %v2511 = vpop.f32.mrb[0].mxu0
      %2512 = vmatprep.mubr.f32.mxu0 0.0
      %2513 = vmatmul.mubr.f32.gmra.mrb[0].mxu0 %v682
      %v2514 = vpop.f32.mrb[0].mxu0
      %v2515 = vadd.f32 0.0, %v2514
      %v2516 = vpop.f32.mrb[0].mxu0
      %2517 = vmatprep.mubr.f32.mxu0 0.0
      %2518 = vmatmul.mubr.f32.gmra.mrb[0].mxu0 %v684
      %v2519 = vpop.f32.mrb[0].mxu0
      %v2520 = vadd.f32 0.0, %v2519
      %v2521 = vpop.f32.mrb[0].mxu0
      %2522 = vmatprep.mubr.f32.mxu0 0.0
      %2523 = vmatmul.mubr.f32.gmra.mrb[0].mxu0 %v686
      %v2524 = vpop.f32.mrb[0].mxu0
      %v2525 = vadd.f32 0.0, %v2524
      %v2526 = vpop.f32.mrb[0].mxu0
      %2527 = vmatprep.mubr.f32.mxu0 0.0
      %2528 = vmatmul.mubr.f32.gmra.mrb[0].mxu0 %v688
      %v2529 = vpop.f32.mrb[0].mxu0
      %v2530 = vadd.f32 0.0, %v2529
      %v2531 = vpop.f32.mrb[0].mxu0
      %2532 = vmatprep.mubr.f32.mxu0 0.0
      %2533 = vmatmul.mubr.f32.gmra.mrb[0].mxu0 %v690
      %v2534 = vpop.f32.mrb[0].mxu0
      %v2535 = vadd.f32 0.0, %v2534
      %v2536 = vpop.f32.mrb[0].mxu0
      %2537 = vmatprep.mubr.f32.mxu0 0.0
      %2538 = vmatmul.mubr.f32.gmra.mrb[0].mxu0 %v692
      %v2539 = vpop.f32.mrb[0].mxu0
      %v2540 = vadd.f32 0.0, %v2539
      %v2541 = vpop.f32.mrb[0].mxu0
      %2542 = vmatprep.mubr.f32.mxu0 0.0
      %2543 = vmatmul.mubr.f32.gmra.mrb[0].mxu0 %v694
      %v2544 = vpop.f32.mrb[0].mxu0
      %v2545 = vadd.f32 0.0, %v2544
      %v2546 = vpop.f32.mrb[0].mxu0
      %2547 = vmatprep.mubr.f32.mxu0 0.0
      %2548 = vmatmul.mubr.f32.gmra.mrb[0].mxu0 %v696
      %v2549 = vpop.f32.mrb[0].mxu0
      %v2550 = vadd.f32 0.0, %v2549
      %v2551 = vpop.f32.mrb[0].mxu0
      %2552 = vmatprep.mubr.f32.mxu0 0.0
      %2553 = vmatmul.mubr.f32.gmra.mrb[0].mxu0 %v698
      %v2554 = vpop.f32.mrb[0].mxu0
      %v2555 = vadd.f32 0.0, %v2554
      %v2556 = vpop.f32.mrb[0].mxu0
      %2557 = vmatprep.mubr.f32.mxu0 0.0
      %2558 = vmatmul.mubr.f32.gmra.mrb[0].mxu0 %v700
      %v2559 = vpop.f32.mrb[0].mxu0
      %v2560 = vadd.f32 0.0, %v2559
      %v2561 = vpop.f32.mrb[0].mxu0
      %2562 = vmatprep.mubr.f32.mxu0 0.0
      %2563 = vmatmul.mubr.f32.gmra.mrb[0].mxu0 %v702
      %v2564 = vpop.f32.mrb[0].mxu0
      %v2565 = vadd.f32 0.0, %v2564
      %v2566 = vpop.f32.mrb[0].mxu0
      %2567 = vmatprep.mubr.f32.mxu0 0.0
      %2568 = vmatmul.mubr.f32.gmra.mrb[0].mxu0 %v704
      %v2569 = vpop.f32.mrb[0].mxu0
      %v2570 = vadd.f32 0.0, %v2569
      %v2571 = vpop.f32.mrb[0].mxu0
      %2572 = vmatprep.mubr.f32.mxu0 0.0
      %2573 = vmatmul.mubr.f32.gmra.mrb[0].mxu0 %v1495
      %v2574 = vpop.f32.mrb[0].mxu0
      %v2575 = vadd.f32 0.0, %v2574
      %v2576 = vpop.f32.mrb[0].mxu0
      %2577 = vmatprep.mubr.f32.mxu0 0.0
      %2578 = vmatmul.mubr.f32.gmra.mrb[0].mxu0 %v1497
      %v2579 = vpop.f32.mrb[0].mxu0
      %v2580 = vadd.f32 0.0, %v2579
      %v2581 = vpop.f32.mrb[0].mxu0
      %2582 = vdwg.mxu0
      %v2583 = vadd.f32 %v2195, %v2425
      %v2584 = vadd.f32 %v2200, %v2430
      %v2585 = vadd.f32 %v2205, %v2435
      %v2586 = vadd.f32 %v2210, %v2440
      %v2587 = vadd.f32 %v2215, %v2445
      %v2588 = vadd.f32 %v2220, %v2450
      %v2589 = vadd.f32 %v2225, %v2455
      %v2590 = vadd.f32 %v2230, %v2460
      %v2591 = vadd.f32 %v2235, %v2465
      %v2592 = vadd.f32 %v2240, %v2470
      %v2593 = vadd.f32 %v2245, %v2475
      %v2594 = vadd.f32 %v2250, %v2480
      %v2595 = vadd.f32 %v2255, %v2485
      %v2596 = vadd.f32 %v2260, %v2490
      %v2597 = vadd.f32 %v2265, %v2495
      %v2598 = vadd.f32 %v2270, %v2500
      %v2599 = vadd.f32 %v2275, %v2505
      %v2600 = vadd.f32 %v2280, %v2510
      %v2601 = vadd.f32 %v2285, %v2515
      %v2602 = vadd.f32 %v2290, %v2520
      %v2603 = vadd.f32 %v2295, %v2525
      %v2604 = vadd.f32 %v2300, %v2530
      %v2605 = vadd.f32 %v2305, %v2535
      %v2606 = vadd.f32 %v2310, %v2540
      %v2607 = vadd.f32 %v2315, %v2545
      %v2608 = vadd.f32 %v2320, %v2550
      %v2609 = vadd.f32 %v2325, %v2555
      %v2610 = vadd.f32 %v2330, %v2560
      %v2611 = vadd.f32 %v2335, %v2565
      %v2612 = vadd.f32 %v2340, %v2570
      %v2613 = vadd.f32 %v2345, %v2575
      %v2614 = vadd.f32 %v2350, %v2580
      %s2615 = scalar_lea.vmem %s210, 28
      %v2616 = vld [vmem:[%s2615] sm:$0xf]
      %v2617 = vsel %vm641, %v621, 0
      %v2619 = vsel %vm641, %v623, 0
      %v2622 = vsel %vm706, %v2616, 0
      %2624 = vmatprep.subr.mxu0 0.0
      %2625 = vmatpush1.msra.mxu0 %v2622
      %2626 = vmatprep.subr.mxu0 0.0
      %2627 = vmatpush1.msra.mxu0 0.0
      %2628 = vmatprep.subr.mxu0 0.0
      %2629 = vmatpush1.msra.mxu0 0.0
      %2630 = vmatprep.subr.mxu0 0.0
      %2631 = vmatpush1.msra.mxu0 0.0
      %2632 = vmatprep.subr.mxu0 0.0
      %2633 = vmatpush1.msra.mxu0 0.0
      %2634 = vmatprep.subr.mxu0 0.0
      %2635 = vmatpush1.msra.mxu0 0.0
      %2636 = vmatprep.subr.mxu0 0.0
      %2637 = vmatpush1.msra.mxu0 0.0
      %2638 = vmatprep.subr.mxu0 0.0
      %2639 = vmatpush1.msra.mxu0 0.0
      %2640 = vmatprep.subr.mxu0 0.0
      %2641 = vmatpush1.msra.mxu0 0.0
      %2642 = vmatprep.subr.mxu0 0.0
      %2643 = vmatpush1.msra.mxu0 0.0
      %2644 = vmatprep.subr.mxu0 0.0
      %2645 = vmatpush1.msra.mxu0 0.0
      %2646 = vmatprep.subr.mxu0 0.0
      %2647 = vmatpush1.msra.mxu0 0.0
      %2648 = vmatprep.subr.mxu0 0.0
      %2649 = vmatpush1.msra.mxu0 0.0
      %2650 = vmatprep.subr.mxu0 0.0
      %2651 = vmatpush1.msra.mxu0 0.0
      %2652 = vmatprep.subr.mxu0 0.0
      %2653 = vmatpush1.msra.mxu0 0.0
      %2654 = vmatprep.subr.mxu0 0.0
      %2655 = vmatpush1.msra.mxu0 0.0
      %2656 = vmatprep.subr.mxu0 0.0
      %2657 = vmatpush1.msra.mxu0 0.0
      %2658 = vmatprep.subr.mxu0 0.0
      %2659 = vmatpush1.msra.mxu0 0.0
      %2660 = vmatprep.subr.mxu0 0.0
      %2661 = vmatpush1.msra.mxu0 0.0
      %2662 = vmatprep.subr.mxu0 0.0
      %2663 = vmatpush1.msra.mxu0 0.0
      %2664 = vmatprep.subr.mxu0 0.0
      %2665 = vmatpush1.msra.mxu0 0.0
      %2666 = vmatprep.subr.mxu0 0.0
      %2667 = vmatpush1.msra.mxu0 0.0
      %2668 = vmatprep.subr.mxu0 0.0
      %2669 = vmatpush1.msra.mxu0 0.0
      %2670 = vmatprep.subr.mxu0 0.0
      %2671 = vmatpush1.msra.mxu0 0.0
      %2672 = vmatprep.subr.mxu0 0.0
      %2673 = vmatpush1.msra.mxu0 0.0
      %2674 = vmatprep.subr.mxu0 0.0
      %2675 = vmatpush1.msra.mxu0 0.0
      %2676 = vmatprep.subr.mxu0 0.0
      %2677 = vmatpush1.msra.mxu0 0.0
      %2678 = vmatprep.subr.mxu0 0.0
      %2679 = vmatpush1.msra.mxu0 0.0
      %2680 = vmatprep.subr.mxu0 0.0
      %2681 = vmatpush1.msra.mxu0 0.0
      %2682 = vmatprep.subr.mxu0 0.0
      %2683 = vmatpush1.msra.mxu0 0.0
      %2684 = vmatprep.subr.mxu0 0.0
      %2685 = vmatpush1.msra.mxu0 0.0
      %2686 = vmatprep.subr.mxu0 0.0
      %2687 = vmatpush1.msra.mxu0 0.0
      %2688 = vmatprep.mubr.f32.mxu0 0.0
      %2689 = vmatmul.mubr.f32.gmra.mrb[0].mxu0 %v1837
      %v2690 = vpop.f32.mrb[0].mxu0
      %v2691 = vadd.f32 0.0, %v2690
      %v2692 = vpop.f32.mrb[0].mxu0
      %2693 = vmatprep.mubr.f32.mxu0 0.0
      %2694 = vmatmul.mubr.f32.gmra.mrb[0].mxu0 %v1839
      %v2695 = vpop.f32.mrb[0].mxu0
      %v2696 = vadd.f32 0.0, %v2695
      %v2697 = vpop.f32.mrb[0].mxu0
      %2698 = vmatprep.mubr.f32.mxu0 0.0
      %2699 = vmatmul.mubr.f32.gmra.mrb[0].mxu0 %v1841
      %v2700 = vpop.f32.mrb[0].mxu0
      %v2701 = vadd.f32 0.0, %v2700
      %v2702 = vpop.f32.mrb[0].mxu0
      %2703 = vmatprep.mubr.f32.mxu0 0.0
      %2704 = vmatmul.mubr.f32.gmra.mrb[0].mxu0 %v1843
      %v2705 = vpop.f32.mrb[0].mxu0
      %v2706 = vadd.f32 0.0, %v2705
      %v2707 = vpop.f32.mrb[0].mxu0
      %2708 = vmatprep.mubr.f32.mxu0 0.0
      %2709 = vmatmul.mubr.f32.gmra.mrb[0].mxu0 %v1845
      %v2710 = vpop.f32.mrb[0].mxu0
      %v2711 = vadd.f32 0.0, %v2710
      %v2712 = vpop.f32.mrb[0].mxu0
      %2713 = vmatprep.mubr.f32.mxu0 0.0
      %2714 = vmatmul.mubr.f32.gmra.mrb[0].mxu0 %v1847
      %v2715 = vpop.f32.mrb[0].mxu0
      %v2716 = vadd.f32 0.0, %v2715
      %v2717 = vpop.f32.mrb[0].mxu0
      %2718 = vmatprep.mubr.f32.mxu0 0.0
      %2719 = vmatmul.mubr.f32.gmra.mrb[0].mxu0 %v1849
      %v2720 = vpop.f32.mrb[0].mxu0
      %v2721 = vadd.f32 0.0, %v2720
      %v2722 = vpop.f32.mrb[0].mxu0
      %2723 = vmatprep.mubr.f32.mxu0 0.0
      %2724 = vmatmul.mubr.f32.gmra.mrb[0].mxu0 %v1851
      %v2725 = vpop.f32.mrb[0].mxu0
      %v2726 = vadd.f32 0.0, %v2725
      %v2727 = vpop.f32.mrb[0].mxu0
      %2728 = vmatprep.mubr.f32.mxu0 0.0
      %2729 = vmatmul.mubr.f32.gmra.mrb[0].mxu0 %v1853
      %v2730 = vpop.f32.mrb[0].mxu0
      %v2731 = vadd.f32 0.0, %v2730
      %v2732 = vpop.f32.mrb[0].mxu0
      %2733 = vmatprep.mubr.f32.mxu0 0.0
      %2734 = vmatmul.mubr.f32.gmra.mrb[0].mxu0 %v1855
      %v2735 = vpop.f32.mrb[0].mxu0
      %v2736 = vadd.f32 0.0, %v2735
      %v2737 = vpop.f32.mrb[0].mxu0
      %2738 = vmatprep.mubr.f32.mxu0 0.0
      %2739 = vmatmul.mubr.f32.gmra.mrb[0].mxu0 %v1857
      %v2740 = vpop.f32.mrb[0].mxu0
      %v2741 = vadd.f32 0.0, %v2740
      %v2742 = vpop.f32.mrb[0].mxu0
      %2743 = vmatprep.mubr.f32.mxu0 0.0
      %2744 = vmatmul.mubr.f32.gmra.mrb[0].mxu0 %v1859
      %v2745 = vpop.f32.mrb[0].mxu0
      %v2746 = vadd.f32 0.0, %v2745
      %v2747 = vpop.f32.mrb[0].mxu0
      %2748 = vmatprep.mubr.f32.mxu0 0.0
      %2749 = vmatmul.mubr.f32.gmra.mrb[0].mxu0 %v1861
      %v2750 = vpop.f32.mrb[0].mxu0
      %v2751 = vadd.f32 0.0, %v2750
      %v2752 = vpop.f32.mrb[0].mxu0
      %2753 = vmatprep.mubr.f32.mxu0 0.0
      %2754 = vmatmul.mubr.f32.gmra.mrb[0].mxu0 %v1863
      %v2755 = vpop.f32.mrb[0].mxu0
      %v2756 = vadd.f32 0.0, %v2755
      %v2757 = vpop.f32.mrb[0].mxu0
      %2758 = vmatprep.mubr.f32.mxu0 0.0
      %2759 = vmatmul.mubr.f32.gmra.mrb[0].mxu0 %v1865
      %v2760 = vpop.f32.mrb[0].mxu0
      %v2761 = vadd.f32 0.0, %v2760
      %v2762 = vpop.f32.mrb[0].mxu0
      %2763 = vmatprep.mubr.f32.mxu0 0.0
      %2764 = vmatmul.mubr.f32.gmra.mrb[0].mxu0 %v1867
      %v2765 = vpop.f32.mrb[0].mxu0
      %v2766 = vadd.f32 0.0, %v2765
      %v2767 = vpop.f32.mrb[0].mxu0
      %2768 = vmatprep.mubr.f32.mxu0 0.0
      %2769 = vmatmul.mubr.f32.gmra.mrb[0].mxu0 %v1869
      %v2770 = vpop.f32.mrb[0].mxu0
      %v2771 = vadd.f32 0.0, %v2770
      %v2772 = vpop.f32.mrb[0].mxu0
      %2773 = vmatprep.mubr.f32.mxu0 0.0
      %2774 = vmatmul.mubr.f32.gmra.mrb[0].mxu0 %v1871
      %v2775 = vpop.f32.mrb[0].mxu0
      %v2776 = vadd.f32 0.0, %v2775
      %v2777 = vpop.f32.mrb[0].mxu0
      %2778 = vmatprep.mubr.f32.mxu0 0.0
      %2779 = vmatmul.mubr.f32.gmra.mrb[0].mxu0 %v1873
      %v2780 = vpop.f32.mrb[0].mxu0
      %v2781 = vadd.f32 0.0, %v2780
      %v2782 = vpop.f32.mrb[0].mxu0
      %2783 = vmatprep.mubr.f32.mxu0 0.0
      %2784 = vmatmul.mubr.f32.gmra.mrb[0].mxu0 %v1875
      %v2785 = vpop.f32.mrb[0].mxu0
      %v2786 = vadd.f32 0.0, %v2785
      %v2787 = vpop.f32.mrb[0].mxu0
      %2788 = vmatprep.mubr.f32.mxu0 0.0
      %2789 = vmatmul.mubr.f32.gmra.mrb[0].mxu0 %v1877
      %v2790 = vpop.f32.mrb[0].mxu0
      %v2791 = vadd.f32 0.0, %v2790
      %v2792 = vpop.f32.mrb[0].mxu0
      %2793 = vmatprep.mubr.f32.mxu0 0.0
      %2794 = vmatmul.mubr.f32.gmra.mrb[0].mxu0 %v1879
      %v2795 = vpop.f32.mrb[0].mxu0
      %v2796 = vadd.f32 0.0, %v2795
      %v2797 = vpop.f32.mrb[0].mxu0
      %2798 = vmatprep.mubr.f32.mxu0 0.0
      %2799 = vmatmul.mubr.f32.gmra.mrb[0].mxu0 %v1881
      %v2800 = vpop.f32.mrb[0].mxu0
      %v2801 = vadd.f32 0.0, %v2800
      %v2802 = vpop.f32.mrb[0].mxu0
      %2803 = vmatprep.mubr.f32.mxu0 0.0
      %2804 = vmatmul.mubr.f32.gmra.mrb[0].mxu0 %v1883
      %v2805 = vpop.f32.mrb[0].mxu0
      %v2806 = vadd.f32 0.0, %v2805
      %v2807 = vpop.f32.mrb[0].mxu0
      %2808 = vmatprep.mubr.f32.mxu0 0.0
      %2809 = vmatmul.mubr.f32.gmra.mrb[0].mxu0 %v1885
      %v2810 = vpop.f32.mrb[0].mxu0
      %v2811 = vadd.f32 0.0, %v2810
      %v2812 = vpop.f32.mrb[0].mxu0
      %2813 = vmatprep.mubr.f32.mxu0 0.0
      %2814 = vmatmul.mubr.f32.gmra.mrb[0].mxu0 %v1887
      %v2815 = vpop.f32.mrb[0].mxu0
      %v2816 = vadd.f32 0.0, %v2815
      %v2817 = vpop.f32.mrb[0].mxu0
      %2818 = vmatprep.mubr.f32.mxu0 0.0
      %2819 = vmatmul.mubr.f32.gmra.mrb[0].mxu0 %v1889
      %v2820 = vpop.f32.mrb[0].mxu0
      %v2821 = vadd.f32 0.0, %v2820
      %v2822 = vpop.f32.mrb[0].mxu0
      %2823 = vmatprep.mubr.f32.mxu0 0.0
      %2824 = vmatmul.mubr.f32.gmra.mrb[0].mxu0 %v1891
      %v2825 = vpop.f32.mrb[0].mxu0
      %v2826 = vadd.f32 0.0, %v2825
      %v2827 = vpop.f32.mrb[0].mxu0
      %2828 = vmatprep.mubr.f32.mxu0 0.0
      %2829 = vmatmul.mubr.f32.gmra.mrb[0].mxu0 %v1893
      %v2830 = vpop.f32.mrb[0].mxu0
      %v2831 = vadd.f32 0.0, %v2830
      %v2832 = vpop.f32.mrb[0].mxu0
      %2833 = vmatprep.mubr.f32.mxu0 0.0
      %2834 = vmatmul.mubr.f32.gmra.mrb[0].mxu0 %v1895
      %v2835 = vpop.f32.mrb[0].mxu0
      %v2836 = vadd.f32 0.0, %v2835
      %v2837 = vpop.f32.mrb[0].mxu0
      %2838 = vmatprep.mubr.f32.mxu0 0.0
      %2839 = vmatmul.mubr.f32.gmra.mrb[0].mxu0 %v2617
      %v2840 = vpop.f32.mrb[0].mxu0
      %v2841 = vadd.f32 0.0, %v2840
      %v2842 = vpop.f32.mrb[0].mxu0
      %2843 = vmatprep.mubr.f32.mxu0 0.0
      %2844 = vmatmul.mubr.f32.gmra.mrb[0].mxu0 %v2619
      %v2845 = vpop.f32.mrb[0].mxu0
      %v2846 = vadd.f32 0.0, %v2845
      %v2847 = vpop.f32.mrb[0].mxu0
      %2848 = vdwg.mxu0
      %v2849 = vadd.f32 %v2583, %v2691
      %v2850 = vadd.f32 %v2584, %v2696
      %v2851 = vadd.f32 %v2585, %v2701
      %v2852 = vadd.f32 %v2586, %v2706
      %v2853 = vadd.f32 %v2587, %v2711
      %v2854 = vadd.f32 %v2588, %v2716
      %v2855 = vadd.f32 %v2589, %v2721
      %v2856 = vadd.f32 %v2590, %v2726
      %v2857 = vadd.f32 %v2591, %v2731
      %v2858 = vadd.f32 %v2592, %v2736
      %v2859 = vadd.f32 %v2593, %v2741
      %v2860 = vadd.f32 %v2594, %v2746
      %v2861 = vadd.f32 %v2595, %v2751
      %v2862 = vadd.f32 %v2596, %v2756
      %v2863 = vadd.f32 %v2597, %v2761
      %v2864 = vadd.f32 %v2598, %v2766
      %v2865 = vadd.f32 %v2599, %v2771
      %v2866 = vadd.f32 %v2600, %v2776
      %v2867 = vadd.f32 %v2601, %v2781
      %v2868 = vadd.f32 %v2602, %v2786
      %v2869 = vadd.f32 %v2603, %v2791
      %v2870 = vadd.f32 %v2604, %v2796
      %v2871 = vadd.f32 %v2605, %v2801
      %v2872 = vadd.f32 %v2606, %v2806
      %v2873 = vadd.f32 %v2607, %v2811
      %v2874 = vadd.f32 %v2608, %v2816
      %v2875 = vadd.f32 %v2609, %v2821
      %v2876 = vadd.f32 %v2610, %v2826
      %v2877 = vadd.f32 %v2611, %v2831
      %v2878 = vadd.f32 %v2612, %v2836
      %v2879 = vadd.f32 %v2613, %v2841
      %v2880 = vadd.f32 %v2614, %v2846
      %v2881 = vadd.f32 %v2849, %v1763
      %v2882 = vadd.f32 %v2850, %v1763
      %v2883 = vadd.f32 %v2851, %v1763
      %v2884 = vadd.f32 %v2852, %v1763
      %v2885 = vadd.f32 %v2853, %v1763
      %v2886 = vadd.f32 %v2854, %v1763
      %v2887 = vadd.f32 %v2855, %v1763
      %v2888 = vadd.f32 %v2856, %v1763
      %v2889 = vadd.f32 %v2857, %v1763
      %v2890 = vadd.f32 %v2858, %v1763
      %v2891 = vadd.f32 %v2859, %v1763
      %v2892 = vadd.f32 %v2860, %v1763
      %v2893 = vadd.f32 %v2861, %v1763
      %v2894 = vadd.f32 %v2862, %v1763
      %v2895 = vadd.f32 %v2863, %v1763
      %v2896 = vadd.f32 %v2864, %v1763
      %v2897 = vadd.f32 %v2865, %v1763
      %v2898 = vadd.f32 %v2866, %v1763
      %v2899 = vadd.f32 %v2867, %v1763
      %v2900 = vadd.f32 %v2868, %v1763
      %v2901 = vadd.f32 %v2869, %v1763
      %v2902 = vadd.f32 %v2870, %v1763
      %v2903 = vadd.f32 %v2871, %v1763
      %v2904 = vadd.f32 %v2872, %v1763
      %v2905 = vadd.f32 %v2873, %v1763
      %v2906 = vadd.f32 %v2874, %v1763
      %v2907 = vadd.f32 %v2875, %v1763
      %v2908 = vadd.f32 %v2876, %v1763
      %v2909 = vadd.f32 %v2877, %v1763
      %v2910 = vadd.f32 %v2878, %v1763
      %v2911 = vadd.f32 %v2879, %v1763
      %v2912 = vadd.f32 %v2880, %v1763
      %s2913 = scalar_lea.vmem %s221, 256
      %2914 = vst.msk [vmem:[%s2913] sm:$0xff] %vm641, %v2881
      %2915 = vst.msk [vmem:[%s2913 + $0x8] sm:$0xff] %vm641, %v2882
      %2916 = vst.msk [vmem:[%s2913 + $0x10] sm:$0xff] %vm641, %v2883
      %2917 = vst.msk [vmem:[%s2913 + $0x18] sm:$0xff] %vm641, %v2884
      %2918 = vst.msk [vmem:[%s2913 + $0x20] sm:$0xff] %vm641, %v2885
      %2919 = vst.msk [vmem:[%s2913 + $0x28] sm:$0xff] %vm641, %v2886
      %2920 = vst.msk [vmem:[%s2913 + $0x30] sm:$0xff] %vm641, %v2887
      %2921 = vst.msk [vmem:[%s2913 + $0x38] sm:$0xff] %vm641, %v2888
      %2922 = vst.msk [vmem:[%s2913 + $0x40] sm:$0xff] %vm641, %v2889
      %2923 = vst.msk [vmem:[%s2913 + $0x48] sm:$0xff] %vm641, %v2890
      %2924 = vst.msk [vmem:[%s2913 + $0x50] sm:$0xff] %vm641, %v2891
      %2925 = vst.msk [vmem:[%s2913 + $0x58] sm:$0xff] %vm641, %v2892
      %2926 = vst.msk [vmem:[%s2913 + $0x60] sm:$0xff] %vm641, %v2893
      %2927 = vst.msk [vmem:[%s2913 + $0x68] sm:$0xff] %vm641, %v2894
      %2928 = vst.msk [vmem:[%s2913 + $0x70] sm:$0xff] %vm641, %v2895
      %2929 = vst.msk [vmem:[%s2913 + $0x78] sm:$0xff] %vm641, %v2896
      %2930 = vst.msk [vmem:[%s2913 + $0x80] sm:$0xff] %vm641, %v2897
      %2931 = vst.msk [vmem:[%s2913 + $0x88] sm:$0xff] %vm641, %v2898
      %2932 = vst.msk [vmem:[%s2913 + $0x90] sm:$0xff] %vm641, %v2899
      %2933 = vst.msk [vmem:[%s2913 + $0x98] sm:$0xff] %vm641, %v2900
      %2934 = vst.msk [vmem:[%s2913 + $0xa0] sm:$0xff] %vm641, %v2901
      %2935 = vst.msk [vmem:[%s2913 + $0xa8] sm:$0xff] %vm641, %v2902
      %2936 = vst.msk [vmem:[%s2913 + $0xb0] sm:$0xff] %vm641, %v2903
      %2937 = vst.msk [vmem:[%s2913 + $0xb8] sm:$0xff] %vm641, %v2904
      %2938 = vst.msk [vmem:[%s2913 + $0xc0] sm:$0xff] %vm641, %v2905
      %2939 = vst.msk [vmem:[%s2913 + $0xc8] sm:$0xff] %vm641, %v2906
      %2940 = vst.msk [vmem:[%s2913 + $0xd0] sm:$0xff] %vm641, %v2907
      %2941 = vst.msk [vmem:[%s2913 + $0xd8] sm:$0xff] %vm641, %v2908
      %2942 = vst.msk [vmem:[%s2913 + $0xe0] sm:$0xff] %vm641, %v2909
      %2943 = vst.msk [vmem:[%s2913 + $0xe8] sm:$0xff] %vm641, %v2910
      %2944 = vst.msk [vmem:[%s2913 + $0xf0] sm:$0xff] %vm641, %v2911
      %2945 = vst.msk [vmem:[%s2913 + $0xf8] sm:$0xff] %vm641, %v2912
      %s2946 = scalar_lea.vmem %s210, 32
      %v2947 = vld [vmem:[%s2946] sm:$0xf]
      %s2948 = scalar_lea.vmem %s210, 36
      %v2949 = vld [vmem:[%s2948] sm:$0xf]
      %v2951 = vsel %vm706, %v2949, 0
      %2953 = vmatprep.subr.mxu0 0.0
      %2954 = vmatpush1.msra.mxu0 %v2951
      %2955 = vmatprep.subr.mxu0 0.0
      %2956 = vmatpush1.msra.mxu0 0.0
      %2957 = vmatprep.subr.mxu0 0.0
      %2958 = vmatpush1.msra.mxu0 0.0
      %2959 = vmatprep.subr.mxu0 0.0
      %2960 = vmatpush1.msra.mxu0 0.0
      %2961 = vmatprep.subr.mxu0 0.0
      %2962 = vmatpush1.msra.mxu0 0.0
      %2963 = vmatprep.subr.mxu0 0.0
      %2964 = vmatpush1.msra.mxu0 0.0
      %2965 = vmatprep.subr.mxu0 0.0
      %2966 = vmatpush1.msra.mxu0 0.0
      %2967 = vmatprep.subr.mxu0 0.0
      %2968 = vmatpush1.msra.mxu0 0.0
      %2969 = vmatprep.subr.mxu0 0.0
      %2970 = vmatpush1.msra.mxu0 0.0
      %2971 = vmatprep.subr.mxu0 0.0
      %2972 = vmatpush1.msra.mxu0 0.0
      %2973 = vmatprep.subr.mxu0 0.0
      %2974 = vmatpush1.msra.mxu0 0.0
      %2975 = vmatprep.subr.mxu0 0.0
      %2976 = vmatpush1.msra.mxu0 0.0
      %2977 = vmatprep.subr.mxu0 0.0
      %2978 = vmatpush1.msra.mxu0 0.0
      %2979 = vmatprep.subr.mxu0 0.0
      %2980 = vmatpush1.msra.mxu0 0.0
      %2981 = vmatprep.subr.mxu0 0.0
      %2982 = vmatpush1.msra.mxu0 0.0
      %2983 = vmatprep.subr.mxu0 0.0
      %2984 = vmatpush1.msra.mxu0 0.0
      %2985 = vmatprep.subr.mxu0 0.0
      %2986 = vmatpush1.msra.mxu0 0.0
      %2987 = vmatprep.subr.mxu0 0.0
      %2988 = vmatpush1.msra.mxu0 0.0
      %2989 = vmatprep.subr.mxu0 0.0
      %2990 = vmatpush1.msra.mxu0 0.0
      %2991 = vmatprep.subr.mxu0 0.0
      %2992 = vmatpush1.msra.mxu0 0.0
      %2993 = vmatprep.subr.mxu0 0.0
      %2994 = vmatpush1.msra.mxu0 0.0
      %2995 = vmatprep.subr.mxu0 0.0
      %2996 = vmatpush1.msra.mxu0 0.0
      %2997 = vmatprep.subr.mxu0 0.0
      %2998 = vmatpush1.msra.mxu0 0.0
      %2999 = vmatprep.subr.mxu0 0.0
      %3000 = vmatpush1.msra.mxu0 0.0
      %3001 = vmatprep.subr.mxu0 0.0
      %3002 = vmatpush1.msra.mxu0 0.0
      %3003 = vmatprep.subr.mxu0 0.0
      %3004 = vmatpush1.msra.mxu0 0.0
      %3005 = vmatprep.subr.mxu0 0.0
      %3006 = vmatpush1.msra.mxu0 0.0
      %3007 = vmatprep.subr.mxu0 0.0
      %3008 = vmatpush1.msra.mxu0 0.0
      %3009 = vmatprep.subr.mxu0 0.0
      %3010 = vmatpush1.msra.mxu0 0.0
      %3011 = vmatprep.subr.mxu0 0.0
      %3012 = vmatpush1.msra.mxu0 0.0
      %3013 = vmatprep.subr.mxu0 0.0
      %3014 = vmatpush1.msra.mxu0 0.0
      %3015 = vmatprep.subr.mxu0 0.0
      %3016 = vmatpush1.msra.mxu0 0.0
      %3017 = vmatprep.mubr.f32.mxu0 0.0
      %3018 = vmatmul.mubr.f32.gmra.mrb[0].mxu0 %v646
      %v3019 = vpop.f32.mrb[0].mxu0
      %v3020 = vadd.f32 0.0, %v3019
      %v3021 = vpop.f32.mrb[0].mxu0
      %3022 = vmatprep.mubr.f32.mxu0 0.0
      %3023 = vmatmul.mubr.f32.gmra.mrb[0].mxu0 %v648
      %v3024 = vpop.f32.mrb[0].mxu0
      %v3025 = vadd.f32 0.0, %v3024
      %v3026 = vpop.f32.mrb[0].mxu0
      %3027 = vmatprep.mubr.f32.mxu0 0.0
      %3028 = vmatmul.mubr.f32.gmra.mrb[0].mxu0 %v650
      %v3029 = vpop.f32.mrb[0].mxu0
      %v3030 = vadd.f32 0.0, %v3029
      %v3031 = vpop.f32.mrb[0].mxu0
      %3032 = vmatprep.mubr.f32.mxu0 0.0
      %3033 = vmatmul.mubr.f32.gmra.mrb[0].mxu0 %v652
      %v3034 = vpop.f32.mrb[0].mxu0
      %v3035 = vadd.f32 0.0, %v3034
      %v3036 = vpop.f32.mrb[0].mxu0
      %3037 = vmatprep.mubr.f32.mxu0 0.0
      %3038 = vmatmul.mubr.f32.gmra.mrb[0].mxu0 %v654
      %v3039 = vpop.f32.mrb[0].mxu0
      %v3040 = vadd.f32 0.0, %v3039
      %v3041 = vpop.f32.mrb[0].mxu0
      %3042 = vmatprep.mubr.f32.mxu0 0.0
      %3043 = vmatmul.mubr.f32.gmra.mrb[0].mxu0 %v656
      %v3044 = vpop.f32.mrb[0].mxu0
      %v3045 = vadd.f32 0.0, %v3044
      %v3046 = vpop.f32.mrb[0].mxu0
      %3047 = vmatprep.mubr.f32.mxu0 0.0
      %3048 = vmatmul.mubr.f32.gmra.mrb[0].mxu0 %v658
      %v3049 = vpop.f32.mrb[0].mxu0
      %v3050 = vadd.f32 0.0, %v3049
      %v3051 = vpop.f32.mrb[0].mxu0
      %3052 = vmatprep.mubr.f32.mxu0 0.0
      %3053 = vmatmul.mubr.f32.gmra.mrb[0].mxu0 %v660
      %v3054 = vpop.f32.mrb[0].mxu0
      %v3055 = vadd.f32 0.0, %v3054
      %v3056 = vpop.f32.mrb[0].mxu0
      %3057 = vmatprep.mubr.f32.mxu0 0.0
      %3058 = vmatmul.mubr.f32.gmra.mrb[0].mxu0 %v662
      %v3059 = vpop.f32.mrb[0].mxu0
      %v3060 = vadd.f32 0.0, %v3059
      %v3061 = vpop.f32.mrb[0].mxu0
      %3062 = vmatprep.mubr.f32.mxu0 0.0
      %3063 = vmatmul.mubr.f32.gmra.mrb[0].mxu0 %v664
      %v3064 = vpop.f32.mrb[0].mxu0
      %v3065 = vadd.f32 0.0, %v3064
      %v3066 = vpop.f32.mrb[0].mxu0
      %3067 = vmatprep.mubr.f32.mxu0 0.0
      %3068 = vmatmul.mubr.f32.gmra.mrb[0].mxu0 %v666
      %v3069 = vpop.f32.mrb[0].mxu0
      %v3070 = vadd.f32 0.0, %v3069
      %v3071 = vpop.f32.mrb[0].mxu0
      %3072 = vmatprep.mubr.f32.mxu0 0.0
      %3073 = vmatmul.mubr.f32.gmra.mrb[0].mxu0 %v668
      %v3074 = vpop.f32.mrb[0].mxu0
      %v3075 = vadd.f32 0.0, %v3074
      %v3076 = vpop.f32.mrb[0].mxu0
      %3077 = vmatprep.mubr.f32.mxu0 0.0
      %3078 = vmatmul.mubr.f32.gmra.mrb[0].mxu0 %v670
      %v3079 = vpop.f32.mrb[0].mxu0
      %v3080 = vadd.f32 0.0, %v3079
      %v3081 = vpop.f32.mrb[0].mxu0
      %3082 = vmatprep.mubr.f32.mxu0 0.0
      %3083 = vmatmul.mubr.f32.gmra.mrb[0].mxu0 %v672
      %v3084 = vpop.f32.mrb[0].mxu0
      %v3085 = vadd.f32 0.0, %v3084
      %v3086 = vpop.f32.mrb[0].mxu0
      %3087 = vmatprep.mubr.f32.mxu0 0.0
      %3088 = vmatmul.mubr.f32.gmra.mrb[0].mxu0 %v674
      %v3089 = vpop.f32.mrb[0].mxu0
      %v3090 = vadd.f32 0.0, %v3089
      %v3091 = vpop.f32.mrb[0].mxu0
      %3092 = vmatprep.mubr.f32.mxu0 0.0
      %3093 = vmatmul.mubr.f32.gmra.mrb[0].mxu0 %v676
      %v3094 = vpop.f32.mrb[0].mxu0
      %v3095 = vadd.f32 0.0, %v3094
      %v3096 = vpop.f32.mrb[0].mxu0
      %3097 = vmatprep.mubr.f32.mxu0 0.0
      %3098 = vmatmul.mubr.f32.gmra.mrb[0].mxu0 %v678
      %v3099 = vpop.f32.mrb[0].mxu0
      %v3100 = vadd.f32 0.0, %v3099
      %v3101 = vpop.f32.mrb[0].mxu0
      %3102 = vmatprep.mubr.f32.mxu0 0.0
      %3103 = vmatmul.mubr.f32.gmra.mrb[0].mxu0 %v680
      %v3104 = vpop.f32.mrb[0].mxu0
      %v3105 = vadd.f32 0.0, %v3104
      %v3106 = vpop.f32.mrb[0].mxu0
      %3107 = vmatprep.mubr.f32.mxu0 0.0
      %3108 = vmatmul.mubr.f32.gmra.mrb[0].mxu0 %v682
      %v3109 = vpop.f32.mrb[0].mxu0
      %v3110 = vadd.f32 0.0, %v3109
      %v3111 = vpop.f32.mrb[0].mxu0
      %3112 = vmatprep.mubr.f32.mxu0 0.0
      %3113 = vmatmul.mubr.f32.gmra.mrb[0].mxu0 %v684
      %v3114 = vpop.f32.mrb[0].mxu0
      %v3115 = vadd.f32 0.0, %v3114
      %v3116 = vpop.f32.mrb[0].mxu0
      %3117 = vmatprep.mubr.f32.mxu0 0.0
      %3118 = vmatmul.mubr.f32.gmra.mrb[0].mxu0 %v686
      %v3119 = vpop.f32.mrb[0].mxu0
      %v3120 = vadd.f32 0.0, %v3119
      %v3121 = vpop.f32.mrb[0].mxu0
      %3122 = vmatprep.mubr.f32.mxu0 0.0
      %3123 = vmatmul.mubr.f32.gmra.mrb[0].mxu0 %v688
      %v3124 = vpop.f32.mrb[0].mxu0
      %v3125 = vadd.f32 0.0, %v3124
      %v3126 = vpop.f32.mrb[0].mxu0
      %3127 = vmatprep.mubr.f32.mxu0 0.0
      %3128 = vmatmul.mubr.f32.gmra.mrb[0].mxu0 %v690
      %v3129 = vpop.f32.mrb[0].mxu0
      %v3130 = vadd.f32 0.0, %v3129
      %v3131 = vpop.f32.mrb[0].mxu0
      %3132 = vmatprep.mubr.f32.mxu0 0.0
      %3133 = vmatmul.mubr.f32.gmra.mrb[0].mxu0 %v692
      %v3134 = vpop.f32.mrb[0].mxu0
      %v3135 = vadd.f32 0.0, %v3134
      %v3136 = vpop.f32.mrb[0].mxu0
      %3137 = vmatprep.mubr.f32.mxu0 0.0
      %3138 = vmatmul.mubr.f32.gmra.mrb[0].mxu0 %v694
      %v3139 = vpop.f32.mrb[0].mxu0
      %v3140 = vadd.f32 0.0, %v3139
      %v3141 = vpop.f32.mrb[0].mxu0
      %3142 = vmatprep.mubr.f32.mxu0 0.0
      %3143 = vmatmul.mubr.f32.gmra.mrb[0].mxu0 %v696
      %v3144 = vpop.f32.mrb[0].mxu0
      %v3145 = vadd.f32 0.0, %v3144
      %v3146 = vpop.f32.mrb[0].mxu0
      %3147 = vmatprep.mubr.f32.mxu0 0.0
      %3148 = vmatmul.mubr.f32.gmra.mrb[0].mxu0 %v698
      %v3149 = vpop.f32.mrb[0].mxu0
      %v3150 = vadd.f32 0.0, %v3149
      %v3151 = vpop.f32.mrb[0].mxu0
      %3152 = vmatprep.mubr.f32.mxu0 0.0
      %3153 = vmatmul.mubr.f32.gmra.mrb[0].mxu0 %v700
      %v3154 = vpop.f32.mrb[0].mxu0
      %v3155 = vadd.f32 0.0, %v3154
      %v3156 = vpop.f32.mrb[0].mxu0
      %3157 = vmatprep.mubr.f32.mxu0 0.0
      %3158 = vmatmul.mubr.f32.gmra.mrb[0].mxu0 %v702
      %v3159 = vpop.f32.mrb[0].mxu0
      %v3160 = vadd.f32 0.0, %v3159
      %v3161 = vpop.f32.mrb[0].mxu0
      %3162 = vmatprep.mubr.f32.mxu0 0.0
      %3163 = vmatmul.mubr.f32.gmra.mrb[0].mxu0 %v704
      %v3164 = vpop.f32.mrb[0].mxu0
      %v3165 = vadd.f32 0.0, %v3164
      %v3166 = vpop.f32.mrb[0].mxu0
      %3167 = vmatprep.mubr.f32.mxu0 0.0
      %3168 = vmatmul.mubr.f32.gmra.mrb[0].mxu0 %v1495
      %v3169 = vpop.f32.mrb[0].mxu0
      %v3170 = vadd.f32 0.0, %v3169
      %v3171 = vpop.f32.mrb[0].mxu0
      %3172 = vmatprep.mubr.f32.mxu0 0.0
      %3173 = vmatmul.mubr.f32.gmra.mrb[0].mxu0 %v1497
      %v3174 = vpop.f32.mrb[0].mxu0
      %v3175 = vadd.f32 0.0, %v3174
      %v3176 = vpop.f32.mrb[0].mxu0
      %3177 = vdwg.mxu0
      %v3179 = vsel %vm706, %v2947, 0
      %3181 = vmatprep.subr.mxu0 0.0
      %3182 = vmatpush1.msra.mxu0 %v3179
      %3183 = vmatprep.subr.mxu0 0.0
      %3184 = vmatpush1.msra.mxu0 0.0
      %3185 = vmatprep.subr.mxu0 0.0
      %3186 = vmatpush1.msra.mxu0 0.0
      %3187 = vmatprep.subr.mxu0 0.0
      %3188 = vmatpush1.msra.mxu0 0.0
      %3189 = vmatprep.subr.mxu0 0.0
      %3190 = vmatpush1.msra.mxu0 0.0
      %3191 = vmatprep.subr.mxu0 0.0
      %3192 = vmatpush1.msra.mxu0 0.0
      %3193 = vmatprep.subr.mxu0 0.0
      %3194 = vmatpush1.msra.mxu0 0.0
      %3195 = vmatprep.subr.mxu0 0.0
      %3196 = vmatpush1.msra.mxu0 0.0
      %3197 = vmatprep.subr.mxu0 0.0
      %3198 = vmatpush1.msra.mxu0 0.0
      %3199 = vmatprep.subr.mxu0 0.0
      %3200 = vmatpush1.msra.mxu0 0.0
      %3201 = vmatprep.subr.mxu0 0.0
      %3202 = vmatpush1.msra.mxu0 0.0
      %3203 = vmatprep.subr.mxu0 0.0
      %3204 = vmatpush1.msra.mxu0 0.0
      %3205 = vmatprep.subr.mxu0 0.0
      %3206 = vmatpush1.msra.mxu0 0.0
      %3207 = vmatprep.subr.mxu0 0.0
      %3208 = vmatpush1.msra.mxu0 0.0
      %3209 = vmatprep.subr.mxu0 0.0
      %3210 = vmatpush1.msra.mxu0 0.0
      %3211 = vmatprep.subr.mxu0 0.0
      %3212 = vmatpush1.msra.mxu0 0.0
      %3213 = vmatprep.subr.mxu0 0.0
      %3214 = vmatpush1.msra.mxu0 0.0
      %3215 = vmatprep.subr.mxu0 0.0
      %3216 = vmatpush1.msra.mxu0 0.0
      %3217 = vmatprep.subr.mxu0 0.0
      %3218 = vmatpush1.msra.mxu0 0.0
      %3219 = vmatprep.subr.mxu0 0.0
      %3220 = vmatpush1.msra.mxu0 0.0
      %3221 = vmatprep.subr.mxu0 0.0
      %3222 = vmatpush1.msra.mxu0 0.0
      %3223 = vmatprep.subr.mxu0 0.0
      %3224 = vmatpush1.msra.mxu0 0.0
      %3225 = vmatprep.subr.mxu0 0.0
      %3226 = vmatpush1.msra.mxu0 0.0
      %3227 = vmatprep.subr.mxu0 0.0
      %3228 = vmatpush1.msra.mxu0 0.0
      %3229 = vmatprep.subr.mxu0 0.0
      %3230 = vmatpush1.msra.mxu0 0.0
      %3231 = vmatprep.subr.mxu0 0.0
      %3232 = vmatpush1.msra.mxu0 0.0
      %3233 = vmatprep.subr.mxu0 0.0
      %3234 = vmatpush1.msra.mxu0 0.0
      %3235 = vmatprep.subr.mxu0 0.0
      %3236 = vmatpush1.msra.mxu0 0.0
      %3237 = vmatprep.subr.mxu0 0.0
      %3238 = vmatpush1.msra.mxu0 0.0
      %3239 = vmatprep.subr.mxu0 0.0
      %3240 = vmatpush1.msra.mxu0 0.0
      %3241 = vmatprep.subr.mxu0 0.0
      %3242 = vmatpush1.msra.mxu0 0.0
      %3243 = vmatprep.subr.mxu0 0.0
      %3244 = vmatpush1.msra.mxu0 0.0
      %3245 = vmatprep.mubr.f32.mxu0 0.0
      %3246 = vmatmul.mubr.f32.gmra.mrb[0].mxu0 %v939
      %v3247 = vpop.f32.mrb[0].mxu0
      %v3248 = vadd.f32 %v3020, %v3247
      %v3249 = vpop.f32.mrb[0].mxu0
      %3250 = vmatprep.mubr.f32.mxu0 0.0
      %3251 = vmatmul.mubr.f32.gmra.mrb[0].mxu0 %v941
      %v3252 = vpop.f32.mrb[0].mxu0
      %v3253 = vadd.f32 %v3025, %v3252
      %v3254 = vpop.f32.mrb[0].mxu0
      %3255 = vmatprep.mubr.f32.mxu0 0.0
      %3256 = vmatmul.mubr.f32.gmra.mrb[0].mxu0 %v943
      %v3257 = vpop.f32.mrb[0].mxu0
      %v3258 = vadd.f32 %v3030, %v3257
      %v3259 = vpop.f32.mrb[0].mxu0
      %3260 = vmatprep.mubr.f32.mxu0 0.0
      %3261 = vmatmul.mubr.f32.gmra.mrb[0].mxu0 %v945
      %v3262 = vpop.f32.mrb[0].mxu0
      %v3263 = vadd.f32 %v3035, %v3262
      %v3264 = vpop.f32.mrb[0].mxu0
      %3265 = vmatprep.mubr.f32.mxu0 0.0
      %3266 = vmatmul.mubr.f32.gmra.mrb[0].mxu0 %v947
      %v3267 = vpop.f32.mrb[0].mxu0
      %v3268 = vadd.f32 %v3040, %v3267
      %v3269 = vpop.f32.mrb[0].mxu0
      %3270 = vmatprep.mubr.f32.mxu0 0.0
      %3271 = vmatmul.mubr.f32.gmra.mrb[0].mxu0 %v949
      %v3272 = vpop.f32.mrb[0].mxu0
      %v3273 = vadd.f32 %v3045, %v3272
      %v3274 = vpop.f32.mrb[0].mxu0
      %3275 = vmatprep.mubr.f32.mxu0 0.0
      %3276 = vmatmul.mubr.f32.gmra.mrb[0].mxu0 %v951
      %v3277 = vpop.f32.mrb[0].mxu0
      %v3278 = vadd.f32 %v3050, %v3277
      %v3279 = vpop.f32.mrb[0].mxu0
      %3280 = vmatprep.mubr.f32.mxu0 0.0
      %3281 = vmatmul.mubr.f32.gmra.mrb[0].mxu0 %v953
      %v3282 = vpop.f32.mrb[0].mxu0
      %v3283 = vadd.f32 %v3055, %v3282
      %v3284 = vpop.f32.mrb[0].mxu0
      %3285 = vmatprep.mubr.f32.mxu0 0.0
      %3286 = vmatmul.mubr.f32.gmra.mrb[0].mxu0 %v955
      %v3287 = vpop.f32.mrb[0].mxu0
      %v3288 = vadd.f32 %v3060, %v3287
      %v3289 = vpop.f32.mrb[0].mxu0
      %3290 = vmatprep.mubr.f32.mxu0 0.0
      %3291 = vmatmul.mubr.f32.gmra.mrb[0].mxu0 %v957
      %v3292 = vpop.f32.mrb[0].mxu0
      %v3293 = vadd.f32 %v3065, %v3292
      %v3294 = vpop.f32.mrb[0].mxu0
      %3295 = vmatprep.mubr.f32.mxu0 0.0
      %3296 = vmatmul.mubr.f32.gmra.mrb[0].mxu0 %v959
      %v3297 = vpop.f32.mrb[0].mxu0
      %v3298 = vadd.f32 %v3070, %v3297
      %v3299 = vpop.f32.mrb[0].mxu0
      %3300 = vmatprep.mubr.f32.mxu0 0.0
      %3301 = vmatmul.mubr.f32.gmra.mrb[0].mxu0 %v961
      %v3302 = vpop.f32.mrb[0].mxu0
      %v3303 = vadd.f32 %v3075, %v3302
      %v3304 = vpop.f32.mrb[0].mxu0
      %3305 = vmatprep.mubr.f32.mxu0 0.0
      %3306 = vmatmul.mubr.f32.gmra.mrb[0].mxu0 %v963
      %v3307 = vpop.f32.mrb[0].mxu0
      %v3308 = vadd.f32 %v3080, %v3307
      %v3309 = vpop.f32.mrb[0].mxu0
      %3310 = vmatprep.mubr.f32.mxu0 0.0
      %3311 = vmatmul.mubr.f32.gmra.mrb[0].mxu0 %v965
      %v3312 = vpop.f32.mrb[0].mxu0
      %v3313 = vadd.f32 %v3085, %v3312
      %v3314 = vpop.f32.mrb[0].mxu0
      %3315 = vmatprep.mubr.f32.mxu0 0.0
      %3316 = vmatmul.mubr.f32.gmra.mrb[0].mxu0 %v967
      %v3317 = vpop.f32.mrb[0].mxu0
      %v3318 = vadd.f32 %v3090, %v3317
      %v3319 = vpop.f32.mrb[0].mxu0
      %3320 = vmatprep.mubr.f32.mxu0 0.0
      %3321 = vmatmul.mubr.f32.gmra.mrb[0].mxu0 %v969
      %v3322 = vpop.f32.mrb[0].mxu0
      %v3323 = vadd.f32 %v3095, %v3322
      %v3324 = vpop.f32.mrb[0].mxu0
      %3325 = vmatprep.mubr.f32.mxu0 0.0
      %3326 = vmatmul.mubr.f32.gmra.mrb[0].mxu0 %v971
      %v3327 = vpop.f32.mrb[0].mxu0
      %v3328 = vadd.f32 %v3100, %v3327
      %v3329 = vpop.f32.mrb[0].mxu0
      %3330 = vmatprep.mubr.f32.mxu0 0.0
      %3331 = vmatmul.mubr.f32.gmra.mrb[0].mxu0 %v973
      %v3332 = vpop.f32.mrb[0].mxu0
      %v3333 = vadd.f32 %v3105, %v3332
      %v3334 = vpop.f32.mrb[0].mxu0
      %3335 = vmatprep.mubr.f32.mxu0 0.0
      %3336 = vmatmul.mubr.f32.gmra.mrb[0].mxu0 %v975
      %v3337 = vpop.f32.mrb[0].mxu0
      %v3338 = vadd.f32 %v3110, %v3337
      %v3339 = vpop.f32.mrb[0].mxu0
      %3340 = vmatprep.mubr.f32.mxu0 0.0
      %3341 = vmatmul.mubr.f32.gmra.mrb[0].mxu0 %v977
      %v3342 = vpop.f32.mrb[0].mxu0
      %v3343 = vadd.f32 %v3115, %v3342
      %v3344 = vpop.f32.mrb[0].mxu0
      %3345 = vmatprep.mubr.f32.mxu0 0.0
      %3346 = vmatmul.mubr.f32.gmra.mrb[0].mxu0 %v979
      %v3347 = vpop.f32.mrb[0].mxu0
      %v3348 = vadd.f32 %v3120, %v3347
      %v3349 = vpop.f32.mrb[0].mxu0
      %3350 = vmatprep.mubr.f32.mxu0 0.0
      %3351 = vmatmul.mubr.f32.gmra.mrb[0].mxu0 %v981
      %v3352 = vpop.f32.mrb[0].mxu0
      %v3353 = vadd.f32 %v3125, %v3352
      %v3354 = vpop.f32.mrb[0].mxu0
      %3355 = vmatprep.mubr.f32.mxu0 0.0
      %3356 = vmatmul.mubr.f32.gmra.mrb[0].mxu0 %v983
      %v3357 = vpop.f32.mrb[0].mxu0
      %v3358 = vadd.f32 %v3130, %v3357
      %v3359 = vpop.f32.mrb[0].mxu0
      %3360 = vmatprep.mubr.f32.mxu0 0.0
      %3361 = vmatmul.mubr.f32.gmra.mrb[0].mxu0 %v985
      %v3362 = vpop.f32.mrb[0].mxu0
      %v3363 = vadd.f32 %v3135, %v3362
      %v3364 = vpop.f32.mrb[0].mxu0
      %3365 = vmatprep.mubr.f32.mxu0 0.0
      %3366 = vmatmul.mubr.f32.gmra.mrb[0].mxu0 %v987
      %v3367 = vpop.f32.mrb[0].mxu0
      %v3368 = vadd.f32 %v3140, %v3367
      %v3369 = vpop.f32.mrb[0].mxu0
      %3370 = vmatprep.mubr.f32.mxu0 0.0
      %3371 = vmatmul.mubr.f32.gmra.mrb[0].mxu0 %v989
      %v3372 = vpop.f32.mrb[0].mxu0
      %v3373 = vadd.f32 %v3145, %v3372
      %v3374 = vpop.f32.mrb[0].mxu0
      %3375 = vmatprep.mubr.f32.mxu0 0.0
      %3376 = vmatmul.mubr.f32.gmra.mrb[0].mxu0 %v991
      %v3377 = vpop.f32.mrb[0].mxu0
      %v3378 = vadd.f32 %v3150, %v3377
      %v3379 = vpop.f32.mrb[0].mxu0
      %3380 = vmatprep.mubr.f32.mxu0 0.0
      %3381 = vmatmul.mubr.f32.gmra.mrb[0].mxu0 %v993
      %v3382 = vpop.f32.mrb[0].mxu0
      %v3383 = vadd.f32 %v3155, %v3382
      %v3384 = vpop.f32.mrb[0].mxu0
      %3385 = vmatprep.mubr.f32.mxu0 0.0
      %3386 = vmatmul.mubr.f32.gmra.mrb[0].mxu0 %v995
      %v3387 = vpop.f32.mrb[0].mxu0
      %v3388 = vadd.f32 %v3160, %v3387
      %v3389 = vpop.f32.mrb[0].mxu0
      %3390 = vmatprep.mubr.f32.mxu0 0.0
      %3391 = vmatmul.mubr.f32.gmra.mrb[0].mxu0 %v997
      %v3392 = vpop.f32.mrb[0].mxu0
      %v3393 = vadd.f32 %v3165, %v3392
      %v3394 = vpop.f32.mrb[0].mxu0
      %3395 = vmatprep.mubr.f32.mxu0 0.0
      %3396 = vmatmul.mubr.f32.gmra.mrb[0].mxu0 %v1229
      %v3397 = vpop.f32.mrb[0].mxu0
      %v3398 = vadd.f32 %v3170, %v3397
      %v3399 = vpop.f32.mrb[0].mxu0
      %3400 = vmatprep.mubr.f32.mxu0 0.0
      %3401 = vmatmul.mubr.f32.gmra.mrb[0].mxu0 %v1231
      %v3402 = vpop.f32.mrb[0].mxu0
      %v3403 = vadd.f32 %v3175, %v3402
      %v3404 = vpop.f32.mrb[0].mxu0
      %3405 = vdwg.mxu0
      %s3406 = scalar_lea.vmem %s210, 40
      %v3407 = vld [vmem:[%s3406] sm:$0xf]
      %v3408 = vsel %vm641, %v398, 0
      %v3410 = vsel %vm641, %v399, 0
      %v3413 = vsel %vm706, %v3407, 0
      %3415 = vmatprep.subr.mxu0 0.0
      %3416 = vmatpush1.msra.mxu0 %v3413
      %3417 = vmatprep.subr.mxu0 0.0
      %3418 = vmatpush1.msra.mxu0 0.0
      %3419 = vmatprep.subr.mxu0 0.0
      %3420 = vmatpush1.msra.mxu0 0.0
      %3421 = vmatprep.subr.mxu0 0.0
      %3422 = vmatpush1.msra.mxu0 0.0
      %3423 = vmatprep.subr.mxu0 0.0
      %3424 = vmatpush1.msra.mxu0 0.0
      %3425 = vmatprep.subr.mxu0 0.0
      %3426 = vmatpush1.msra.mxu0 0.0
      %3427 = vmatprep.subr.mxu0 0.0
      %3428 = vmatpush1.msra.mxu0 0.0
      %3429 = vmatprep.subr.mxu0 0.0
      %3430 = vmatpush1.msra.mxu0 0.0
      %3431 = vmatprep.subr.mxu0 0.0
      %3432 = vmatpush1.msra.mxu0 0.0
      %3433 = vmatprep.subr.mxu0 0.0
      %3434 = vmatpush1.msra.mxu0 0.0
      %3435 = vmatprep.subr.mxu0 0.0
      %3436 = vmatpush1.msra.mxu0 0.0
      %3437 = vmatprep.subr.mxu0 0.0
      %3438 = vmatpush1.msra.mxu0 0.0
      %3439 = vmatprep.subr.mxu0 0.0
      %3440 = vmatpush1.msra.mxu0 0.0
      %3441 = vmatprep.subr.mxu0 0.0
      %3442 = vmatpush1.msra.mxu0 0.0
      %3443 = vmatprep.subr.mxu0 0.0
      %3444 = vmatpush1.msra.mxu0 0.0
      %3445 = vmatprep.subr.mxu0 0.0
      %3446 = vmatpush1.msra.mxu0 0.0
      %3447 = vmatprep.subr.mxu0 0.0
      %3448 = vmatpush1.msra.mxu0 0.0
      %3449 = vmatprep.subr.mxu0 0.0
      %3450 = vmatpush1.msra.mxu0 0.0
      %3451 = vmatprep.subr.mxu0 0.0
      %3452 = vmatpush1.msra.mxu0 0.0
      %3453 = vmatprep.subr.mxu0 0.0
      %3454 = vmatpush1.msra.mxu0 0.0
      %3455 = vmatprep.subr.mxu0 0.0
      %3456 = vmatpush1.msra.mxu0 0.0
      %3457 = vmatprep.subr.mxu0 0.0
      %3458 = vmatpush1.msra.mxu0 0.0
      %3459 = vmatprep.subr.mxu0 0.0
      %3460 = vmatpush1.msra.mxu0 0.0
      %3461 = vmatprep.subr.mxu0 0.0
      %3462 = vmatpush1.msra.mxu0 0.0
      %3463 = vmatprep.subr.mxu0 0.0
      %3464 = vmatpush1.msra.mxu0 0.0
      %3465 = vmatprep.subr.mxu0 0.0
      %3466 = vmatpush1.msra.mxu0 0.0
      %3467 = vmatprep.subr.mxu0 0.0
      %3468 = vmatpush1.msra.mxu0 0.0
      %3469 = vmatprep.subr.mxu0 0.0
      %3470 = vmatpush1.msra.mxu0 0.0
      %3471 = vmatprep.subr.mxu0 0.0
      %3472 = vmatpush1.msra.mxu0 0.0
      %3473 = vmatprep.subr.mxu0 0.0
      %3474 = vmatpush1.msra.mxu0 0.0
      %3475 = vmatprep.subr.mxu0 0.0
      %3476 = vmatpush1.msra.mxu0 0.0
      %3477 = vmatprep.subr.mxu0 0.0
      %3478 = vmatpush1.msra.mxu0 0.0
      %3479 = vmatprep.mubr.f32.mxu0 0.0
      %3480 = vmatmul.mubr.f32.gmra.mrb[0].mxu0 %v943
      %v3481 = vpop.f32.mrb[0].mxu0
      %v3482 = vadd.f32 0.0, %v3481
      %v3483 = vpop.f32.mrb[0].mxu0
      %3484 = vmatprep.mubr.f32.mxu0 0.0
      %3485 = vmatmul.mubr.f32.gmra.mrb[0].mxu0 %v945
      %v3486 = vpop.f32.mrb[0].mxu0
      %v3487 = vadd.f32 0.0, %v3486
      %v3488 = vpop.f32.mrb[0].mxu0
      %3489 = vmatprep.mubr.f32.mxu0 0.0
      %3490 = vmatmul.mubr.f32.gmra.mrb[0].mxu0 %v947
      %v3491 = vpop.f32.mrb[0].mxu0
      %v3492 = vadd.f32 0.0, %v3491
      %v3493 = vpop.f32.mrb[0].mxu0
      %3494 = vmatprep.mubr.f32.mxu0 0.0
      %3495 = vmatmul.mubr.f32.gmra.mrb[0].mxu0 %v949
      %v3496 = vpop.f32.mrb[0].mxu0
      %v3497 = vadd.f32 0.0, %v3496
      %v3498 = vpop.f32.mrb[0].mxu0
      %3499 = vmatprep.mubr.f32.mxu0 0.0
      %3500 = vmatmul.mubr.f32.gmra.mrb[0].mxu0 %v951
      %v3501 = vpop.f32.mrb[0].mxu0
      %v3502 = vadd.f32 0.0, %v3501
      %v3503 = vpop.f32.mrb[0].mxu0
      %3504 = vmatprep.mubr.f32.mxu0 0.0
      %3505 = vmatmul.mubr.f32.gmra.mrb[0].mxu0 %v953
      %v3506 = vpop.f32.mrb[0].mxu0
      %v3507 = vadd.f32 0.0, %v3506
      %v3508 = vpop.f32.mrb[0].mxu0
      %3509 = vmatprep.mubr.f32.mxu0 0.0
      %3510 = vmatmul.mubr.f32.gmra.mrb[0].mxu0 %v955
      %v3511 = vpop.f32.mrb[0].mxu0
      %v3512 = vadd.f32 0.0, %v3511
      %v3513 = vpop.f32.mrb[0].mxu0
      %3514 = vmatprep.mubr.f32.mxu0 0.0
      %3515 = vmatmul.mubr.f32.gmra.mrb[0].mxu0 %v957
      %v3516 = vpop.f32.mrb[0].mxu0
      %v3517 = vadd.f32 0.0, %v3516
      %v3518 = vpop.f32.mrb[0].mxu0
      %3519 = vmatprep.mubr.f32.mxu0 0.0
      %3520 = vmatmul.mubr.f32.gmra.mrb[0].mxu0 %v959
      %v3521 = vpop.f32.mrb[0].mxu0
      %v3522 = vadd.f32 0.0, %v3521
      %v3523 = vpop.f32.mrb[0].mxu0
      %3524 = vmatprep.mubr.f32.mxu0 0.0
      %3525 = vmatmul.mubr.f32.gmra.mrb[0].mxu0 %v961
      %v3526 = vpop.f32.mrb[0].mxu0
      %v3527 = vadd.f32 0.0, %v3526
      %v3528 = vpop.f32.mrb[0].mxu0
      %3529 = vmatprep.mubr.f32.mxu0 0.0
      %3530 = vmatmul.mubr.f32.gmra.mrb[0].mxu0 %v963
      %v3531 = vpop.f32.mrb[0].mxu0
      %v3532 = vadd.f32 0.0, %v3531
      %v3533 = vpop.f32.mrb[0].mxu0
      %3534 = vmatprep.mubr.f32.mxu0 0.0
      %3535 = vmatmul.mubr.f32.gmra.mrb[0].mxu0 %v965
      %v3536 = vpop.f32.mrb[0].mxu0
      %v3537 = vadd.f32 0.0, %v3536
      %v3538 = vpop.f32.mrb[0].mxu0
      %3539 = vmatprep.mubr.f32.mxu0 0.0
      %3540 = vmatmul.mubr.f32.gmra.mrb[0].mxu0 %v967
      %v3541 = vpop.f32.mrb[0].mxu0
      %v3542 = vadd.f32 0.0, %v3541
      %v3543 = vpop.f32.mrb[0].mxu0
      %3544 = vmatprep.mubr.f32.mxu0 0.0
      %3545 = vmatmul.mubr.f32.gmra.mrb[0].mxu0 %v969
      %v3546 = vpop.f32.mrb[0].mxu0
      %v3547 = vadd.f32 0.0, %v3546
      %v3548 = vpop.f32.mrb[0].mxu0
      %3549 = vmatprep.mubr.f32.mxu0 0.0
      %3550 = vmatmul.mubr.f32.gmra.mrb[0].mxu0 %v971
      %v3551 = vpop.f32.mrb[0].mxu0
      %v3552 = vadd.f32 0.0, %v3551
      %v3553 = vpop.f32.mrb[0].mxu0
      %3554 = vmatprep.mubr.f32.mxu0 0.0
      %3555 = vmatmul.mubr.f32.gmra.mrb[0].mxu0 %v973
      %v3556 = vpop.f32.mrb[0].mxu0
      %v3557 = vadd.f32 0.0, %v3556
      %v3558 = vpop.f32.mrb[0].mxu0
      %3559 = vmatprep.mubr.f32.mxu0 0.0
      %3560 = vmatmul.mubr.f32.gmra.mrb[0].mxu0 %v975
      %v3561 = vpop.f32.mrb[0].mxu0
      %v3562 = vadd.f32 0.0, %v3561
      %v3563 = vpop.f32.mrb[0].mxu0
      %3564 = vmatprep.mubr.f32.mxu0 0.0
      %3565 = vmatmul.mubr.f32.gmra.mrb[0].mxu0 %v977
      %v3566 = vpop.f32.mrb[0].mxu0
      %v3567 = vadd.f32 0.0, %v3566
      %v3568 = vpop.f32.mrb[0].mxu0
      %3569 = vmatprep.mubr.f32.mxu0 0.0
      %3570 = vmatmul.mubr.f32.gmra.mrb[0].mxu0 %v979
      %v3571 = vpop.f32.mrb[0].mxu0
      %v3572 = vadd.f32 0.0, %v3571
      %v3573 = vpop.f32.mrb[0].mxu0
      %3574 = vmatprep.mubr.f32.mxu0 0.0
      %3575 = vmatmul.mubr.f32.gmra.mrb[0].mxu0 %v981
      %v3576 = vpop.f32.mrb[0].mxu0
      %v3577 = vadd.f32 0.0, %v3576
      %v3578 = vpop.f32.mrb[0].mxu0
      %3579 = vmatprep.mubr.f32.mxu0 0.0
      %3580 = vmatmul.mubr.f32.gmra.mrb[0].mxu0 %v983
      %v3581 = vpop.f32.mrb[0].mxu0
      %v3582 = vadd.f32 0.0, %v3581
      %v3583 = vpop.f32.mrb[0].mxu0
      %3584 = vmatprep.mubr.f32.mxu0 0.0
      %3585 = vmatmul.mubr.f32.gmra.mrb[0].mxu0 %v985
      %v3586 = vpop.f32.mrb[0].mxu0
      %v3587 = vadd.f32 0.0, %v3586
      %v3588 = vpop.f32.mrb[0].mxu0
      %3589 = vmatprep.mubr.f32.mxu0 0.0
      %3590 = vmatmul.mubr.f32.gmra.mrb[0].mxu0 %v987
      %v3591 = vpop.f32.mrb[0].mxu0
      %v3592 = vadd.f32 0.0, %v3591
      %v3593 = vpop.f32.mrb[0].mxu0
      %3594 = vmatprep.mubr.f32.mxu0 0.0
      %3595 = vmatmul.mubr.f32.gmra.mrb[0].mxu0 %v989
      %v3596 = vpop.f32.mrb[0].mxu0
      %v3597 = vadd.f32 0.0, %v3596
      %v3598 = vpop.f32.mrb[0].mxu0
      %3599 = vmatprep.mubr.f32.mxu0 0.0
      %3600 = vmatmul.mubr.f32.gmra.mrb[0].mxu0 %v991
      %v3601 = vpop.f32.mrb[0].mxu0
      %v3602 = vadd.f32 0.0, %v3601
      %v3603 = vpop.f32.mrb[0].mxu0
      %3604 = vmatprep.mubr.f32.mxu0 0.0
      %3605 = vmatmul.mubr.f32.gmra.mrb[0].mxu0 %v993
      %v3606 = vpop.f32.mrb[0].mxu0
      %v3607 = vadd.f32 0.0, %v3606
      %v3608 = vpop.f32.mrb[0].mxu0
      %3609 = vmatprep.mubr.f32.mxu0 0.0
      %3610 = vmatmul.mubr.f32.gmra.mrb[0].mxu0 %v995
      %v3611 = vpop.f32.mrb[0].mxu0
      %v3612 = vadd.f32 0.0, %v3611
      %v3613 = vpop.f32.mrb[0].mxu0
      %3614 = vmatprep.mubr.f32.mxu0 0.0
      %3615 = vmatmul.mubr.f32.gmra.mrb[0].mxu0 %v997
      %v3616 = vpop.f32.mrb[0].mxu0
      %v3617 = vadd.f32 0.0, %v3616
      %v3618 = vpop.f32.mrb[0].mxu0
      %3619 = vmatprep.mubr.f32.mxu0 0.0
      %3620 = vmatmul.mubr.f32.gmra.mrb[0].mxu0 %v1229
      %v3621 = vpop.f32.mrb[0].mxu0
      %v3622 = vadd.f32 0.0, %v3621
      %v3623 = vpop.f32.mrb[0].mxu0
      %3624 = vmatprep.mubr.f32.mxu0 0.0
      %3625 = vmatmul.mubr.f32.gmra.mrb[0].mxu0 %v1231
      %v3626 = vpop.f32.mrb[0].mxu0
      %v3627 = vadd.f32 0.0, %v3626
      %v3628 = vpop.f32.mrb[0].mxu0
      %3629 = vmatprep.mubr.f32.mxu0 0.0
      %3630 = vmatmul.mubr.f32.gmra.mrb[0].mxu0 %v3408
      %v3631 = vpop.f32.mrb[0].mxu0
      %v3632 = vadd.f32 0.0, %v3631
      %v3633 = vpop.f32.mrb[0].mxu0
      %3634 = vmatprep.mubr.f32.mxu0 0.0
      %3635 = vmatmul.mubr.f32.gmra.mrb[0].mxu0 %v3410
      %v3636 = vpop.f32.mrb[0].mxu0
      %v3637 = vadd.f32 0.0, %v3636
      %v3638 = vpop.f32.mrb[0].mxu0
      %3639 = vdwg.mxu0
      %v3640 = vadd.f32 %v3248, %v3482
      %v3641 = vadd.f32 %v3253, %v3487
      %v3642 = vadd.f32 %v3258, %v3492
      %v3643 = vadd.f32 %v3263, %v3497
      %v3644 = vadd.f32 %v3268, %v3502
      %v3645 = vadd.f32 %v3273, %v3507
      %v3646 = vadd.f32 %v3278, %v3512
      %v3647 = vadd.f32 %v3283, %v3517
      %v3648 = vadd.f32 %v3288, %v3522
      %v3649 = vadd.f32 %v3293, %v3527
      %v3650 = vadd.f32 %v3298, %v3532
      %v3651 = vadd.f32 %v3303, %v3537
      %v3652 = vadd.f32 %v3308, %v3542
      %v3653 = vadd.f32 %v3313, %v3547
      %v3654 = vadd.f32 %v3318, %v3552
      %v3655 = vadd.f32 %v3323, %v3557
      %v3656 = vadd.f32 %v3328, %v3562
      %v3657 = vadd.f32 %v3333, %v3567
      %v3658 = vadd.f32 %v3338, %v3572
      %v3659 = vadd.f32 %v3343, %v3577
      %v3660 = vadd.f32 %v3348, %v3582
      %v3661 = vadd.f32 %v3353, %v3587
      %v3662 = vadd.f32 %v3358, %v3592
      %v3663 = vadd.f32 %v3363, %v3597
      %v3664 = vadd.f32 %v3368, %v3602
      %v3665 = vadd.f32 %v3373, %v3607
      %v3666 = vadd.f32 %v3378, %v3612
      %v3667 = vadd.f32 %v3383, %v3617
      %v3668 = vadd.f32 %v3388, %v3622
      %v3669 = vadd.f32 %v3393, %v3627
      %v3670 = vadd.f32 %v3398, %v3632
      %v3671 = vadd.f32 %v3403, %v3637
      %s3672 = scalar_lea.vmem %s210, 44
      %v3673 = vld [vmem:[%s3672] sm:$0xf]
      %v3674 = vsel %vm641, %v629, 0
      %v3676 = vsel %vm641, %v631, 0
      %v3679 = vsel %vm706, %v3673, 0
      %3681 = vmatprep.subr.mxu0 0.0
      %3682 = vmatpush1.msra.mxu0 %v3679
      %3683 = vmatprep.subr.mxu0 0.0
      %3684 = vmatpush1.msra.mxu0 0.0
      %3685 = vmatprep.subr.mxu0 0.0
      %3686 = vmatpush1.msra.mxu0 0.0
      %3687 = vmatprep.subr.mxu0 0.0
      %3688 = vmatpush1.msra.mxu0 0.0
      %3689 = vmatprep.subr.mxu0 0.0
      %3690 = vmatpush1.msra.mxu0 0.0
      %3691 = vmatprep.subr.mxu0 0.0
      %3692 = vmatpush1.msra.mxu0 0.0
      %3693 = vmatprep.subr.mxu0 0.0
      %3694 = vmatpush1.msra.mxu0 0.0
      %3695 = vmatprep.subr.mxu0 0.0
      %3696 = vmatpush1.msra.mxu0 0.0
      %3697 = vmatprep.subr.mxu0 0.0
      %3698 = vmatpush1.msra.mxu0 0.0
      %3699 = vmatprep.subr.mxu0 0.0
      %3700 = vmatpush1.msra.mxu0 0.0
      %3701 = vmatprep.subr.mxu0 0.0
      %3702 = vmatpush1.msra.mxu0 0.0
      %3703 = vmatprep.subr.mxu0 0.0
      %3704 = vmatpush1.msra.mxu0 0.0
      %3705 = vmatprep.subr.mxu0 0.0
      %3706 = vmatpush1.msra.mxu0 0.0
      %3707 = vmatprep.subr.mxu0 0.0
      %3708 = vmatpush1.msra.mxu0 0.0
      %3709 = vmatprep.subr.mxu0 0.0
      %3710 = vmatpush1.msra.mxu0 0.0
      %3711 = vmatprep.subr.mxu0 0.0
      %3712 = vmatpush1.msra.mxu0 0.0
      %3713 = vmatprep.subr.mxu0 0.0
      %3714 = vmatpush1.msra.mxu0 0.0
      %3715 = vmatprep.subr.mxu0 0.0
      %3716 = vmatpush1.msra.mxu0 0.0
      %3717 = vmatprep.subr.mxu0 0.0
      %3718 = vmatpush1.msra.mxu0 0.0
      %3719 = vmatprep.subr.mxu0 0.0
      %3720 = vmatpush1.msra.mxu0 0.0
      %3721 = vmatprep.subr.mxu0 0.0
      %3722 = vmatpush1.msra.mxu0 0.0
      %3723 = vmatprep.subr.mxu0 0.0
      %3724 = vmatpush1.msra.mxu0 0.0
      %3725 = vmatprep.subr.mxu0 0.0
      %3726 = vmatpush1.msra.mxu0 0.0
      %3727 = vmatprep.subr.mxu0 0.0
      %3728 = vmatpush1.msra.mxu0 0.0
      %3729 = vmatprep.subr.mxu0 0.0
      %3730 = vmatpush1.msra.mxu0 0.0
      %3731 = vmatprep.subr.mxu0 0.0
      %3732 = vmatpush1.msra.mxu0 0.0
      %3733 = vmatprep.subr.mxu0 0.0
      %3734 = vmatpush1.msra.mxu0 0.0
      %3735 = vmatprep.subr.mxu0 0.0
      %3736 = vmatpush1.msra.mxu0 0.0
      %3737 = vmatprep.subr.mxu0 0.0
      %3738 = vmatpush1.msra.mxu0 0.0
      %3739 = vmatprep.subr.mxu0 0.0
      %3740 = vmatpush1.msra.mxu0 0.0
      %3741 = vmatprep.subr.mxu0 0.0
      %3742 = vmatpush1.msra.mxu0 0.0
      %3743 = vmatprep.subr.mxu0 0.0
      %3744 = vmatpush1.msra.mxu0 0.0
      %3745 = vmatprep.mubr.f32.mxu0 0.0
      %3746 = vmatmul.mubr.f32.gmra.mrb[0].mxu0 %v650
      %v3747 = vpop.f32.mrb[0].mxu0
      %v3748 = vadd.f32 0.0, %v3747
      %v3749 = vpop.f32.mrb[0].mxu0
      %3750 = vmatprep.mubr.f32.mxu0 0.0
      %3751 = vmatmul.mubr.f32.gmra.mrb[0].mxu0 %v652
      %v3752 = vpop.f32.mrb[0].mxu0
      %v3753 = vadd.f32 0.0, %v3752
      %v3754 = vpop.f32.mrb[0].mxu0
      %3755 = vmatprep.mubr.f32.mxu0 0.0
      %3756 = vmatmul.mubr.f32.gmra.mrb[0].mxu0 %v654
      %v3757 = vpop.f32.mrb[0].mxu0
      %v3758 = vadd.f32 0.0, %v3757
      %v3759 = vpop.f32.mrb[0].mxu0
      %3760 = vmatprep.mubr.f32.mxu0 0.0
      %3761 = vmatmul.mubr.f32.gmra.mrb[0].mxu0 %v656
      %v3762 = vpop.f32.mrb[0].mxu0
      %v3763 = vadd.f32 0.0, %v3762
      %v3764 = vpop.f32.mrb[0].mxu0
      %3765 = vmatprep.mubr.f32.mxu0 0.0
      %3766 = vmatmul.mubr.f32.gmra.mrb[0].mxu0 %v658
      %v3767 = vpop.f32.mrb[0].mxu0
      %v3768 = vadd.f32 0.0, %v3767
      %v3769 = vpop.f32.mrb[0].mxu0
      %3770 = vmatprep.mubr.f32.mxu0 0.0
      %3771 = vmatmul.mubr.f32.gmra.mrb[0].mxu0 %v660
      %v3772 = vpop.f32.mrb[0].mxu0
      %v3773 = vadd.f32 0.0, %v3772
      %v3774 = vpop.f32.mrb[0].mxu0
      %3775 = vmatprep.mubr.f32.mxu0 0.0
      %3776 = vmatmul.mubr.f32.gmra.mrb[0].mxu0 %v662
      %v3777 = vpop.f32.mrb[0].mxu0
      %v3778 = vadd.f32 0.0, %v3777
      %v3779 = vpop.f32.mrb[0].mxu0
      %3780 = vmatprep.mubr.f32.mxu0 0.0
      %3781 = vmatmul.mubr.f32.gmra.mrb[0].mxu0 %v664
      %v3782 = vpop.f32.mrb[0].mxu0
      %v3783 = vadd.f32 0.0, %v3782
      %v3784 = vpop.f32.mrb[0].mxu0
      %3785 = vmatprep.mubr.f32.mxu0 0.0
      %3786 = vmatmul.mubr.f32.gmra.mrb[0].mxu0 %v666
      %v3787 = vpop.f32.mrb[0].mxu0
      %v3788 = vadd.f32 0.0, %v3787
      %v3789 = vpop.f32.mrb[0].mxu0
      %3790 = vmatprep.mubr.f32.mxu0 0.0
      %3791 = vmatmul.mubr.f32.gmra.mrb[0].mxu0 %v668
      %v3792 = vpop.f32.mrb[0].mxu0
      %v3793 = vadd.f32 0.0, %v3792
      %v3794 = vpop.f32.mrb[0].mxu0
      %3795 = vmatprep.mubr.f32.mxu0 0.0
      %3796 = vmatmul.mubr.f32.gmra.mrb[0].mxu0 %v670
      %v3797 = vpop.f32.mrb[0].mxu0
      %v3798 = vadd.f32 0.0, %v3797
      %v3799 = vpop.f32.mrb[0].mxu0
      %3800 = vmatprep.mubr.f32.mxu0 0.0
      %3801 = vmatmul.mubr.f32.gmra.mrb[0].mxu0 %v672
      %v3802 = vpop.f32.mrb[0].mxu0
      %v3803 = vadd.f32 0.0, %v3802
      %v3804 = vpop.f32.mrb[0].mxu0
      %3805 = vmatprep.mubr.f32.mxu0 0.0
      %3806 = vmatmul.mubr.f32.gmra.mrb[0].mxu0 %v674
      %v3807 = vpop.f32.mrb[0].mxu0
      %v3808 = vadd.f32 0.0, %v3807
      %v3809 = vpop.f32.mrb[0].mxu0
      %3810 = vmatprep.mubr.f32.mxu0 0.0
      %3811 = vmatmul.mubr.f32.gmra.mrb[0].mxu0 %v676
      %v3812 = vpop.f32.mrb[0].mxu0
      %v3813 = vadd.f32 0.0, %v3812
      %v3814 = vpop.f32.mrb[0].mxu0
      %3815 = vmatprep.mubr.f32.mxu0 0.0
      %3816 = vmatmul.mubr.f32.gmra.mrb[0].mxu0 %v678
      %v3817 = vpop.f32.mrb[0].mxu0
      %v3818 = vadd.f32 0.0, %v3817
      %v3819 = vpop.f32.mrb[0].mxu0
      %3820 = vmatprep.mubr.f32.mxu0 0.0
      %3821 = vmatmul.mubr.f32.gmra.mrb[0].mxu0 %v680
      %v3822 = vpop.f32.mrb[0].mxu0
      %v3823 = vadd.f32 0.0, %v3822
      %v3824 = vpop.f32.mrb[0].mxu0
      %3825 = vmatprep.mubr.f32.mxu0 0.0
      %3826 = vmatmul.mubr.f32.gmra.mrb[0].mxu0 %v682
      %v3827 = vpop.f32.mrb[0].mxu0
      %v3828 = vadd.f32 0.0, %v3827
      %v3829 = vpop.f32.mrb[0].mxu0
      %3830 = vmatprep.mubr.f32.mxu0 0.0
      %3831 = vmatmul.mubr.f32.gmra.mrb[0].mxu0 %v684
      %v3832 = vpop.f32.mrb[0].mxu0
      %v3833 = vadd.f32 0.0, %v3832
      %v3834 = vpop.f32.mrb[0].mxu0
      %3835 = vmatprep.mubr.f32.mxu0 0.0
      %3836 = vmatmul.mubr.f32.gmra.mrb[0].mxu0 %v686
      %v3837 = vpop.f32.mrb[0].mxu0
      %v3838 = vadd.f32 0.0, %v3837
      %v3839 = vpop.f32.mrb[0].mxu0
      %3840 = vmatprep.mubr.f32.mxu0 0.0
      %3841 = vmatmul.mubr.f32.gmra.mrb[0].mxu0 %v688
      %v3842 = vpop.f32.mrb[0].mxu0
      %v3843 = vadd.f32 0.0, %v3842
      %v3844 = vpop.f32.mrb[0].mxu0
      %3845 = vmatprep.mubr.f32.mxu0 0.0
      %3846 = vmatmul.mubr.f32.gmra.mrb[0].mxu0 %v690
      %v3847 = vpop.f32.mrb[0].mxu0
      %v3848 = vadd.f32 0.0, %v3847
      %v3849 = vpop.f32.mrb[0].mxu0
      %3850 = vmatprep.mubr.f32.mxu0 0.0
      %3851 = vmatmul.mubr.f32.gmra.mrb[0].mxu0 %v692
      %v3852 = vpop.f32.mrb[0].mxu0
      %v3853 = vadd.f32 0.0, %v3852
      %v3854 = vpop.f32.mrb[0].mxu0
      %3855 = vmatprep.mubr.f32.mxu0 0.0
      %3856 = vmatmul.mubr.f32.gmra.mrb[0].mxu0 %v694
      %v3857 = vpop.f32.mrb[0].mxu0
      %v3858 = vadd.f32 0.0, %v3857
      %v3859 = vpop.f32.mrb[0].mxu0
      %3860 = vmatprep.mubr.f32.mxu0 0.0
      %3861 = vmatmul.mubr.f32.gmra.mrb[0].mxu0 %v696
      %v3862 = vpop.f32.mrb[0].mxu0
      %v3863 = vadd.f32 0.0, %v3862
      %v3864 = vpop.f32.mrb[0].mxu0
      %3865 = vmatprep.mubr.f32.mxu0 0.0
      %3866 = vmatmul.mubr.f32.gmra.mrb[0].mxu0 %v698
      %v3867 = vpop.f32.mrb[0].mxu0
      %v3868 = vadd.f32 0.0, %v3867
      %v3869 = vpop.f32.mrb[0].mxu0
      %3870 = vmatprep.mubr.f32.mxu0 0.0
      %3871 = vmatmul.mubr.f32.gmra.mrb[0].mxu0 %v700
      %v3872 = vpop.f32.mrb[0].mxu0
      %v3873 = vadd.f32 0.0, %v3872
      %v3874 = vpop.f32.mrb[0].mxu0
      %3875 = vmatprep.mubr.f32.mxu0 0.0
      %3876 = vmatmul.mubr.f32.gmra.mrb[0].mxu0 %v702
      %v3877 = vpop.f32.mrb[0].mxu0
      %v3878 = vadd.f32 0.0, %v3877
      %v3879 = vpop.f32.mrb[0].mxu0
      %3880 = vmatprep.mubr.f32.mxu0 0.0
      %3881 = vmatmul.mubr.f32.gmra.mrb[0].mxu0 %v704
      %v3882 = vpop.f32.mrb[0].mxu0
      %v3883 = vadd.f32 0.0, %v3882
      %v3884 = vpop.f32.mrb[0].mxu0
      %3885 = vmatprep.mubr.f32.mxu0 0.0
      %3886 = vmatmul.mubr.f32.gmra.mrb[0].mxu0 %v1495
      %v3887 = vpop.f32.mrb[0].mxu0
      %v3888 = vadd.f32 0.0, %v3887
      %v3889 = vpop.f32.mrb[0].mxu0
      %3890 = vmatprep.mubr.f32.mxu0 0.0
      %3891 = vmatmul.mubr.f32.gmra.mrb[0].mxu0 %v1497
      %v3892 = vpop.f32.mrb[0].mxu0
      %v3893 = vadd.f32 0.0, %v3892
      %v3894 = vpop.f32.mrb[0].mxu0
      %3895 = vmatprep.mubr.f32.mxu0 0.0
      %3896 = vmatmul.mubr.f32.gmra.mrb[0].mxu0 %v3674
      %v3897 = vpop.f32.mrb[0].mxu0
      %v3898 = vadd.f32 0.0, %v3897
      %v3899 = vpop.f32.mrb[0].mxu0
      %3900 = vmatprep.mubr.f32.mxu0 0.0
      %3901 = vmatmul.mubr.f32.gmra.mrb[0].mxu0 %v3676
      %v3902 = vpop.f32.mrb[0].mxu0
      %v3903 = vadd.f32 0.0, %v3902
      %v3904 = vpop.f32.mrb[0].mxu0
      %3905 = vdwg.mxu0
      %v3906 = vadd.f32 %v3640, %v3748
      %v3907 = vadd.f32 %v3641, %v3753
      %v3908 = vadd.f32 %v3642, %v3758
      %v3909 = vadd.f32 %v3643, %v3763
      %v3910 = vadd.f32 %v3644, %v3768
      %v3911 = vadd.f32 %v3645, %v3773
      %v3912 = vadd.f32 %v3646, %v3778
      %v3913 = vadd.f32 %v3647, %v3783
      %v3914 = vadd.f32 %v3648, %v3788
      %v3915 = vadd.f32 %v3649, %v3793
      %v3916 = vadd.f32 %v3650, %v3798
      %v3917 = vadd.f32 %v3651, %v3803
      %v3918 = vadd.f32 %v3652, %v3808
      %v3919 = vadd.f32 %v3653, %v3813
      %v3920 = vadd.f32 %v3654, %v3818
      %v3921 = vadd.f32 %v3655, %v3823
      %v3922 = vadd.f32 %v3656, %v3828
      %v3923 = vadd.f32 %v3657, %v3833
      %v3924 = vadd.f32 %v3658, %v3838
      %v3925 = vadd.f32 %v3659, %v3843
      %v3926 = vadd.f32 %v3660, %v3848
      %v3927 = vadd.f32 %v3661, %v3853
      %v3928 = vadd.f32 %v3662, %v3858
      %v3929 = vadd.f32 %v3663, %v3863
      %v3930 = vadd.f32 %v3664, %v3868
      %v3931 = vadd.f32 %v3665, %v3873
      %v3932 = vadd.f32 %v3666, %v3878
      %v3933 = vadd.f32 %v3667, %v3883
      %v3934 = vadd.f32 %v3668, %v3888
      %v3935 = vadd.f32 %v3669, %v3893
      %v3936 = vadd.f32 %v3670, %v3898
      %v3937 = vadd.f32 %v3671, %v3903
      %v3938 = vadd.f32 %v3906, %v1763
      %v3939 = vadd.f32 %v3907, %v1763
      %v3940 = vadd.f32 %v3908, %v1763
      %v3941 = vadd.f32 %v3909, %v1763
      %v3942 = vadd.f32 %v3910, %v1763
      %v3943 = vadd.f32 %v3911, %v1763
      %v3944 = vadd.f32 %v3912, %v1763
      %v3945 = vadd.f32 %v3913, %v1763
      %v3946 = vadd.f32 %v3914, %v1763
      %v3947 = vadd.f32 %v3915, %v1763
      %v3948 = vadd.f32 %v3916, %v1763
      %v3949 = vadd.f32 %v3917, %v1763
      %v3950 = vadd.f32 %v3918, %v1763
      %v3951 = vadd.f32 %v3919, %v1763
      %v3952 = vadd.f32 %v3920, %v1763
      %v3953 = vadd.f32 %v3921, %v1763
      %v3954 = vadd.f32 %v3922, %v1763
      %v3955 = vadd.f32 %v3923, %v1763
      %v3956 = vadd.f32 %v3924, %v1763
      %v3957 = vadd.f32 %v3925, %v1763
      %v3958 = vadd.f32 %v3926, %v1763
      %v3959 = vadd.f32 %v3927, %v1763
      %v3960 = vadd.f32 %v3928, %v1763
      %v3961 = vadd.f32 %v3929, %v1763
      %v3962 = vadd.f32 %v3930, %v1763
      %v3963 = vadd.f32 %v3931, %v1763
      %v3964 = vadd.f32 %v3932, %v1763
      %v3965 = vadd.f32 %v3933, %v1763
      %v3966 = vadd.f32 %v3934, %v1763
      %v3967 = vadd.f32 %v3935, %v1763
      %v3968 = vadd.f32 %v3936, %v1763
      %v3969 = vadd.f32 %v3937, %v1763
      %s3970 = scalar_lea.vmem %s221, 512
      %3971 = vst.msk [vmem:[%s3970] sm:$0xff] %vm641, %v3938
      %3972 = vst.msk [vmem:[%s3970 + $0x8] sm:$0xff] %vm641, %v3939
      %3973 = vst.msk [vmem:[%s3970 + $0x10] sm:$0xff] %vm641, %v3940
      %3974 = vst.msk [vmem:[%s3970 + $0x18] sm:$0xff] %vm641, %v3941
      %3975 = vst.msk [vmem:[%s3970 + $0x20] sm:$0xff] %vm641, %v3942
      %3976 = vst.msk [vmem:[%s3970 + $0x28] sm:$0xff] %vm641, %v3943
      %3977 = vst.msk [vmem:[%s3970 + $0x30] sm:$0xff] %vm641, %v3944
      %3978 = vst.msk [vmem:[%s3970 + $0x38] sm:$0xff] %vm641, %v3945
      %3979 = vst.msk [vmem:[%s3970 + $0x40] sm:$0xff] %vm641, %v3946
      %3980 = vst.msk [vmem:[%s3970 + $0x48] sm:$0xff] %vm641, %v3947
      %3981 = vst.msk [vmem:[%s3970 + $0x50] sm:$0xff] %vm641, %v3948
      %3982 = vst.msk [vmem:[%s3970 + $0x58] sm:$0xff] %vm641, %v3949
      %3983 = vst.msk [vmem:[%s3970 + $0x60] sm:$0xff] %vm641, %v3950
      %3984 = vst.msk [vmem:[%s3970 + $0x68] sm:$0xff] %vm641, %v3951
      %3985 = vst.msk [vmem:[%s3970 + $0x70] sm:$0xff] %vm641, %v3952
      %3986 = vst.msk [vmem:[%s3970 + $0x78] sm:$0xff] %vm641, %v3953
      %3987 = vst.msk [vmem:[%s3970 + $0x80] sm:$0xff] %vm641, %v3954
      %3988 = vst.msk [vmem:[%s3970 + $0x88] sm:$0xff] %vm641, %v3955
      %3989 = vst.msk [vmem:[%s3970 + $0x90] sm:$0xff] %vm641, %v3956
      %3990 = vst.msk [vmem:[%s3970 + $0x98] sm:$0xff] %vm641, %v3957
      %3991 = vst.msk [vmem:[%s3970 + $0xa0] sm:$0xff] %vm641, %v3958
      %3992 = vst.msk [vmem:[%s3970 + $0xa8] sm:$0xff] %vm641, %v3959
      %3993 = vst.msk [vmem:[%s3970 + $0xb0] sm:$0xff] %vm641, %v3960
      %3994 = vst.msk [vmem:[%s3970 + $0xb8] sm:$0xff] %vm641, %v3961
      %3995 = vst.msk [vmem:[%s3970 + $0xc0] sm:$0xff] %vm641, %v3962
      %3996 = vst.msk [vmem:[%s3970 + $0xc8] sm:$0xff] %vm641, %v3963
      %3997 = vst.msk [vmem:[%s3970 + $0xd0] sm:$0xff] %vm641, %v3964
      %3998 = vst.msk [vmem:[%s3970 + $0xd8] sm:$0xff] %vm641, %v3965
      %3999 = vst.msk [vmem:[%s3970 + $0xe0] sm:$0xff] %vm641, %v3966
      %4000 = vst.msk [vmem:[%s3970 + $0xe8] sm:$0xff] %vm641, %v3967
      %4001 = vst.msk [vmem:[%s3970 + $0xf0] sm:$0xff] %vm641, %v3968
      %4002 = vst.msk [vmem:[%s3970 + $0xf8] sm:$0xff] %vm641, %v3969
      %s4003 = scalar_lea.vmem %s210, 48
      %v4004 = vld [vmem:[%s4003] sm:$0xf]
      %s4005 = scalar_lea.vmem %s210, 52
      %v4006 = vld [vmem:[%s4005] sm:$0xf]
      %v4008 = vsel %vm706, %v4006, 0
      %4010 = vmatprep.subr.mxu0 0.0
      %4011 = vmatpush1.msra.mxu0 %v4008
      %4012 = vmatprep.subr.mxu0 0.0
      %4013 = vmatpush1.msra.mxu0 0.0
      %4014 = vmatprep.subr.mxu0 0.0
      %4015 = vmatpush1.msra.mxu0 0.0
      %4016 = vmatprep.subr.mxu0 0.0
      %4017 = vmatpush1.msra.mxu0 0.0
      %4018 = vmatprep.subr.mxu0 0.0
      %4019 = vmatpush1.msra.mxu0 0.0
      %4020 = vmatprep.subr.mxu0 0.0
      %4021 = vmatpush1.msra.mxu0 0.0
      %4022 = vmatprep.subr.mxu0 0.0
      %4023 = vmatpush1.msra.mxu0 0.0
      %4024 = vmatprep.subr.mxu0 0.0
      %4025 = vmatpush1.msra.mxu0 0.0
      %4026 = vmatprep.subr.mxu0 0.0
      %4027 = vmatpush1.msra.mxu0 0.0
      %4028 = vmatprep.subr.mxu0 0.0
      %4029 = vmatpush1.msra.mxu0 0.0
      %4030 = vmatprep.subr.mxu0 0.0
      %4031 = vmatpush1.msra.mxu0 0.0
      %4032 = vmatprep.subr.mxu0 0.0
      %4033 = vmatpush1.msra.mxu0 0.0
      %4034 = vmatprep.subr.mxu0 0.0
      %4035 = vmatpush1.msra.mxu0 0.0
      %4036 = vmatprep.subr.mxu0 0.0
      %4037 = vmatpush1.msra.mxu0 0.0
      %4038 = vmatprep.subr.mxu0 0.0
      %4039 = vmatpush1.msra.mxu0 0.0
      %4040 = vmatprep.subr.mxu0 0.0
      %4041 = vmatpush1.msra.mxu0 0.0
      %4042 = vmatprep.subr.mxu0 0.0
      %4043 = vmatpush1.msra.mxu0 0.0
      %4044 = vmatprep.subr.mxu0 0.0
      %4045 = vmatpush1.msra.mxu0 0.0
      %4046 = vmatprep.subr.mxu0 0.0
      %4047 = vmatpush1.msra.mxu0 0.0
      %4048 = vmatprep.subr.mxu0 0.0
      %4049 = vmatpush1.msra.mxu0 0.0
      %4050 = vmatprep.subr.mxu0 0.0
      %4051 = vmatpush1.msra.mxu0 0.0
      %4052 = vmatprep.subr.mxu0 0.0
      %4053 = vmatpush1.msra.mxu0 0.0
      %4054 = vmatprep.subr.mxu0 0.0
      %4055 = vmatpush1.msra.mxu0 0.0
      %4056 = vmatprep.subr.mxu0 0.0
      %4057 = vmatpush1.msra.mxu0 0.0
      %4058 = vmatprep.subr.mxu0 0.0
      %4059 = vmatpush1.msra.mxu0 0.0
      %4060 = vmatprep.subr.mxu0 0.0
      %4061 = vmatpush1.msra.mxu0 0.0
      %4062 = vmatprep.subr.mxu0 0.0
      %4063 = vmatpush1.msra.mxu0 0.0
      %4064 = vmatprep.subr.mxu0 0.0
      %4065 = vmatpush1.msra.mxu0 0.0
      %4066 = vmatprep.subr.mxu0 0.0
      %4067 = vmatpush1.msra.mxu0 0.0
      %4068 = vmatprep.subr.mxu0 0.0
      %4069 = vmatpush1.msra.mxu0 0.0
      %4070 = vmatprep.subr.mxu0 0.0
      %4071 = vmatpush1.msra.mxu0 0.0
      %4072 = vmatprep.subr.mxu0 0.0
      %4073 = vmatpush1.msra.mxu0 0.0
      %4074 = vmatprep.mubr.f32.mxu0 0.0
      %4075 = vmatmul.mubr.f32.gmra.mrb[0].mxu0 %v1837
      %v4076 = vpop.f32.mrb[0].mxu0
      %v4077 = vadd.f32 0.0, %v4076
      %v4078 = vpop.f32.mrb[0].mxu0
      %4079 = vmatprep.mubr.f32.mxu0 0.0
      %4080 = vmatmul.mubr.f32.gmra.mrb[0].mxu0 %v1839
      %v4081 = vpop.f32.mrb[0].mxu0
      %v4082 = vadd.f32 0.0, %v4081
      %v4083 = vpop.f32.mrb[0].mxu0
      %4084 = vmatprep.mubr.f32.mxu0 0.0
      %4085 = vmatmul.mubr.f32.gmra.mrb[0].mxu0 %v1841
      %v4086 = vpop.f32.mrb[0].mxu0
      %v4087 = vadd.f32 0.0, %v4086
      %v4088 = vpop.f32.mrb[0].mxu0
      %4089 = vmatprep.mubr.f32.mxu0 0.0
      %4090 = vmatmul.mubr.f32.gmra.mrb[0].mxu0 %v1843
      %v4091 = vpop.f32.mrb[0].mxu0
      %v4092 = vadd.f32 0.0, %v4091
      %v4093 = vpop.f32.mrb[0].mxu0
      %4094 = vmatprep.mubr.f32.mxu0 0.0
      %4095 = vmatmul.mubr.f32.gmra.mrb[0].mxu0 %v1845
      %v4096 = vpop.f32.mrb[0].mxu0
      %v4097 = vadd.f32 0.0, %v4096
      %v4098 = vpop.f32.mrb[0].mxu0
      %4099 = vmatprep.mubr.f32.mxu0 0.0
      %4100 = vmatmul.mubr.f32.gmra.mrb[0].mxu0 %v1847
      %v4101 = vpop.f32.mrb[0].mxu0
      %v4102 = vadd.f32 0.0, %v4101
      %v4103 = vpop.f32.mrb[0].mxu0
      %4104 = vmatprep.mubr.f32.mxu0 0.0
      %4105 = vmatmul.mubr.f32.gmra.mrb[0].mxu0 %v1849
      %v4106 = vpop.f32.mrb[0].mxu0
      %v4107 = vadd.f32 0.0, %v4106
      %v4108 = vpop.f32.mrb[0].mxu0
      %4109 = vmatprep.mubr.f32.mxu0 0.0
      %4110 = vmatmul.mubr.f32.gmra.mrb[0].mxu0 %v1851
      %v4111 = vpop.f32.mrb[0].mxu0
      %v4112 = vadd.f32 0.0, %v4111
      %v4113 = vpop.f32.mrb[0].mxu0
      %4114 = vmatprep.mubr.f32.mxu0 0.0
      %4115 = vmatmul.mubr.f32.gmra.mrb[0].mxu0 %v1853
      %v4116 = vpop.f32.mrb[0].mxu0
      %v4117 = vadd.f32 0.0, %v4116
      %v4118 = vpop.f32.mrb[0].mxu0
      %4119 = vmatprep.mubr.f32.mxu0 0.0
      %4120 = vmatmul.mubr.f32.gmra.mrb[0].mxu0 %v1855
      %v4121 = vpop.f32.mrb[0].mxu0
      %v4122 = vadd.f32 0.0, %v4121
      %v4123 = vpop.f32.mrb[0].mxu0
      %4124 = vmatprep.mubr.f32.mxu0 0.0
      %4125 = vmatmul.mubr.f32.gmra.mrb[0].mxu0 %v1857
      %v4126 = vpop.f32.mrb[0].mxu0
      %v4127 = vadd.f32 0.0, %v4126
      %v4128 = vpop.f32.mrb[0].mxu0
      %4129 = vmatprep.mubr.f32.mxu0 0.0
      %4130 = vmatmul.mubr.f32.gmra.mrb[0].mxu0 %v1859
      %v4131 = vpop.f32.mrb[0].mxu0
      %v4132 = vadd.f32 0.0, %v4131
      %v4133 = vpop.f32.mrb[0].mxu0
      %4134 = vmatprep.mubr.f32.mxu0 0.0
      %4135 = vmatmul.mubr.f32.gmra.mrb[0].mxu0 %v1861
      %v4136 = vpop.f32.mrb[0].mxu0
      %v4137 = vadd.f32 0.0, %v4136
      %v4138 = vpop.f32.mrb[0].mxu0
      %4139 = vmatprep.mubr.f32.mxu0 0.0
      %4140 = vmatmul.mubr.f32.gmra.mrb[0].mxu0 %v1863
      %v4141 = vpop.f32.mrb[0].mxu0
      %v4142 = vadd.f32 0.0, %v4141
      %v4143 = vpop.f32.mrb[0].mxu0
      %4144 = vmatprep.mubr.f32.mxu0 0.0
      %4145 = vmatmul.mubr.f32.gmra.mrb[0].mxu0 %v1865
      %v4146 = vpop.f32.mrb[0].mxu0
      %v4147 = vadd.f32 0.0, %v4146
      %v4148 = vpop.f32.mrb[0].mxu0
      %4149 = vmatprep.mubr.f32.mxu0 0.0
      %4150 = vmatmul.mubr.f32.gmra.mrb[0].mxu0 %v1867
      %v4151 = vpop.f32.mrb[0].mxu0
      %v4152 = vadd.f32 0.0, %v4151
      %v4153 = vpop.f32.mrb[0].mxu0
      %4154 = vmatprep.mubr.f32.mxu0 0.0
      %4155 = vmatmul.mubr.f32.gmra.mrb[0].mxu0 %v1869
      %v4156 = vpop.f32.mrb[0].mxu0
      %v4157 = vadd.f32 0.0, %v4156
      %v4158 = vpop.f32.mrb[0].mxu0
      %4159 = vmatprep.mubr.f32.mxu0 0.0
      %4160 = vmatmul.mubr.f32.gmra.mrb[0].mxu0 %v1871
      %v4161 = vpop.f32.mrb[0].mxu0
      %v4162 = vadd.f32 0.0, %v4161
      %v4163 = vpop.f32.mrb[0].mxu0
      %4164 = vmatprep.mubr.f32.mxu0 0.0
      %4165 = vmatmul.mubr.f32.gmra.mrb[0].mxu0 %v1873
      %v4166 = vpop.f32.mrb[0].mxu0
      %v4167 = vadd.f32 0.0, %v4166
      %v4168 = vpop.f32.mrb[0].mxu0
      %4169 = vmatprep.mubr.f32.mxu0 0.0
      %4170 = vmatmul.mubr.f32.gmra.mrb[0].mxu0 %v1875
      %v4171 = vpop.f32.mrb[0].mxu0
      %v4172 = vadd.f32 0.0, %v4171
      %v4173 = vpop.f32.mrb[0].mxu0
      %4174 = vmatprep.mubr.f32.mxu0 0.0
      %4175 = vmatmul.mubr.f32.gmra.mrb[0].mxu0 %v1877
      %v4176 = vpop.f32.mrb[0].mxu0
      %v4177 = vadd.f32 0.0, %v4176
      %v4178 = vpop.f32.mrb[0].mxu0
      %4179 = vmatprep.mubr.f32.mxu0 0.0
      %4180 = vmatmul.mubr.f32.gmra.mrb[0].mxu0 %v1879
      %v4181 = vpop.f32.mrb[0].mxu0
      %v4182 = vadd.f32 0.0, %v4181
      %v4183 = vpop.f32.mrb[0].mxu0
      %4184 = vmatprep.mubr.f32.mxu0 0.0
      %4185 = vmatmul.mubr.f32.gmra.mrb[0].mxu0 %v1881
      %v4186 = vpop.f32.mrb[0].mxu0
      %v4187 = vadd.f32 0.0, %v4186
      %v4188 = vpop.f32.mrb[0].mxu0
      %4189 = vmatprep.mubr.f32.mxu0 0.0
      %4190 = vmatmul.mubr.f32.gmra.mrb[0].mxu0 %v1883
      %v4191 = vpop.f32.mrb[0].mxu0
      %v4192 = vadd.f32 0.0, %v4191
      %v4193 = vpop.f32.mrb[0].mxu0
      %4194 = vmatprep.mubr.f32.mxu0 0.0
      %4195 = vmatmul.mubr.f32.gmra.mrb[0].mxu0 %v1885
      %v4196 = vpop.f32.mrb[0].mxu0
      %v4197 = vadd.f32 0.0, %v4196
      %v4198 = vpop.f32.mrb[0].mxu0
      %4199 = vmatprep.mubr.f32.mxu0 0.0
      %4200 = vmatmul.mubr.f32.gmra.mrb[0].mxu0 %v1887
      %v4201 = vpop.f32.mrb[0].mxu0
      %v4202 = vadd.f32 0.0, %v4201
      %v4203 = vpop.f32.mrb[0].mxu0
      %4204 = vmatprep.mubr.f32.mxu0 0.0
      %4205 = vmatmul.mubr.f32.gmra.mrb[0].mxu0 %v1889
      %v4206 = vpop.f32.mrb[0].mxu0
      %v4207 = vadd.f32 0.0, %v4206
      %v4208 = vpop.f32.mrb[0].mxu0
      %4209 = vmatprep.mubr.f32.mxu0 0.0
      %4210 = vmatmul.mubr.f32.gmra.mrb[0].mxu0 %v1891
      %v4211 = vpop.f32.mrb[0].mxu0
      %v4212 = vadd.f32 0.0, %v4211
      %v4213 = vpop.f32.mrb[0].mxu0
      %4214 = vmatprep.mubr.f32.mxu0 0.0
      %4215 = vmatmul.mubr.f32.gmra.mrb[0].mxu0 %v1893
      %v4216 = vpop.f32.mrb[0].mxu0
      %v4217 = vadd.f32 0.0, %v4216
      %v4218 = vpop.f32.mrb[0].mxu0
      %4219 = vmatprep.mubr.f32.mxu0 0.0
      %4220 = vmatmul.mubr.f32.gmra.mrb[0].mxu0 %v1895
      %v4221 = vpop.f32.mrb[0].mxu0
      %v4222 = vadd.f32 0.0, %v4221
      %v4223 = vpop.f32.mrb[0].mxu0
      %4224 = vmatprep.mubr.f32.mxu0 0.0
      %4225 = vmatmul.mubr.f32.gmra.mrb[0].mxu0 %v2617
      %v4226 = vpop.f32.mrb[0].mxu0
      %v4227 = vadd.f32 0.0, %v4226
      %v4228 = vpop.f32.mrb[0].mxu0
      %4229 = vmatprep.mubr.f32.mxu0 0.0
      %4230 = vmatmul.mubr.f32.gmra.mrb[0].mxu0 %v2619
      %v4231 = vpop.f32.mrb[0].mxu0
      %v4232 = vadd.f32 0.0, %v4231
      %v4233 = vpop.f32.mrb[0].mxu0
      %4234 = vdwg.mxu0
      %v4236 = vsel %vm706, %v4004, 0
      %4238 = vmatprep.subr.mxu0 0.0
      %4239 = vmatpush1.msra.mxu0 %v4236
      %4240 = vmatprep.subr.mxu0 0.0
      %4241 = vmatpush1.msra.mxu0 0.0
      %4242 = vmatprep.subr.mxu0 0.0
      %4243 = vmatpush1.msra.mxu0 0.0
      %4244 = vmatprep.subr.mxu0 0.0
      %4245 = vmatpush1.msra.mxu0 0.0
      %4246 = vmatprep.subr.mxu0 0.0
      %4247 = vmatpush1.msra.mxu0 0.0
      %4248 = vmatprep.subr.mxu0 0.0
      %4249 = vmatpush1.msra.mxu0 0.0
      %4250 = vmatprep.subr.mxu0 0.0
      %4251 = vmatpush1.msra.mxu0 0.0
      %4252 = vmatprep.subr.mxu0 0.0
      %4253 = vmatpush1.msra.mxu0 0.0
      %4254 = vmatprep.subr.mxu0 0.0
      %4255 = vmatpush1.msra.mxu0 0.0
      %4256 = vmatprep.subr.mxu0 0.0
      %4257 = vmatpush1.msra.mxu0 0.0
      %4258 = vmatprep.subr.mxu0 0.0
      %4259 = vmatpush1.msra.mxu0 0.0
      %4260 = vmatprep.subr.mxu0 0.0
      %4261 = vmatpush1.msra.mxu0 0.0
      %4262 = vmatprep.subr.mxu0 0.0
      %4263 = vmatpush1.msra.mxu0 0.0
      %4264 = vmatprep.subr.mxu0 0.0
      %4265 = vmatpush1.msra.mxu0 0.0
      %4266 = vmatprep.subr.mxu0 0.0
      %4267 = vmatpush1.msra.mxu0 0.0
      %4268 = vmatprep.subr.mxu0 0.0
      %4269 = vmatpush1.msra.mxu0 0.0
      %4270 = vmatprep.subr.mxu0 0.0
      %4271 = vmatpush1.msra.mxu0 0.0
      %4272 = vmatprep.subr.mxu0 0.0
      %4273 = vmatpush1.msra.mxu0 0.0
      %4274 = vmatprep.subr.mxu0 0.0
      %4275 = vmatpush1.msra.mxu0 0.0
      %4276 = vmatprep.subr.mxu0 0.0
      %4277 = vmatpush1.msra.mxu0 0.0
      %4278 = vmatprep.subr.mxu0 0.0
      %4279 = vmatpush1.msra.mxu0 0.0
      %4280 = vmatprep.subr.mxu0 0.0
      %4281 = vmatpush1.msra.mxu0 0.0
      %4282 = vmatprep.subr.mxu0 0.0
      %4283 = vmatpush1.msra.mxu0 0.0
      %4284 = vmatprep.subr.mxu0 0.0
      %4285 = vmatpush1.msra.mxu0 0.0
      %4286 = vmatprep.subr.mxu0 0.0
      %4287 = vmatpush1.msra.mxu0 0.0
      %4288 = vmatprep.subr.mxu0 0.0
      %4289 = vmatpush1.msra.mxu0 0.0
      %4290 = vmatprep.subr.mxu0 0.0
      %4291 = vmatpush1.msra.mxu0 0.0
      %4292 = vmatprep.subr.mxu0 0.0
      %4293 = vmatpush1.msra.mxu0 0.0
      %4294 = vmatprep.subr.mxu0 0.0
      %4295 = vmatpush1.msra.mxu0 0.0
      %4296 = vmatprep.subr.mxu0 0.0
      %4297 = vmatpush1.msra.mxu0 0.0
      %4298 = vmatprep.subr.mxu0 0.0
      %4299 = vmatpush1.msra.mxu0 0.0
      %4300 = vmatprep.subr.mxu0 0.0
      %4301 = vmatpush1.msra.mxu0 0.0
      %4302 = vmatprep.mubr.f32.mxu0 0.0
      %4303 = vmatmul.mubr.f32.gmra.mrb[0].mxu0 %v646
      %v4304 = vpop.f32.mrb[0].mxu0
      %v4305 = vadd.f32 %v4077, %v4304
      %v4306 = vpop.f32.mrb[0].mxu0
      %4307 = vmatprep.mubr.f32.mxu0 0.0
      %4308 = vmatmul.mubr.f32.gmra.mrb[0].mxu0 %v648
      %v4309 = vpop.f32.mrb[0].mxu0
      %v4310 = vadd.f32 %v4082, %v4309
      %v4311 = vpop.f32.mrb[0].mxu0
      %4312 = vmatprep.mubr.f32.mxu0 0.0
      %4313 = vmatmul.mubr.f32.gmra.mrb[0].mxu0 %v650
      %v4314 = vpop.f32.mrb[0].mxu0
      %v4315 = vadd.f32 %v4087, %v4314
      %v4316 = vpop.f32.mrb[0].mxu0
      %4317 = vmatprep.mubr.f32.mxu0 0.0
      %4318 = vmatmul.mubr.f32.gmra.mrb[0].mxu0 %v652
      %v4319 = vpop.f32.mrb[0].mxu0
      %v4320 = vadd.f32 %v4092, %v4319
      %v4321 = vpop.f32.mrb[0].mxu0
      %4322 = vmatprep.mubr.f32.mxu0 0.0
      %4323 = vmatmul.mubr.f32.gmra.mrb[0].mxu0 %v654
      %v4324 = vpop.f32.mrb[0].mxu0
      %v4325 = vadd.f32 %v4097, %v4324
      %v4326 = vpop.f32.mrb[0].mxu0
      %4327 = vmatprep.mubr.f32.mxu0 0.0
      %4328 = vmatmul.mubr.f32.gmra.mrb[0].mxu0 %v656
      %v4329 = vpop.f32.mrb[0].mxu0
      %v4330 = vadd.f32 %v4102, %v4329
      %v4331 = vpop.f32.mrb[0].mxu0
      %4332 = vmatprep.mubr.f32.mxu0 0.0
      %4333 = vmatmul.mubr.f32.gmra.mrb[0].mxu0 %v658
      %v4334 = vpop.f32.mrb[0].mxu0
      %v4335 = vadd.f32 %v4107, %v4334
      %v4336 = vpop.f32.mrb[0].mxu0
      %4337 = vmatprep.mubr.f32.mxu0 0.0
      %4338 = vmatmul.mubr.f32.gmra.mrb[0].mxu0 %v660
      %v4339 = vpop.f32.mrb[0].mxu0
      %v4340 = vadd.f32 %v4112, %v4339
      %v4341 = vpop.f32.mrb[0].mxu0
      %4342 = vmatprep.mubr.f32.mxu0 0.0
      %4343 = vmatmul.mubr.f32.gmra.mrb[0].mxu0 %v662
      %v4344 = vpop.f32.mrb[0].mxu0
      %v4345 = vadd.f32 %v4117, %v4344
      %v4346 = vpop.f32.mrb[0].mxu0
      %4347 = vmatprep.mubr.f32.mxu0 0.0
      %4348 = vmatmul.mubr.f32.gmra.mrb[0].mxu0 %v664
      %v4349 = vpop.f32.mrb[0].mxu0
      %v4350 = vadd.f32 %v4122, %v4349
      %v4351 = vpop.f32.mrb[0].mxu0
      %4352 = vmatprep.mubr.f32.mxu0 0.0
      %4353 = vmatmul.mubr.f32.gmra.mrb[0].mxu0 %v666
      %v4354 = vpop.f32.mrb[0].mxu0
      %v4355 = vadd.f32 %v4127, %v4354
      %v4356 = vpop.f32.mrb[0].mxu0
      %4357 = vmatprep.mubr.f32.mxu0 0.0
      %4358 = vmatmul.mubr.f32.gmra.mrb[0].mxu0 %v668
      %v4359 = vpop.f32.mrb[0].mxu0
      %v4360 = vadd.f32 %v4132, %v4359
      %v4361 = vpop.f32.mrb[0].mxu0
      %4362 = vmatprep.mubr.f32.mxu0 0.0
      %4363 = vmatmul.mubr.f32.gmra.mrb[0].mxu0 %v670
      %v4364 = vpop.f32.mrb[0].mxu0
      %v4365 = vadd.f32 %v4137, %v4364
      %v4366 = vpop.f32.mrb[0].mxu0
      %4367 = vmatprep.mubr.f32.mxu0 0.0
      %4368 = vmatmul.mubr.f32.gmra.mrb[0].mxu0 %v672
      %v4369 = vpop.f32.mrb[0].mxu0
      %v4370 = vadd.f32 %v4142, %v4369
      %v4371 = vpop.f32.mrb[0].mxu0
      %4372 = vmatprep.mubr.f32.mxu0 0.0
      %4373 = vmatmul.mubr.f32.gmra.mrb[0].mxu0 %v674
      %v4374 = vpop.f32.mrb[0].mxu0
      %v4375 = vadd.f32 %v4147, %v4374
      %v4376 = vpop.f32.mrb[0].mxu0
      %4377 = vmatprep.mubr.f32.mxu0 0.0
      %4378 = vmatmul.mubr.f32.gmra.mrb[0].mxu0 %v676
      %v4379 = vpop.f32.mrb[0].mxu0
      %v4380 = vadd.f32 %v4152, %v4379
      %v4381 = vpop.f32.mrb[0].mxu0
      %4382 = vmatprep.mubr.f32.mxu0 0.0
      %4383 = vmatmul.mubr.f32.gmra.mrb[0].mxu0 %v678
      %v4384 = vpop.f32.mrb[0].mxu0
      %v4385 = vadd.f32 %v4157, %v4384
      %v4386 = vpop.f32.mrb[0].mxu0
      %4387 = vmatprep.mubr.f32.mxu0 0.0
      %4388 = vmatmul.mubr.f32.gmra.mrb[0].mxu0 %v680
      %v4389 = vpop.f32.mrb[0].mxu0
      %v4390 = vadd.f32 %v4162, %v4389
      %v4391 = vpop.f32.mrb[0].mxu0
      %4392 = vmatprep.mubr.f32.mxu0 0.0
      %4393 = vmatmul.mubr.f32.gmra.mrb[0].mxu0 %v682
      %v4394 = vpop.f32.mrb[0].mxu0
      %v4395 = vadd.f32 %v4167, %v4394
      %v4396 = vpop.f32.mrb[0].mxu0
      %4397 = vmatprep.mubr.f32.mxu0 0.0
      %4398 = vmatmul.mubr.f32.gmra.mrb[0].mxu0 %v684
      %v4399 = vpop.f32.mrb[0].mxu0
      %v4400 = vadd.f32 %v4172, %v4399
      %v4401 = vpop.f32.mrb[0].mxu0
      %4402 = vmatprep.mubr.f32.mxu0 0.0
      %4403 = vmatmul.mubr.f32.gmra.mrb[0].mxu0 %v686
      %v4404 = vpop.f32.mrb[0].mxu0
      %v4405 = vadd.f32 %v4177, %v4404
      %v4406 = vpop.f32.mrb[0].mxu0
      %4407 = vmatprep.mubr.f32.mxu0 0.0
      %4408 = vmatmul.mubr.f32.gmra.mrb[0].mxu0 %v688
      %v4409 = vpop.f32.mrb[0].mxu0
      %v4410 = vadd.f32 %v4182, %v4409
      %v4411 = vpop.f32.mrb[0].mxu0
      %4412 = vmatprep.mubr.f32.mxu0 0.0
      %4413 = vmatmul.mubr.f32.gmra.mrb[0].mxu0 %v690
      %v4414 = vpop.f32.mrb[0].mxu0
      %v4415 = vadd.f32 %v4187, %v4414
      %v4416 = vpop.f32.mrb[0].mxu0
      %4417 = vmatprep.mubr.f32.mxu0 0.0
      %4418 = vmatmul.mubr.f32.gmra.mrb[0].mxu0 %v692
      %v4419 = vpop.f32.mrb[0].mxu0
      %v4420 = vadd.f32 %v4192, %v4419
      %v4421 = vpop.f32.mrb[0].mxu0
      %4422 = vmatprep.mubr.f32.mxu0 0.0
      %4423 = vmatmul.mubr.f32.gmra.mrb[0].mxu0 %v694
      %v4424 = vpop.f32.mrb[0].mxu0
      %v4425 = vadd.f32 %v4197, %v4424
      %v4426 = vpop.f32.mrb[0].mxu0
      %4427 = vmatprep.mubr.f32.mxu0 0.0
      %4428 = vmatmul.mubr.f32.gmra.mrb[0].mxu0 %v696
      %v4429 = vpop.f32.mrb[0].mxu0
      %v4430 = vadd.f32 %v4202, %v4429
      %v4431 = vpop.f32.mrb[0].mxu0
      %4432 = vmatprep.mubr.f32.mxu0 0.0
      %4433 = vmatmul.mubr.f32.gmra.mrb[0].mxu0 %v698
      %v4434 = vpop.f32.mrb[0].mxu0
      %v4435 = vadd.f32 %v4207, %v4434
      %v4436 = vpop.f32.mrb[0].mxu0
      %4437 = vmatprep.mubr.f32.mxu0 0.0
      %4438 = vmatmul.mubr.f32.gmra.mrb[0].mxu0 %v700
      %v4439 = vpop.f32.mrb[0].mxu0
      %v4440 = vadd.f32 %v4212, %v4439
      %v4441 = vpop.f32.mrb[0].mxu0
      %4442 = vmatprep.mubr.f32.mxu0 0.0
      %4443 = vmatmul.mubr.f32.gmra.mrb[0].mxu0 %v702
      %v4444 = vpop.f32.mrb[0].mxu0
      %v4445 = vadd.f32 %v4217, %v4444
      %v4446 = vpop.f32.mrb[0].mxu0
      %4447 = vmatprep.mubr.f32.mxu0 0.0
      %4448 = vmatmul.mubr.f32.gmra.mrb[0].mxu0 %v704
      %v4449 = vpop.f32.mrb[0].mxu0
      %v4450 = vadd.f32 %v4222, %v4449
      %v4451 = vpop.f32.mrb[0].mxu0
      %4452 = vmatprep.mubr.f32.mxu0 0.0
      %4453 = vmatmul.mubr.f32.gmra.mrb[0].mxu0 %v1495
      %v4454 = vpop.f32.mrb[0].mxu0
      %v4455 = vadd.f32 %v4227, %v4454
      %v4456 = vpop.f32.mrb[0].mxu0
      %4457 = vmatprep.mubr.f32.mxu0 0.0
      %4458 = vmatmul.mubr.f32.gmra.mrb[0].mxu0 %v1497
      %v4459 = vpop.f32.mrb[0].mxu0
      %v4460 = vadd.f32 %v4232, %v4459
      %v4461 = vpop.f32.mrb[0].mxu0
      %4462 = vdwg.mxu0
      %s4463 = scalar_lea.vmem %s210, 56
      %v4464 = vld [vmem:[%s4463] sm:$0xf]
      %v4466 = vsel %vm706, %v4464, 0
      %4468 = vmatprep.subr.mxu0 0.0
      %4469 = vmatpush1.msra.mxu0 %v4466
      %4470 = vmatprep.subr.mxu0 0.0
      %4471 = vmatpush1.msra.mxu0 0.0
      %4472 = vmatprep.subr.mxu0 0.0
      %4473 = vmatpush1.msra.mxu0 0.0
      %4474 = vmatprep.subr.mxu0 0.0
      %4475 = vmatpush1.msra.mxu0 0.0
      %4476 = vmatprep.subr.mxu0 0.0
      %4477 = vmatpush1.msra.mxu0 0.0
      %4478 = vmatprep.subr.mxu0 0.0
      %4479 = vmatpush1.msra.mxu0 0.0
      %4480 = vmatprep.subr.mxu0 0.0
      %4481 = vmatpush1.msra.mxu0 0.0
      %4482 = vmatprep.subr.mxu0 0.0
      %4483 = vmatpush1.msra.mxu0 0.0
      %4484 = vmatprep.subr.mxu0 0.0
      %4485 = vmatpush1.msra.mxu0 0.0
      %4486 = vmatprep.subr.mxu0 0.0
      %4487 = vmatpush1.msra.mxu0 0.0
      %4488 = vmatprep.subr.mxu0 0.0
      %4489 = vmatpush1.msra.mxu0 0.0
      %4490 = vmatprep.subr.mxu0 0.0
      %4491 = vmatpush1.msra.mxu0 0.0
      %4492 = vmatprep.subr.mxu0 0.0
      %4493 = vmatpush1.msra.mxu0 0.0
      %4494 = vmatprep.subr.mxu0 0.0
      %4495 = vmatpush1.msra.mxu0 0.0
      %4496 = vmatprep.subr.mxu0 0.0
      %4497 = vmatpush1.msra.mxu0 0.0
      %4498 = vmatprep.subr.mxu0 0.0
      %4499 = vmatpush1.msra.mxu0 0.0
      %4500 = vmatprep.subr.mxu0 0.0
      %4501 = vmatpush1.msra.mxu0 0.0
      %4502 = vmatprep.subr.mxu0 0.0
      %4503 = vmatpush1.msra.mxu0 0.0
      %4504 = vmatprep.subr.mxu0 0.0
      %4505 = vmatpush1.msra.mxu0 0.0
      %4506 = vmatprep.subr.mxu0 0.0
      %4507 = vmatpush1.msra.mxu0 0.0
      %4508 = vmatprep.subr.mxu0 0.0
      %4509 = vmatpush1.msra.mxu0 0.0
      %4510 = vmatprep.subr.mxu0 0.0
      %4511 = vmatpush1.msra.mxu0 0.0
      %4512 = vmatprep.subr.mxu0 0.0
      %4513 = vmatpush1.msra.mxu0 0.0
      %4514 = vmatprep.subr.mxu0 0.0
      %4515 = vmatpush1.msra.mxu0 0.0
      %4516 = vmatprep.subr.mxu0 0.0
      %4517 = vmatpush1.msra.mxu0 0.0
      %4518 = vmatprep.subr.mxu0 0.0
      %4519 = vmatpush1.msra.mxu0 0.0
      %4520 = vmatprep.subr.mxu0 0.0
      %4521 = vmatpush1.msra.mxu0 0.0
      %4522 = vmatprep.subr.mxu0 0.0
      %4523 = vmatpush1.msra.mxu0 0.0
      %4524 = vmatprep.subr.mxu0 0.0
      %4525 = vmatpush1.msra.mxu0 0.0
      %4526 = vmatprep.subr.mxu0 0.0
      %4527 = vmatpush1.msra.mxu0 0.0
      %4528 = vmatprep.subr.mxu0 0.0
      %4529 = vmatpush1.msra.mxu0 0.0
      %4530 = vmatprep.subr.mxu0 0.0
      %4531 = vmatpush1.msra.mxu0 0.0
      %4532 = vmatprep.mubr.f32.mxu0 0.0
      %4533 = vmatmul.mubr.f32.gmra.mrb[0].mxu0 %v650
      %v4534 = vpop.f32.mrb[0].mxu0
      %v4535 = vadd.f32 0.0, %v4534
      %v4536 = vpop.f32.mrb[0].mxu0
      %4537 = vmatprep.mubr.f32.mxu0 0.0
      %4538 = vmatmul.mubr.f32.gmra.mrb[0].mxu0 %v652
      %v4539 = vpop.f32.mrb[0].mxu0
      %v4540 = vadd.f32 0.0, %v4539
      %v4541 = vpop.f32.mrb[0].mxu0
      %4542 = vmatprep.mubr.f32.mxu0 0.0
      %4543 = vmatmul.mubr.f32.gmra.mrb[0].mxu0 %v654
      %v4544 = vpop.f32.mrb[0].mxu0
      %v4545 = vadd.f32 0.0, %v4544
      %v4546 = vpop.f32.mrb[0].mxu0
      %4547 = vmatprep.mubr.f32.mxu0 0.0
      %4548 = vmatmul.mubr.f32.gmra.mrb[0].mxu0 %v656
      %v4549 = vpop.f32.mrb[0].mxu0
      %v4550 = vadd.f32 0.0, %v4549
      %v4551 = vpop.f32.mrb[0].mxu0
      %4552 = vmatprep.mubr.f32.mxu0 0.0
      %4553 = vmatmul.mubr.f32.gmra.mrb[0].mxu0 %v658
      %v4554 = vpop.f32.mrb[0].mxu0
      %v4555 = vadd.f32 0.0, %v4554
      %v4556 = vpop.f32.mrb[0].mxu0
      %4557 = vmatprep.mubr.f32.mxu0 0.0
      %4558 = vmatmul.mubr.f32.gmra.mrb[0].mxu0 %v660
      %v4559 = vpop.f32.mrb[0].mxu0
      %v4560 = vadd.f32 0.0, %v4559
      %v4561 = vpop.f32.mrb[0].mxu0
      %4562 = vmatprep.mubr.f32.mxu0 0.0
      %4563 = vmatmul.mubr.f32.gmra.mrb[0].mxu0 %v662
      %v4564 = vpop.f32.mrb[0].mxu0
      %v4565 = vadd.f32 0.0, %v4564
      %v4566 = vpop.f32.mrb[0].mxu0
      %4567 = vmatprep.mubr.f32.mxu0 0.0
      %4568 = vmatmul.mubr.f32.gmra.mrb[0].mxu0 %v664
      %v4569 = vpop.f32.mrb[0].mxu0
      %v4570 = vadd.f32 0.0, %v4569
      %v4571 = vpop.f32.mrb[0].mxu0
      %4572 = vmatprep.mubr.f32.mxu0 0.0
      %4573 = vmatmul.mubr.f32.gmra.mrb[0].mxu0 %v666
      %v4574 = vpop.f32.mrb[0].mxu0
      %v4575 = vadd.f32 0.0, %v4574
      %v4576 = vpop.f32.mrb[0].mxu0
      %4577 = vmatprep.mubr.f32.mxu0 0.0
      %4578 = vmatmul.mubr.f32.gmra.mrb[0].mxu0 %v668
      %v4579 = vpop.f32.mrb[0].mxu0
      %v4580 = vadd.f32 0.0, %v4579
      %v4581 = vpop.f32.mrb[0].mxu0
      %4582 = vmatprep.mubr.f32.mxu0 0.0
      %4583 = vmatmul.mubr.f32.gmra.mrb[0].mxu0 %v670
      %v4584 = vpop.f32.mrb[0].mxu0
      %v4585 = vadd.f32 0.0, %v4584
      %v4586 = vpop.f32.mrb[0].mxu0
      %4587 = vmatprep.mubr.f32.mxu0 0.0
      %4588 = vmatmul.mubr.f32.gmra.mrb[0].mxu0 %v672
      %v4589 = vpop.f32.mrb[0].mxu0
      %v4590 = vadd.f32 0.0, %v4589
      %v4591 = vpop.f32.mrb[0].mxu0
      %4592 = vmatprep.mubr.f32.mxu0 0.0
      %4593 = vmatmul.mubr.f32.gmra.mrb[0].mxu0 %v674
      %v4594 = vpop.f32.mrb[0].mxu0
      %v4595 = vadd.f32 0.0, %v4594
      %v4596 = vpop.f32.mrb[0].mxu0
      %4597 = vmatprep.mubr.f32.mxu0 0.0
      %4598 = vmatmul.mubr.f32.gmra.mrb[0].mxu0 %v676
      %v4599 = vpop.f32.mrb[0].mxu0
      %v4600 = vadd.f32 0.0, %v4599
      %v4601 = vpop.f32.mrb[0].mxu0
      %4602 = vmatprep.mubr.f32.mxu0 0.0
      %4603 = vmatmul.mubr.f32.gmra.mrb[0].mxu0 %v678
      %v4604 = vpop.f32.mrb[0].mxu0
      %v4605 = vadd.f32 0.0, %v4604
      %v4606 = vpop.f32.mrb[0].mxu0
      %4607 = vmatprep.mubr.f32.mxu0 0.0
      %4608 = vmatmul.mubr.f32.gmra.mrb[0].mxu0 %v680
      %v4609 = vpop.f32.mrb[0].mxu0
      %v4610 = vadd.f32 0.0, %v4609
      %v4611 = vpop.f32.mrb[0].mxu0
      %4612 = vmatprep.mubr.f32.mxu0 0.0
      %4613 = vmatmul.mubr.f32.gmra.mrb[0].mxu0 %v682
      %v4614 = vpop.f32.mrb[0].mxu0
      %v4615 = vadd.f32 0.0, %v4614
      %v4616 = vpop.f32.mrb[0].mxu0
      %4617 = vmatprep.mubr.f32.mxu0 0.0
      %4618 = vmatmul.mubr.f32.gmra.mrb[0].mxu0 %v684
      %v4619 = vpop.f32.mrb[0].mxu0
      %v4620 = vadd.f32 0.0, %v4619
      %v4621 = vpop.f32.mrb[0].mxu0
      %4622 = vmatprep.mubr.f32.mxu0 0.0
      %4623 = vmatmul.mubr.f32.gmra.mrb[0].mxu0 %v686
      %v4624 = vpop.f32.mrb[0].mxu0
      %v4625 = vadd.f32 0.0, %v4624
      %v4626 = vpop.f32.mrb[0].mxu0
      %4627 = vmatprep.mubr.f32.mxu0 0.0
      %4628 = vmatmul.mubr.f32.gmra.mrb[0].mxu0 %v688
      %v4629 = vpop.f32.mrb[0].mxu0
      %v4630 = vadd.f32 0.0, %v4629
      %v4631 = vpop.f32.mrb[0].mxu0
      %4632 = vmatprep.mubr.f32.mxu0 0.0
      %4633 = vmatmul.mubr.f32.gmra.mrb[0].mxu0 %v690
      %v4634 = vpop.f32.mrb[0].mxu0
      %v4635 = vadd.f32 0.0, %v4634
      %v4636 = vpop.f32.mrb[0].mxu0
      %4637 = vmatprep.mubr.f32.mxu0 0.0
      %4638 = vmatmul.mubr.f32.gmra.mrb[0].mxu0 %v692
      %v4639 = vpop.f32.mrb[0].mxu0
      %v4640 = vadd.f32 0.0, %v4639
      %v4641 = vpop.f32.mrb[0].mxu0
      %4642 = vmatprep.mubr.f32.mxu0 0.0
      %4643 = vmatmul.mubr.f32.gmra.mrb[0].mxu0 %v694
      %v4644 = vpop.f32.mrb[0].mxu0
      %v4645 = vadd.f32 0.0, %v4644
      %v4646 = vpop.f32.mrb[0].mxu0
      %4647 = vmatprep.mubr.f32.mxu0 0.0
      %4648 = vmatmul.mubr.f32.gmra.mrb[0].mxu0 %v696
      %v4649 = vpop.f32.mrb[0].mxu0
      %v4650 = vadd.f32 0.0, %v4649
      %v4651 = vpop.f32.mrb[0].mxu0
      %4652 = vmatprep.mubr.f32.mxu0 0.0
      %4653 = vmatmul.mubr.f32.gmra.mrb[0].mxu0 %v698
      %v4654 = vpop.f32.mrb[0].mxu0
      %v4655 = vadd.f32 0.0, %v4654
      %v4656 = vpop.f32.mrb[0].mxu0
      %4657 = vmatprep.mubr.f32.mxu0 0.0
      %4658 = vmatmul.mubr.f32.gmra.mrb[0].mxu0 %v700
      %v4659 = vpop.f32.mrb[0].mxu0
      %v4660 = vadd.f32 0.0, %v4659
      %v4661 = vpop.f32.mrb[0].mxu0
      %4662 = vmatprep.mubr.f32.mxu0 0.0
      %4663 = vmatmul.mubr.f32.gmra.mrb[0].mxu0 %v702
      %v4664 = vpop.f32.mrb[0].mxu0
      %v4665 = vadd.f32 0.0, %v4664
      %v4666 = vpop.f32.mrb[0].mxu0
      %4667 = vmatprep.mubr.f32.mxu0 0.0
      %4668 = vmatmul.mubr.f32.gmra.mrb[0].mxu0 %v704
      %v4669 = vpop.f32.mrb[0].mxu0
      %v4670 = vadd.f32 0.0, %v4669
      %v4671 = vpop.f32.mrb[0].mxu0
      %4672 = vmatprep.mubr.f32.mxu0 0.0
      %4673 = vmatmul.mubr.f32.gmra.mrb[0].mxu0 %v1495
      %v4674 = vpop.f32.mrb[0].mxu0
      %v4675 = vadd.f32 0.0, %v4674
      %v4676 = vpop.f32.mrb[0].mxu0
      %4677 = vmatprep.mubr.f32.mxu0 0.0
      %4678 = vmatmul.mubr.f32.gmra.mrb[0].mxu0 %v1497
      %v4679 = vpop.f32.mrb[0].mxu0
      %v4680 = vadd.f32 0.0, %v4679
      %v4681 = vpop.f32.mrb[0].mxu0
      %4682 = vmatprep.mubr.f32.mxu0 0.0
      %4683 = vmatmul.mubr.f32.gmra.mrb[0].mxu0 %v3674
      %v4684 = vpop.f32.mrb[0].mxu0
      %v4685 = vadd.f32 0.0, %v4684
      %v4686 = vpop.f32.mrb[0].mxu0
      %4687 = vmatprep.mubr.f32.mxu0 0.0
      %4688 = vmatmul.mubr.f32.gmra.mrb[0].mxu0 %v3676
      %v4689 = vpop.f32.mrb[0].mxu0
      %v4690 = vadd.f32 0.0, %v4689
      %v4691 = vpop.f32.mrb[0].mxu0
      %4692 = vdwg.mxu0
      %v4693 = vadd.f32 %v4305, %v4535
      %v4694 = vadd.f32 %v4310, %v4540
      %v4695 = vadd.f32 %v4315, %v4545
      %v4696 = vadd.f32 %v4320, %v4550
      %v4697 = vadd.f32 %v4325, %v4555
      %v4698 = vadd.f32 %v4330, %v4560
      %v4699 = vadd.f32 %v4335, %v4565
      %v4700 = vadd.f32 %v4340, %v4570
      %v4701 = vadd.f32 %v4345, %v4575
      %v4702 = vadd.f32 %v4350, %v4580
      %v4703 = vadd.f32 %v4355, %v4585
      %v4704 = vadd.f32 %v4360, %v4590
      %v4705 = vadd.f32 %v4365, %v4595
      %v4706 = vadd.f32 %v4370, %v4600
      %v4707 = vadd.f32 %v4375, %v4605
      %v4708 = vadd.f32 %v4380, %v4610
      %v4709 = vadd.f32 %v4385, %v4615
      %v4710 = vadd.f32 %v4390, %v4620
      %v4711 = vadd.f32 %v4395, %v4625
      %v4712 = vadd.f32 %v4400, %v4630
      %v4713 = vadd.f32 %v4405, %v4635
      %v4714 = vadd.f32 %v4410, %v4640
      %v4715 = vadd.f32 %v4415, %v4645
      %v4716 = vadd.f32 %v4420, %v4650
      %v4717 = vadd.f32 %v4425, %v4655
      %v4718 = vadd.f32 %v4430, %v4660
      %v4719 = vadd.f32 %v4435, %v4665
      %v4720 = vadd.f32 %v4440, %v4670
      %v4721 = vadd.f32 %v4445, %v4675
      %v4722 = vadd.f32 %v4450, %v4680
      %v4723 = vadd.f32 %v4455, %v4685
      %v4724 = vadd.f32 %v4460, %v4690
      %s4725 = scalar_lea.vmem %s210, 60
      %v4726 = vld [vmem:[%s4725] sm:$0xf]
      %v4727 = vsel %vm641, %v634, 0
      %v4729 = vsel %vm641, %v636, 0
      %v4732 = vsel %vm706, %v4726, 0
      %4734 = vmatprep.subr.mxu0 0.0
      %4735 = vmatpush1.msra.mxu0 %v4732
      %4736 = vmatprep.subr.mxu0 0.0
      %4737 = vmatpush1.msra.mxu0 0.0
      %4738 = vmatprep.subr.mxu0 0.0
      %4739 = vmatpush1.msra.mxu0 0.0
      %4740 = vmatprep.subr.mxu0 0.0
      %4741 = vmatpush1.msra.mxu0 0.0
      %4742 = vmatprep.subr.mxu0 0.0
      %4743 = vmatpush1.msra.mxu0 0.0
      %4744 = vmatprep.subr.mxu0 0.0
      %4745 = vmatpush1.msra.mxu0 0.0
      %4746 = vmatprep.subr.mxu0 0.0
      %4747 = vmatpush1.msra.mxu0 0.0
      %4748 = vmatprep.subr.mxu0 0.0
      %4749 = vmatpush1.msra.mxu0 0.0
      %4750 = vmatprep.subr.mxu0 0.0
      %4751 = vmatpush1.msra.mxu0 0.0
      %4752 = vmatprep.subr.mxu0 0.0
      %4753 = vmatpush1.msra.mxu0 0.0
      %4754 = vmatprep.subr.mxu0 0.0
      %4755 = vmatpush1.msra.mxu0 0.0
      %4756 = vmatprep.subr.mxu0 0.0
      %4757 = vmatpush1.msra.mxu0 0.0
      %4758 = vmatprep.subr.mxu0 0.0
      %4759 = vmatpush1.msra.mxu0 0.0
      %4760 = vmatprep.subr.mxu0 0.0
      %4761 = vmatpush1.msra.mxu0 0.0
      %4762 = vmatprep.subr.mxu0 0.0
      %4763 = vmatpush1.msra.mxu0 0.0
      %4764 = vmatprep.subr.mxu0 0.0
      %4765 = vmatpush1.msra.mxu0 0.0
      %4766 = vmatprep.subr.mxu0 0.0
      %4767 = vmatpush1.msra.mxu0 0.0
      %4768 = vmatprep.subr.mxu0 0.0
      %4769 = vmatpush1.msra.mxu0 0.0
      %4770 = vmatprep.subr.mxu0 0.0
      %4771 = vmatpush1.msra.mxu0 0.0
      %4772 = vmatprep.subr.mxu0 0.0
      %4773 = vmatpush1.msra.mxu0 0.0
      %4774 = vmatprep.subr.mxu0 0.0
      %4775 = vmatpush1.msra.mxu0 0.0
      %4776 = vmatprep.subr.mxu0 0.0
      %4777 = vmatpush1.msra.mxu0 0.0
      %4778 = vmatprep.subr.mxu0 0.0
      %4779 = vmatpush1.msra.mxu0 0.0
      %4780 = vmatprep.subr.mxu0 0.0
      %4781 = vmatpush1.msra.mxu0 0.0
      %4782 = vmatprep.subr.mxu0 0.0
      %4783 = vmatpush1.msra.mxu0 0.0
      %4784 = vmatprep.subr.mxu0 0.0
      %4785 = vmatpush1.msra.mxu0 0.0
      %4786 = vmatprep.subr.mxu0 0.0
      %4787 = vmatpush1.msra.mxu0 0.0
      %4788 = vmatprep.subr.mxu0 0.0
      %4789 = vmatpush1.msra.mxu0 0.0
      %4790 = vmatprep.subr.mxu0 0.0
      %4791 = vmatpush1.msra.mxu0 0.0
      %4792 = vmatprep.subr.mxu0 0.0
      %4793 = vmatpush1.msra.mxu0 0.0
      %4794 = vmatprep.subr.mxu0 0.0
      %4795 = vmatpush1.msra.mxu0 0.0
      %4796 = vmatprep.subr.mxu0 0.0
      %4797 = vmatpush1.msra.mxu0 0.0
      %4798 = vmatprep.mubr.f32.mxu0 0.0
      %4799 = vmatmul.mubr.f32.gmra.mrb[0].mxu0 %v1841
      %v4800 = vpop.f32.mrb[0].mxu0
      %v4801 = vadd.f32 0.0, %v4800
      %v4802 = vpop.f32.mrb[0].mxu0
      %4803 = vmatprep.mubr.f32.mxu0 0.0
      %4804 = vmatmul.mubr.f32.gmra.mrb[0].mxu0 %v1843
      %v4805 = vpop.f32.mrb[0].mxu0
      %v4806 = vadd.f32 0.0, %v4805
      %v4807 = vpop.f32.mrb[0].mxu0
      %4808 = vmatprep.mubr.f32.mxu0 0.0
      %4809 = vmatmul.mubr.f32.gmra.mrb[0].mxu0 %v1845
      %v4810 = vpop.f32.mrb[0].mxu0
      %v4811 = vadd.f32 0.0, %v4810
      %v4812 = vpop.f32.mrb[0].mxu0
      %4813 = vmatprep.mubr.f32.mxu0 0.0
      %4814 = vmatmul.mubr.f32.gmra.mrb[0].mxu0 %v1847
      %v4815 = vpop.f32.mrb[0].mxu0
      %v4816 = vadd.f32 0.0, %v4815
      %v4817 = vpop.f32.mrb[0].mxu0
      %4818 = vmatprep.mubr.f32.mxu0 0.0
      %4819 = vmatmul.mubr.f32.gmra.mrb[0].mxu0 %v1849
      %v4820 = vpop.f32.mrb[0].mxu0
      %v4821 = vadd.f32 0.0, %v4820
      %v4822 = vpop.f32.mrb[0].mxu0
      %4823 = vmatprep.mubr.f32.mxu0 0.0
      %4824 = vmatmul.mubr.f32.gmra.mrb[0].mxu0 %v1851
      %v4825 = vpop.f32.mrb[0].mxu0
      %v4826 = vadd.f32 0.0, %v4825
      %v4827 = vpop.f32.mrb[0].mxu0
      %4828 = vmatprep.mubr.f32.mxu0 0.0
      %4829 = vmatmul.mubr.f32.gmra.mrb[0].mxu0 %v1853
      %v4830 = vpop.f32.mrb[0].mxu0
      %v4831 = vadd.f32 0.0, %v4830
      %v4832 = vpop.f32.mrb[0].mxu0
      %4833 = vmatprep.mubr.f32.mxu0 0.0
      %4834 = vmatmul.mubr.f32.gmra.mrb[0].mxu0 %v1855
      %v4835 = vpop.f32.mrb[0].mxu0
      %v4836 = vadd.f32 0.0, %v4835
      %v4837 = vpop.f32.mrb[0].mxu0
      %4838 = vmatprep.mubr.f32.mxu0 0.0
      %4839 = vmatmul.mubr.f32.gmra.mrb[0].mxu0 %v1857
      %v4840 = vpop.f32.mrb[0].mxu0
      %v4841 = vadd.f32 0.0, %v4840
      %v4842 = vpop.f32.mrb[0].mxu0
      %4843 = vmatprep.mubr.f32.mxu0 0.0
      %4844 = vmatmul.mubr.f32.gmra.mrb[0].mxu0 %v1859
      %v4845 = vpop.f32.mrb[0].mxu0
      %v4846 = vadd.f32 0.0, %v4845
      %v4847 = vpop.f32.mrb[0].mxu0
      %4848 = vmatprep.mubr.f32.mxu0 0.0
      %4849 = vmatmul.mubr.f32.gmra.mrb[0].mxu0 %v1861
      %v4850 = vpop.f32.mrb[0].mxu0
      %v4851 = vadd.f32 0.0, %v4850
      %v4852 = vpop.f32.mrb[0].mxu0
      %4853 = vmatprep.mubr.f32.mxu0 0.0
      %4854 = vmatmul.mubr.f32.gmra.mrb[0].mxu0 %v1863
      %v4855 = vpop.f32.mrb[0].mxu0
      %v4856 = vadd.f32 0.0, %v4855
      %v4857 = vpop.f32.mrb[0].mxu0
      %4858 = vmatprep.mubr.f32.mxu0 0.0
      %4859 = vmatmul.mubr.f32.gmra.mrb[0].mxu0 %v1865
      %v4860 = vpop.f32.mrb[0].mxu0
      %v4861 = vadd.f32 0.0, %v4860
      %v4862 = vpop.f32.mrb[0].mxu0
      %4863 = vmatprep.mubr.f32.mxu0 0.0
      %4864 = vmatmul.mubr.f32.gmra.mrb[0].mxu0 %v1867
      %v4865 = vpop.f32.mrb[0].mxu0
      %v4866 = vadd.f32 0.0, %v4865
      %v4867 = vpop.f32.mrb[0].mxu0
      %4868 = vmatprep.mubr.f32.mxu0 0.0
      %4869 = vmatmul.mubr.f32.gmra.mrb[0].mxu0 %v1869
      %v4870 = vpop.f32.mrb[0].mxu0
      %v4871 = vadd.f32 0.0, %v4870
      %v4872 = vpop.f32.mrb[0].mxu0
      %4873 = vmatprep.mubr.f32.mxu0 0.0
      %4874 = vmatmul.mubr.f32.gmra.mrb[0].mxu0 %v1871
      %v4875 = vpop.f32.mrb[0].mxu0
      %v4876 = vadd.f32 0.0, %v4875
      %v4877 = vpop.f32.mrb[0].mxu0
      %4878 = vmatprep.mubr.f32.mxu0 0.0
      %4879 = vmatmul.mubr.f32.gmra.mrb[0].mxu0 %v1873
      %v4880 = vpop.f32.mrb[0].mxu0
      %v4881 = vadd.f32 0.0, %v4880
      %v4882 = vpop.f32.mrb[0].mxu0
      %4883 = vmatprep.mubr.f32.mxu0 0.0
      %4884 = vmatmul.mubr.f32.gmra.mrb[0].mxu0 %v1875
      %v4885 = vpop.f32.mrb[0].mxu0
      %v4886 = vadd.f32 0.0, %v4885
      %v4887 = vpop.f32.mrb[0].mxu0
      %4888 = vmatprep.mubr.f32.mxu0 0.0
      %4889 = vmatmul.mubr.f32.gmra.mrb[0].mxu0 %v1877
      %v4890 = vpop.f32.mrb[0].mxu0
      %v4891 = vadd.f32 0.0, %v4890
      %v4892 = vpop.f32.mrb[0].mxu0
      %4893 = vmatprep.mubr.f32.mxu0 0.0
      %4894 = vmatmul.mubr.f32.gmra.mrb[0].mxu0 %v1879
      %v4895 = vpop.f32.mrb[0].mxu0
      %v4896 = vadd.f32 0.0, %v4895
      %v4897 = vpop.f32.mrb[0].mxu0
      %4898 = vmatprep.mubr.f32.mxu0 0.0
      %4899 = vmatmul.mubr.f32.gmra.mrb[0].mxu0 %v1881
      %v4900 = vpop.f32.mrb[0].mxu0
      %v4901 = vadd.f32 0.0, %v4900
      %v4902 = vpop.f32.mrb[0].mxu0
      %4903 = vmatprep.mubr.f32.mxu0 0.0
      %4904 = vmatmul.mubr.f32.gmra.mrb[0].mxu0 %v1883
      %v4905 = vpop.f32.mrb[0].mxu0
      %v4906 = vadd.f32 0.0, %v4905
      %v4907 = vpop.f32.mrb[0].mxu0
      %4908 = vmatprep.mubr.f32.mxu0 0.0
      %4909 = vmatmul.mubr.f32.gmra.mrb[0].mxu0 %v1885
      %v4910 = vpop.f32.mrb[0].mxu0
      %v4911 = vadd.f32 0.0, %v4910
      %v4912 = vpop.f32.mrb[0].mxu0
      %4913 = vmatprep.mubr.f32.mxu0 0.0
      %4914 = vmatmul.mubr.f32.gmra.mrb[0].mxu0 %v1887
      %v4915 = vpop.f32.mrb[0].mxu0
      %v4916 = vadd.f32 0.0, %v4915
      %v4917 = vpop.f32.mrb[0].mxu0
      %4918 = vmatprep.mubr.f32.mxu0 0.0
      %4919 = vmatmul.mubr.f32.gmra.mrb[0].mxu0 %v1889
      %v4920 = vpop.f32.mrb[0].mxu0
      %v4921 = vadd.f32 0.0, %v4920
      %v4922 = vpop.f32.mrb[0].mxu0
      %4923 = vmatprep.mubr.f32.mxu0 0.0
      %4924 = vmatmul.mubr.f32.gmra.mrb[0].mxu0 %v1891
      %v4925 = vpop.f32.mrb[0].mxu0
      %v4926 = vadd.f32 0.0, %v4925
      %v4927 = vpop.f32.mrb[0].mxu0
      %4928 = vmatprep.mubr.f32.mxu0 0.0
      %4929 = vmatmul.mubr.f32.gmra.mrb[0].mxu0 %v1893
      %v4930 = vpop.f32.mrb[0].mxu0
      %v4931 = vadd.f32 0.0, %v4930
      %v4932 = vpop.f32.mrb[0].mxu0
      %4933 = vmatprep.mubr.f32.mxu0 0.0
      %4934 = vmatmul.mubr.f32.gmra.mrb[0].mxu0 %v1895
      %v4935 = vpop.f32.mrb[0].mxu0
      %v4936 = vadd.f32 0.0, %v4935
      %v4937 = vpop.f32.mrb[0].mxu0
      %4938 = vmatprep.mubr.f32.mxu0 0.0
      %4939 = vmatmul.mubr.f32.gmra.mrb[0].mxu0 %v2617
      %v4940 = vpop.f32.mrb[0].mxu0
      %v4941 = vadd.f32 0.0, %v4940
      %v4942 = vpop.f32.mrb[0].mxu0
      %4943 = vmatprep.mubr.f32.mxu0 0.0
      %4944 = vmatmul.mubr.f32.gmra.mrb[0].mxu0 %v2619
      %v4945 = vpop.f32.mrb[0].mxu0
      %v4946 = vadd.f32 0.0, %v4945
      %v4947 = vpop.f32.mrb[0].mxu0
      %4948 = vmatprep.mubr.f32.mxu0 0.0
      %4949 = vmatmul.mubr.f32.gmra.mrb[0].mxu0 %v4727
      %v4950 = vpop.f32.mrb[0].mxu0
      %v4951 = vadd.f32 0.0, %v4950
      %v4952 = vpop.f32.mrb[0].mxu0
      %4953 = vmatprep.mubr.f32.mxu0 0.0
      %4954 = vmatmul.mubr.f32.gmra.mrb[0].mxu0 %v4729
      %v4955 = vpop.f32.mrb[0].mxu0
      %v4956 = vadd.f32 0.0, %v4955
      %v4957 = vpop.f32.mrb[0].mxu0
      %4958 = vdwg.mxu0
      %v4959 = vadd.f32 %v4693, %v4801
      %v4960 = vadd.f32 %v4694, %v4806
      %v4961 = vadd.f32 %v4695, %v4811
      %v4962 = vadd.f32 %v4696, %v4816
      %v4963 = vadd.f32 %v4697, %v4821
      %v4964 = vadd.f32 %v4698, %v4826
      %v4965 = vadd.f32 %v4699, %v4831
      %v4966 = vadd.f32 %v4700, %v4836
      %v4967 = vadd.f32 %v4701, %v4841
      %v4968 = vadd.f32 %v4702, %v4846
      %v4969 = vadd.f32 %v4703, %v4851
      %v4970 = vadd.f32 %v4704, %v4856
      %v4971 = vadd.f32 %v4705, %v4861
      %v4972 = vadd.f32 %v4706, %v4866
      %v4973 = vadd.f32 %v4707, %v4871
      %v4974 = vadd.f32 %v4708, %v4876
      %v4975 = vadd.f32 %v4709, %v4881
      %v4976 = vadd.f32 %v4710, %v4886
      %v4977 = vadd.f32 %v4711, %v4891
      %v4978 = vadd.f32 %v4712, %v4896
      %v4979 = vadd.f32 %v4713, %v4901
      %v4980 = vadd.f32 %v4714, %v4906
      %v4981 = vadd.f32 %v4715, %v4911
      %v4982 = vadd.f32 %v4716, %v4916
      %v4983 = vadd.f32 %v4717, %v4921
      %v4984 = vadd.f32 %v4718, %v4926
      %v4985 = vadd.f32 %v4719, %v4931
      %v4986 = vadd.f32 %v4720, %v4936
      %v4987 = vadd.f32 %v4721, %v4941
      %v4988 = vadd.f32 %v4722, %v4946
      %v4989 = vadd.f32 %v4723, %v4951
      %v4990 = vadd.f32 %v4724, %v4956
      %v4991 = vadd.f32 %v4959, %v1763
      %v4992 = vadd.f32 %v4960, %v1763
      %v4993 = vadd.f32 %v4961, %v1763
      %v4994 = vadd.f32 %v4962, %v1763
      %v4995 = vadd.f32 %v4963, %v1763
      %v4996 = vadd.f32 %v4964, %v1763
      %v4997 = vadd.f32 %v4965, %v1763
      %v4998 = vadd.f32 %v4966, %v1763
      %v4999 = vadd.f32 %v4967, %v1763
      %v5000 = vadd.f32 %v4968, %v1763
      %v5001 = vadd.f32 %v4969, %v1763
      %v5002 = vadd.f32 %v4970, %v1763
      %v5003 = vadd.f32 %v4971, %v1763
      %v5004 = vadd.f32 %v4972, %v1763
      %v5005 = vadd.f32 %v4973, %v1763
      %v5006 = vadd.f32 %v4974, %v1763
      %v5007 = vadd.f32 %v4975, %v1763
      %v5008 = vadd.f32 %v4976, %v1763
      %v5009 = vadd.f32 %v4977, %v1763
      %v5010 = vadd.f32 %v4978, %v1763
      %v5011 = vadd.f32 %v4979, %v1763
      %v5012 = vadd.f32 %v4980, %v1763
      %v5013 = vadd.f32 %v4981, %v1763
      %v5014 = vadd.f32 %v4982, %v1763
      %v5015 = vadd.f32 %v4983, %v1763
      %v5016 = vadd.f32 %v4984, %v1763
      %v5017 = vadd.f32 %v4985, %v1763
      %v5018 = vadd.f32 %v4986, %v1763
      %v5019 = vadd.f32 %v4987, %v1763
      %v5020 = vadd.f32 %v4988, %v1763
      %v5021 = vadd.f32 %v4989, %v1763
      %v5022 = vadd.f32 %v4990, %v1763
      %s5023 = scalar_lea.vmem %s221, 768
      %5024 = vst.msk [vmem:[%s5023] sm:$0xff] %vm641, %v4991
      %5025 = vst.msk [vmem:[%s5023 + $0x8] sm:$0xff] %vm641, %v4992
      %5026 = vst.msk [vmem:[%s5023 + $0x10] sm:$0xff] %vm641, %v4993
      %5027 = vst.msk [vmem:[%s5023 + $0x18] sm:$0xff] %vm641, %v4994
      %5028 = vst.msk [vmem:[%s5023 + $0x20] sm:$0xff] %vm641, %v4995
      %5029 = vst.msk [vmem:[%s5023 + $0x28] sm:$0xff] %vm641, %v4996
      %5030 = vst.msk [vmem:[%s5023 + $0x30] sm:$0xff] %vm641, %v4997
      %5031 = vst.msk [vmem:[%s5023 + $0x38] sm:$0xff] %vm641, %v4998
      %5032 = vst.msk [vmem:[%s5023 + $0x40] sm:$0xff] %vm641, %v4999
      %5033 = vst.msk [vmem:[%s5023 + $0x48] sm:$0xff] %vm641, %v5000
      %5034 = vst.msk [vmem:[%s5023 + $0x50] sm:$0xff] %vm641, %v5001
      %5035 = vst.msk [vmem:[%s5023 + $0x58] sm:$0xff] %vm641, %v5002
      %5036 = vst.msk [vmem:[%s5023 + $0x60] sm:$0xff] %vm641, %v5003
      %5037 = vst.msk [vmem:[%s5023 + $0x68] sm:$0xff] %vm641, %v5004
      %5038 = vst.msk [vmem:[%s5023 + $0x70] sm:$0xff] %vm641, %v5005
      %5039 = vst.msk [vmem:[%s5023 + $0x78] sm:$0xff] %vm641, %v5006
      %5040 = vst.msk [vmem:[%s5023 + $0x80] sm:$0xff] %vm641, %v5007
      %5041 = vst.msk [vmem:[%s5023 + $0x88] sm:$0xff] %vm641, %v5008
      %5042 = vst.msk [vmem:[%s5023 + $0x90] sm:$0xff] %vm641, %v5009
      %5043 = vst.msk [vmem:[%s5023 + $0x98] sm:$0xff] %vm641, %v5010
      %5044 = vst.msk [vmem:[%s5023 + $0xa0] sm:$0xff] %vm641, %v5011
      %5045 = vst.msk [vmem:[%s5023 + $0xa8] sm:$0xff] %vm641, %v5012
      %5046 = vst.msk [vmem:[%s5023 + $0xb0] sm:$0xff] %vm641, %v5013
      %5047 = vst.msk [vmem:[%s5023 + $0xb8] sm:$0xff] %vm641, %v5014
      %5048 = vst.msk [vmem:[%s5023 + $0xc0] sm:$0xff] %vm641, %v5015
      %5049 = vst.msk [vmem:[%s5023 + $0xc8] sm:$0xff] %vm641, %v5016
      %5050 = vst.msk [vmem:[%s5023 + $0xd0] sm:$0xff] %vm641, %v5017
      %5051 = vst.msk [vmem:[%s5023 + $0xd8] sm:$0xff] %vm641, %v5018
      %5052 = vst.msk [vmem:[%s5023 + $0xe0] sm:$0xff] %vm641, %v5019
      %5053 = vst.msk [vmem:[%s5023 + $0xe8] sm:$0xff] %vm641, %v5020
      %5054 = vst.msk [vmem:[%s5023 + $0xf0] sm:$0xff] %vm641, %v5021
      %5055 = vst.msk [vmem:[%s5023 + $0xf8] sm:$0xff] %vm641, %v5022
      %p5056 = scmp.lt.s32.totalorder %s18, 1
      %s5057 = scalar_select %p5056, %s18, 1
      %p5058 = scmp.lt.s32.totalorder %s19, 0
      %s5059 = scalar_select %p5058, %s19, 0
      %s5060 = smul.addr %s5057, 128
      %s5061 = sadd.s32 %s5059, %s5060
      %s5062 = smul.addr %s5061, 8
      %s5063 = scalar_lea.vmem %s3, %s5062
      // Predicated region
      $region37: #{tpu_custom_call.1} parent=31 // pred_check
        %p5064 = pneg %p124
      $region38: #{tpu_custom_call.1} parent=31 // pred_check_branch
        %5066 = sbr.rel (%p5064) target = $region40
      $region39: #{tpu_custom_call.1} parent=31 // pred_region
        _
      $region40: #{tpu_custom_call.1} parent=31 // pred_fallthru
        _
    $region32: #{tpu_custom_call.1} parent=5 // pred_fallthru
      _
    %p5067 = scmp.le.s32.totalorder 2, %s9
    // Predicated region
    $region41: #{tpu_custom_call.1} parent=5 // pred_check
      %p5068 = pneg %p5067
    $region42: #{tpu_custom_call.1} parent=5 // pred_check_branch
      %5070 = sbr.rel (%p5068) target = $region44
    $region43: #{tpu_custom_call.1} parent=5 // pred_region
      %s5071 = ssub.s32 %s9, 2
      // Predicated region
      $region45: #{tpu_custom_call.1} parent=43 // pred_check
        %p5072 = pneg %p130
      $region46: #{tpu_custom_call.1} parent=43 // pred_check_branch
        %5074 = sbr.rel (%p5072) target = $region48
      $region47: #{tpu_custom_call.1} parent=43 // pred_region
        %p5075 = scmp.lt.s32.totalorder %s20, 1
        %s5076 = scalar_select %p5075, %s20, 1
        %p5077 = scmp.lt.s32.totalorder %s21, 0
        %s5078 = scalar_select %p5077, %s21, 0
        %s5079 = smul.addr %s5076, 128
        %s5080 = sadd.s32 %s5078, %s5079
        %s5081 = smul.addr %s5080, 8
        %s5082 = scalar_lea.vmem %s3, %s5081
      $region48: #{tpu_custom_call.1} parent=43 // pred_fallthru
        _
    $region44: #{tpu_custom_call.1} parent=5 // pred_fallthru
      _
  $region6: #{tpu_custom_call.1} parent=0 // loop_footer
    %s13 = sadd.s32 1, %s9
  $region7: #{tpu_custom_call.1} parent=0 // loop_footer_branch
    %8 = sbr.rel target = $region3
  $region8: #{tpu_custom_call.1} parent=0 // loop_exit
    _

</llo_original>
